<compile_context>
chip_gen: v7x
topology: tpu7x:2x2x1
jax: 0.10.0
libtpu: 0.0.40
codegen_flags: <defaults>
</compile_context>

<pallas_src>
import functools

import jax
import jax.numpy as jnp
from jax.experimental import pallas as pl
from jax.experimental.pallas import tpu as pltpu

SMEM = pltpu.MemorySpace.SMEM


def _row_tile(rows, target=512):
    """Largest multiple of 8 that divides `rows` and is <= target (rows is mult of 8)."""
    if rows <= target:
        return rows
    t = (target // 8) * 8
    while t >= 8:
        if rows % t == 0:
            return t
        t -= 8
    return rows


def _choose_image_tile(nb, rows_per_img, width_elems, budget_bytes=4 << 20):
    """Largest divisor of nb whose (imgs, rows, width) f32 block fits the budget."""
    per_img = max(1, rows_per_img * width_elems * 4)
    max_imgs = max(1, budget_bytes // per_img)
    for t in range(min(nb, max_imgs), 0, -1):
        if nb % t == 0:
            return t
    return 1


# ---------------------------------------------------------------------------
# Encoder: patch-embed matmul + visible-mean pool + head projection.
# One call handles BOTH views (stacked on the image axis); grid over image tiles.
# ---------------------------------------------------------------------------
def _encoder_kernel(p_ref, we_ref, wh_ref, emb_ref, z_ref, *, n_vis):
    bt, p, pd = p_ref.shape
    patches = p_ref[...].reshape(bt * p, pd)
    emb = jnp.dot(patches.astype(jnp.bfloat16),
                  we_ref[...].astype(jnp.bfloat16),
                  preferred_element_type=jnp.float32)               # [bt*P, E]
    e = emb.shape[1]
    emb3 = emb.reshape(bt, p, e)
    emb_ref[...] = emb3
    pooled = jnp.mean(emb3[:, :n_vis, :], axis=1)                   # [bt, E]
    z = jnp.dot(pooled.astype(jnp.bfloat16),
                wh_ref[...].astype(jnp.bfloat16),
                preferred_element_type=jnp.float32)                 # [bt, dim]
    z_ref[...] = z[:, None, :]


def pallas_encoder(patches, w_embed, w_head, n_vis):
    nb, p, pd = patches.shape
    e = w_embed.shape[1]
    d = w_head.shape[1]
    bt = _choose_image_tile(nb, p, max(pd, e))
    kern = functools.partial(_encoder_kernel, n_vis=n_vis)
    emb, z = pl.pallas_call(
        kern,
        out_shape=(jax.ShapeDtypeStruct((nb, p, e), jnp.float32),
                   jax.ShapeDtypeStruct((nb, 1, d), jnp.float32)),
        grid=(nb // bt,),
        in_specs=[pl.BlockSpec((bt, p, pd), lambda i: (i, 0, 0)),
                  pl.BlockSpec((pd, e), lambda i: (0, 0)),
                  pl.BlockSpec((e, d), lambda i: (0, 0))],
        out_specs=(pl.BlockSpec((bt, p, e), lambda i: (i, 0, 0)),
                   pl.BlockSpec((bt, 1, d), lambda i: (i, 0, 0))),
        compiler_params=pltpu.CompilerParams(dimension_semantics=("parallel",)),
    )(patches, w_embed, w_head)
    return emb, z[:, 0, :]


# ---------------------------------------------------------------------------
# Predictor MLP: Linear -> BatchNorm1d (per-view batch stats) -> ReLU -> Linear
# Both views batched into one call (grid of 2); BN stats stay per-view correct.
# ---------------------------------------------------------------------------
def _predictor_kernel(z_ref, w1_ref, g_ref, b_ref, w2_ref, q_ref):
    z = z_ref[0]                                                    # [N, dim]
    h = jnp.dot(z.astype(jnp.bfloat16), w1_ref[...].astype(jnp.bfloat16),
                preferred_element_type=jnp.float32)                 # [N, mlp]
    mean = jnp.mean(h, axis=0, keepdims=True)
    var = jnp.mean((h - mean) ** 2, axis=0, keepdims=True)          # biased (torch BN train)
    hn = (h - mean) * jax.lax.rsqrt(var + 1e-5)
    hn = hn * g_ref[...] + b_ref[...]
    hn = jnp.maximum(hn, 0.0)
    q_ref[0] = jnp.dot(hn.astype(jnp.bfloat16), w2_ref[...].astype(jnp.bfloat16),
                       preferred_element_type=jnp.float32)


def pallas_predictor(z_stack, mlp):
    v, n, d = z_stack.shape
    md = mlp["w1"].shape[1]
    return pl.pallas_call(
        _predictor_kernel,
        out_shape=jax.ShapeDtypeStruct((v, n, d), jnp.float32),
        grid=(v,),
        in_specs=[pl.BlockSpec((1, n, d), lambda i: (i, 0, 0)),
                  pl.BlockSpec((d, md), lambda i: (0, 0)),
                  pl.BlockSpec((1, md), lambda i: (0, 0)),
                  pl.BlockSpec((1, md), lambda i: (0, 0)),
                  pl.BlockSpec((md, d), lambda i: (0, 0))],
        out_specs=pl.BlockSpec((1, n, d), lambda i: (i, 0, 0)),
        compiler_params=pltpu.CompilerParams(dimension_semantics=("parallel",)),
    )(z_stack, mlp["w1"], mlp["gamma"], mlp["beta"], mlp["w2"])


# ---------------------------------------------------------------------------
# Decoder + masked MAE loss + cls projection, fully fused.
# One call handles BOTH views: grid = (view, image-tile).  `pred` stays in VMEM;
# masked SSE / mask-count accumulate into per-view resident (1,1,1) output blocks.
# Mask tokens substituted in-kernel from a patch-index iota (no gather in HBM).
# ---------------------------------------------------------------------------
def _decoder_kernel(emb_ref, tgt_ref, mtk_ref, wd_ref, wp_ref, wc_ref,
                    cls_ref, sse_ref, msum_ref, *, n_vis, masked):
    @pl.when(pl.program_id(1) == 0)
    def _():
        sse_ref[...] = jnp.zeros_like(sse_ref)
        msum_ref[...] = jnp.zeros_like(msum_ref)

    bt, p, e = emb_ref.shape[1], emb_ref.shape[2], emb_ref.shape[3]
    tok = emb_ref[0]                                                # [bt, P, E]
    pidx = jax.lax.broadcasted_iota(jnp.int32, (p, 1), 0)           # [P, 1]
    if masked:
        mrow = pidx >= n_vis                                        # masked positions
        mtk = mtk_ref[...][None, :, :]                              # [1, 1, E]
        tok = jnp.where(mrow[None, :, :], mtk, tok)
        mval = mrow.astype(jnp.float32)                             # [P, 1]
    else:
        mval = jnp.ones((p, 1), jnp.float32)

    tok2 = tok.reshape(bt * p, e)
    h2 = jnp.maximum(
        jnp.dot(tok2.astype(jnp.bfloat16), wd_ref[...].astype(jnp.bfloat16),
                preferred_element_type=jnp.float32), 0.0)           # [bt*P, E]
    pred2 = jnp.dot(h2.astype(jnp.bfloat16), wp_ref[...].astype(jnp.bfloat16),
                    preferred_element_type=jnp.float32)             # [bt*P, PD]
    pd = pred2.shape[1]
    d = pred2.reshape(bt, p, pd) - tgt_ref[0]
    per_patch = jnp.mean(d * d, axis=2, keepdims=True)              # [bt, P, 1]
    sse_ref[...] += jnp.sum(per_patch * mval[None, :, :])
    msum_ref[...] += jnp.sum(mval) * bt

    pooled = jnp.mean(h2.reshape(bt, p, e), axis=1)                 # [bt, E]
    cls = jnp.dot(pooled.astype(jnp.bfloat16), wc_ref[...].astype(jnp.bfloat16),
                  preferred_element_type=jnp.float32)               # [bt, dim]
    cls_ref[0] = cls[:, None, :]


def pallas_decoder(emb4, tgt4, mask_token, w_dec, w_pred, w_cls, *, n_vis, masked):
    v, n, p, e = emb4.shape
    pd = w_pred.shape[1]
    d = w_cls.shape[1]
    bt = _choose_image_tile(n, p, max(pd, e))
    nt = n // bt
    kern = functools.partial(_decoder_kernel, n_vis=n_vis, masked=masked)
    cls, sse, msum = pl.pallas_call(
        kern,
        out_shape=(jax.ShapeDtypeStruct((v, n, 1, d), jnp.float32),
                   jax.ShapeDtypeStruct((v, 1, 1), jnp.float32),
                   jax.ShapeDtypeStruct((v, 1, 1), jnp.float32)),
        grid=(v, nt),
        in_specs=[pl.BlockSpec((1, bt, p, e), lambda vi, i: (vi, i, 0, 0)),
                  pl.BlockSpec((1, bt, p, pd), lambda vi, i: (vi, i, 0, 0)),
                  pl.BlockSpec((1, e), lambda vi, i: (0, 0)),
                  pl.BlockSpec((e, e), lambda vi, i: (0, 0)),
                  pl.BlockSpec((e, pd), lambda vi, i: (0, 0)),
                  pl.BlockSpec((e, d), lambda vi, i: (0, 0))],
        out_specs=(pl.BlockSpec((1, bt, 1, d), lambda vi, i: (vi, i, 0, 0)),
                   pl.BlockSpec((1, 1, 1), lambda vi, i: (vi, 0, 0)),
                   pl.BlockSpec((1, 1, 1), lambda vi, i: (vi, 0, 0))),
        compiler_params=pltpu.CompilerParams(
            dimension_semantics=("parallel", "arbitrary")),
    )(emb4, tgt4, mask_token, w_dec, w_pred, w_cls)
    return cls[:, :, 0, :], sse, msum


# ---------------------------------------------------------------------------
# Contrastive loss: all 4 (q, k) pairs batched into one call (grid of 4).
# L2-normalize (rsqrt), logits = qn @ kn^T / T, CE with labels=arange(N), * 2T.
# Diagonal extracted with a row-wise dot instead of an iota mask.
# ---------------------------------------------------------------------------
def _contrastive_kernel(q_ref, k_ref, loss_ref, *, T):
    q = q_ref[0]                                                    # [N, D]
    k = k_ref[0]
    # torch F.normalize(x, dim=1): x / max(||x||, 1e-12) == x * rsqrt(max(sumsq, 1e-24))
    qn = q * jax.lax.rsqrt(jnp.maximum(jnp.sum(q * q, axis=1, keepdims=True), 1e-24))
    kn = k * jax.lax.rsqrt(jnp.maximum(jnp.sum(k * k, axis=1, keepdims=True), 1e-24))
    logits = jax.lax.dot_general(qn, kn, (((1,), (1,)), ((), ())),
                                 preferred_element_type=jnp.float32) / T   # [N, N]
    diag = jnp.sum(qn * kn, axis=1, keepdims=True) / T                     # [N, 1]
    row_max = jnp.max(logits, axis=1, keepdims=True)
    lse = jnp.log(jnp.sum(jnp.exp(logits - row_max), axis=1, keepdims=True)) + row_max
    ce = jnp.mean(lse - diag, axis=0, keepdims=True)                       # [1, 1]
    loss_ref[0] = ce * (2.0 * T)


def pallas_contrastive_losses(q_all, k_all, T):
    v, n, d = q_all.shape
    kern = functools.partial(_contrastive_kernel, T=float(T))
    out = pl.pallas_call(
        kern,
        out_shape=jax.ShapeDtypeStruct((v, 1, 1), jnp.float32),
        grid=(v,),
        in_specs=[pl.BlockSpec((1, n, d), lambda i: (i, 0, 0)),
                  pl.BlockSpec((1, n, d), lambda i: (i, 0, 0))],
        out_specs=pl.BlockSpec((1, 1, 1), lambda i: (i, 0, 0)),
        compiler_params=pltpu.CompilerParams(dimension_semantics=("parallel",)),
    )(q_all, k_all)
    return out[:, 0, 0]


# ---------------------------------------------------------------------------
# Momentum (EMA) update: one fused, tiled elementwise kernel over the whole
# flattened parameter pytree, aliased in-place on the momentum slab.
# ---------------------------------------------------------------------------
def _ema_kernel(pm_ref, pb_ref, m_ref, o_ref):
    m = m_ref[0]
    o_ref[...] = pm_ref[...] * m + pb_ref[...] * (1.0 - m)


def ema_update(params_m, params_b, m):
    leaves_m, treedef = jax.tree_util.tree_flatten(params_m)
    leaves_b = jax.tree_util.tree_flatten(params_b)[0]
    flat_m = jnp.concatenate([x.reshape(-1).astype(jnp.float32) for x in leaves_m])
    flat_b = jnp.concatenate([x.reshape(-1).astype(jnp.float32) for x in leaves_b])
    total = flat_m.shape[0]

    lane = 128
    rows = -(-total // lane)
    rows = -(-rows // 8) * 8
    padded = rows * lane
    fm = jnp.pad(flat_m, (0, padded - total)).reshape(rows, lane)
    fb = jnp.pad(flat_b, (0, padded - total)).reshape(rows, lane)
    tr = _row_tile(rows)
    m_arr = jnp.asarray(m, dtype=jnp.float32).reshape((1,))

    out = pl.pallas_call(
        _ema_kernel,
        out_shape=jax.ShapeDtypeStruct((rows, lane), jnp.float32),
        grid=(rows // tr,),
        in_specs=[pl.BlockSpec((tr, lane), lambda i: (i, 0)),
                  pl.BlockSpec((tr, lane), lambda i: (i, 0)),
                  pl.BlockSpec(memory_space=SMEM)],
        out_specs=pl.BlockSpec((tr, lane), lambda i: (i, 0)),
        input_output_aliases={0: 0},
        compiler_params=pltpu.CompilerParams(dimension_semantics=("parallel",)),
    )(fm, fb, m_arr)

    flat_out = out.reshape(-1)[:total]
    new_leaves, off = [], 0
    for ref in leaves_m:
        n = ref.size
        new_leaves.append(flat_out[off:off + n].reshape(ref.shape))
        off += n
    return jax.tree_util.tree_unflatten(treedef, new_leaves)


# ---------------------------------------------------------------------------
# JAX glue: patchify and the MoCo forward
# ---------------------------------------------------------------------------
def patchify(x, p):
    # x: [N, C, H, W] (NCHW, as in PyTorch) -> [N, P, C*p*p]
    n, c, h, w = x.shape
    x = x.reshape(n, c, h // p, p, w // p, p)
    x = jnp.transpose(x, (0, 2, 4, 1, 3, 5))
    return x.reshape(n, (h // p) * (w // p), c * p * p)


@functools.partial(jax.jit, static_argnames=("epoch", "epoch_mom", "T", "patch"))
def moco_forward(params, x1, x2, m, *, epoch, epoch_mom, T=1.0, patch=8):
    enc_b, dec_b, pred_mlp, enc_m, dec_m = params
    n = x1.shape[0]

    # patchify both views at once; views stacked on the image axis
    x_all = jnp.concatenate([x1, x2], axis=0)                        # [2N, C, H, W]
    p_all = patchify(x_all, patch)                                   # [2N, P, PD]
    nb, p, pd = p_all.shape
    p_vis = p // 2  # deterministic 50% masking; "shuffle" = identity

    # base encoder: both views in one fused call (embed + visible-pool + head)
    emb_b, z_b = pallas_encoder(p_all, enc_b["w_embed"], enc_b["w_head"], n_vis=p_vis)

    # predictor on both views in one batched call (per-view BN stats)
    q_stack = pallas_predictor(z_b.reshape(2, n, -1), pred_mlp)
    q1, q2 = q_stack[0], q_stack[1]

    # momentum (EMA) update — single fused kernel over the combined param slab
    # (static python branch mirrors `if epoch < epoch_mom`)
    if epoch < epoch_mom:
        enc_m, dec_m = jax.lax.stop_gradient(
            ema_update((enc_m, dec_m), (enc_b, dec_b), m))
    else:
        enc_m = jax.lax.stop_gradient(ema_update(enc_m, enc_b, m))

    # momentum encoder: both views in one fused call (no-grad branch in torch)
    emb_m, z_m = pallas_encoder(p_all, enc_m["w_embed"], enc_m["w_head"], n_vis=p)
    emb_m = jax.lax.stop_gradient(emb_m)
    z_m = jax.lax.stop_gradient(z_m)
    k1, k2 = z_m[:n], z_m[n:]

    tgt4 = p_all.reshape(2, n, p, pd)

    # base decoder on both views (masked MAE + cls), one fused call
    cls_q, sse_q, msum_q = pallas_decoder(
        emb_b.reshape(2, n, p, -1), tgt4, dec_b["mask_token"],
        dec_b["w_dec"], dec_b["w_pred"], dec_b["w_cls"],
        n_vis=p_vis, masked=True)
    mae_q1 = sse_q[0, 0, 0] / jnp.maximum(msum_q[0, 0, 0], 1e-6)
    mae_q2 = sse_q[1, 0, 0] / jnp.maximum(msum_q[1, 0, 0], 1e-6)
    cls_q1, cls_q2 = cls_q[0], cls_q[1]

    # momentum decoder on both views (forward_st_100: no masking), one fused call
    cls_k, _, _ = pallas_decoder(
        emb_m.reshape(2, n, p, -1), tgt4, dec_m["mask_token"],
        dec_m["w_dec"], dec_m["w_pred"], dec_m["w_cls"],
        n_vis=p, masked=False)
    cls_k = jax.lax.stop_gradient(cls_k)
    cls_k1, cls_k2 = cls_k[0], cls_k[1]

    # four contrastive pairs in one batched kernel call
    q_all = jnp.stack([q1, q2, cls_q1, cls_q2], axis=0)
    k_all = jnp.stack([k2, k1, cls_k2, cls_k1], axis=0)
    losses = pallas_contrastive_losses(q_all, k_all, T)
    loss_contrastive = losses[0] + losses[1]
    loss_con_con = losses[2] + losses[3]

    loss_mae = (mae_q1 + mae_q2) / 2.0
    loss = loss_contrastive + loss_mae + 0.5 * loss_con_con
    # momentum params are returned (functional equivalent of torch in-place update)
    return (loss, loss_contrastive, loss_mae), (enc_m, dec_m)


# ---------------------------------------------------------------------------
# Deterministic parameter init (lane-dense: all feature dims multiples of 128)
# ---------------------------------------------------------------------------
def init_params(key, patch_dim, embed_dim, dim, mlp_dim):
    ks = jax.random.split(key, 7)

    def init(k, shape, scale=0.02):
        return (scale * jax.random.normal(k, shape)).astype(jnp.float32)

    enc = {
        "w_embed": init(ks[0], (patch_dim, embed_dim)),
        "w_head": init(ks[1], (embed_dim, dim)),
    }
    dec = {
        "w_dec": init(ks[2], (embed_dim, embed_dim)),
        "w_pred": init(ks[3], (embed_dim, patch_dim)),
        "w_cls": init(ks[4], (embed_dim, dim)),
        "mask_token": jnp.zeros((1, embed_dim), jnp.float32),
    }
    # predictor = _build_mlp(2, dim, mlp_dim, dim, last_bn=False) (MoCo-v3 convention)
    pred_mlp = {
        "w1": init(ks[5], (dim, mlp_dim)),
        "gamma": jnp.ones((1, mlp_dim), jnp.float32),
        "beta": jnp.zeros((1, mlp_dim), jnp.float32),
        "w2": init(ks[6], (mlp_dim, dim)),
    }
    return enc, dec, pred_mlp


if __name__ == "__main__":
    N, C, H, W = 4, 4, 32, 32            # C=4 -> patch_dim = 4*8*8 = 256 (lane-dense)
    patch = 8
    dim, mlp_dim, embed_dim = 128, 256, 128
    patch_dim = C * patch * patch

    key = jax.random.PRNGKey(0)
    k_x1, k_x2, k_p = jax.random.split(key, 3)
    x1 = jax.random.normal(k_x1, (N, C, H, W), jnp.float32)
    x2 = jax.random.normal(k_x2, (N, C, H, W), jnp.float32)

    enc_b, dec_b, pred_mlp = init_params(k_p, patch_dim, embed_dim, dim, mlp_dim)
    # momentum copies of base params (as in MoCo __init__)
    enc_m = jax.tree_util.tree_map(jnp.copy, enc_b)
    dec_m = jax.tree_util.tree_map(jnp.copy, dec_b)
    params = (enc_b, dec_b, pred_mlp, enc_m, dec_m)

    (loss, loss_contrastive, loss_mae), (enc_m, dec_m) = moco_forward(
        params, x1, x2, 0.99, epoch=0, epoch_mom=5, T=1.0, patch=patch
    )
    jax.block_until_ready((loss, loss_contrastive, loss_mae, enc_m, dec_m))
    print("KERNEL_OK")
</pallas_src>

<mosaic_0001>
module attributes {stable_mosaic.version = 11 : i64} {
  func.func @_encoder_kernel(%arg0: i32, %arg1: memref<8x16x256xf32, #tpu.memory_space<vmem>>, %arg2: memref<256x128xf32, #tpu.memory_space<vmem>>, %arg3: memref<128x128xf32, #tpu.memory_space<vmem>>, %arg4: memref<8x16x128xf32, #tpu.memory_space<vmem>>, %arg5: memref<8x1x128xf32, #tpu.memory_space<vmem>>) attributes {dimension_semantics = [#tpu.dimension_semantics<parallel>], iteration_bounds = array<i64: 1>, scalar_prefetch = 0 : i64, scratch_operands = 0 : i64, tpu.core_type = #tpu.core_type<tc>, window_params = [{transform_indices = @transform_0, window_bounds = array<i64: 8, 16, 256>}, {pipeline_mode = #tpu.pipeline_mode<synchronous>, transform_indices = @transform_1, window_bounds = array<i64: 256, 128>}, {pipeline_mode = #tpu.pipeline_mode<synchronous>, transform_indices = @transform_2, window_bounds = array<i64: 128, 128>}, {transform_indices = @transform_3, window_bounds = array<i64: 8, 16, 128>}, {transform_indices = @transform_4, window_bounds = array<i64: 8, 1, 128>}]} {
    %c0 = arith.constant 0 : index
    %c0_0 = arith.constant 0 : index
    %c0_1 = arith.constant 0 : index
    %0 = vector.load %arg1[%c0, %c0_0, %c0_1] : memref<8x16x256xf32, #tpu.memory_space<vmem>>, vector<8x16x256xf32>
    %1 = vector.shape_cast %0 : vector<8x16x256xf32> to vector<128x256xf32>
    %2 = arith.truncf %1 : vector<128x256xf32> to vector<128x256xbf16>
    %c0_2 = arith.constant 0 : index
    %c0_3 = arith.constant 0 : index
    %3 = vector.load %arg2[%c0_2, %c0_3] : memref<256x128xf32, #tpu.memory_space<vmem>>, vector<256x128xf32>
    %4 = arith.truncf %3 : vector<256x128xf32> to vector<256x128xbf16>
    %cst = arith.constant dense<0.000000e+00> : vector<128x128xf32>
    %5 = tpu.matmul %2, %4, %cst {dimension_numbers = #tpu.dot_dimension_numbers<[1], [0], [0], [1], [0, 0, 1, 1], [], []>} : vector<128x256xbf16>, vector<256x128xbf16>, vector<128x128xf32> -> vector<128x128xf32>
    %6 = vector.shape_cast %5 : vector<128x128xf32> to vector<8x16x128xf32>
    %c0_4 = arith.constant 0 : index
    %c0_5 = arith.constant 0 : index
    %c0_6 = arith.constant 0 : index
    %7 = vector.load %arg4[%c0_4, %c0_5, %c0_6] : memref<8x16x128xf32, #tpu.memory_space<vmem>>, vector<8x16x128xf32>
    tpu.vector_store %arg4[%c0_4, %c0_5, %c0_6], %6 {strides = array<i32>} : memref<8x16x128xf32, #tpu.memory_space<vmem>>, vector<8x16x128xf32>,
    %8 = vector.extract_strided_slice %6 {offsets = [0, 0, 0], sizes = [8, 8, 128], strides = [1, 1, 1]} : vector<8x16x128xf32> to vector<8x8x128xf32>
    %cst_7 = arith.constant dense<0.000000e+00> : vector<8x128xf32>
    %9 = vector.multi_reduction <add>, %8, %cst_7 [1] : vector<8x8x128xf32> to vector<8x128xf32>
    %cst_8 = arith.constant 8.000000e+00 : f32
    %10 = vector.broadcast %cst_8 : f32 to vector<8x128xf32>
    %11 = arith.divf %9, %10 : vector<8x128xf32>
    %12 = arith.truncf %11 : vector<8x128xf32> to vector<8x128xbf16>
    %c0_9 = arith.constant 0 : index
    %c0_10 = arith.constant 0 : index
    %13 = vector.load %arg3[%c0_9, %c0_10] : memref<128x128xf32, #tpu.memory_space<vmem>>, vector<128x128xf32>
    %14 = arith.truncf %13 : vector<128x128xf32> to vector<128x128xbf16>
    %cst_11 = arith.constant dense<0.000000e+00> : vector<8x128xf32>
    %15 = tpu.matmul %12, %14, %cst_11 {dimension_numbers = #tpu.dot_dimension_numbers<[1], [0], [0], [1], [0, 0, 1, 1], [], []>} : vector<8x128xbf16>, vector<128x128xbf16>, vector<8x128xf32> -> vector<8x128xf32>
    %16 = vector.shape_cast %15 : vector<8x128xf32> to vector<8x1x128xf32>
    %c0_12 = arith.constant 0 : index
    %c0_13 = arith.constant 0 : index
    %c0_14 = arith.constant 0 : index
    %17 = vector.load %arg5[%c0_12, %c0_13, %c0_14] : memref<8x1x128xf32, #tpu.memory_space<vmem>>, vector<8x1x128xf32>
    tpu.vector_store %arg5[%c0_12, %c0_13, %c0_14], %16 {strides = array<i32>} : memref<8x1x128xf32, #tpu.memory_space<vmem>>, vector<8x1x128xf32>,
    return
  }
  func.func @transform_0(%arg0: i32) -> (i32, i32, i32) {
    %c0_i32 = arith.constant 0 : i32
    %c0_i32_0 = arith.constant 0 : i32
    %c0_i32_1 = arith.constant 0 : i32
    return %arg0, %c0_i32, %c0_i32_0 : i32, i32, i32
  }
  func.func @transform_1(%arg0: i32) -> (i32, i32) {
    %c0_i32 = arith.constant 0 : i32
    %c0_i32_0 = arith.constant 0 : i32
    %c0_i32_1 = arith.constant 0 : i32
    return %c0_i32, %c0_i32_0 : i32, i32
  }
  func.func @transform_2(%arg0: i32) -> (i32, i32) {
    %c0_i32 = arith.constant 0 : i32
    %c0_i32_0 = arith.constant 0 : i32
    %c0_i32_1 = arith.constant 0 : i32
    return %c0_i32, %c0_i32_0 : i32, i32
  }
  func.func @transform_3(%arg0: i32) -> (i32, i32, i32) {
    %c0_i32 = arith.constant 0 : i32
    %c0_i32_0 = arith.constant 0 : i32
    %c0_i32_1 = arith.constant 0 : i32
    return %arg0, %c0_i32, %c0_i32_0 : i32, i32, i32
  }
  func.func @transform_4(%arg0: i32) -> (i32, i32, i32) {
    %c0_i32 = arith.constant 0 : i32
    %c0_i32_0 = arith.constant 0 : i32
    %c0_i32_1 = arith.constant 0 : i32
    return %arg0, %c0_i32, %c0_i32_0 : i32, i32, i32
  }
}

module attributes {stable_mosaic.version = 11 : i64} {
  func.func @_decoder_kernel(%arg0: i32, %arg1: i32, %arg2: memref<1x4x16x128xf32, #tpu.memory_space<vmem>>, %arg3: memref<1x4x16x256xf32, #tpu.memory_space<vmem>>, %arg4: memref<1x128xf32, #tpu.memory_space<vmem>>, %arg5: memref<128x128xf32, #tpu.memory_space<vmem>>, %arg6: memref<128x256xf32, #tpu.memory_space<vmem>>, %arg7: memref<128x128xf32, #tpu.memory_space<vmem>>, %arg8: memref<1x4x1x128xf32, #tpu.memory_space<vmem>>, %arg9: memref<1x1x1xf32, #tpu.memory_space<vmem>>, %arg10: memref<1x1x1xf32, #tpu.memory_space<vmem>>) attributes {dimension_semantics = [#tpu.dimension_semantics<parallel>, #tpu.dimension_semantics<arbitrary>], iteration_bounds = array<i64: 2, 1>, scalar_prefetch = 0 : i64, scratch_operands = 0 : i64, tpu.core_type = #tpu.core_type<tc>, window_params = [{transform_indices = @transform_0, window_bounds = array<i64: 1, 4, 16, 128>}, {transform_indices = @transform_1, window_bounds = array<i64: 1, 4, 16, 256>}, {pipeline_mode = #tpu.pipeline_mode<synchronous>, transform_indices = @transform_2, window_bounds = array<i64: 1, 128>}, {pipeline_mode = #tpu.pipeline_mode<synchronous>, transform_indices = @transform_3, window_bounds = array<i64: 128, 128>}, {pipeline_mode = #tpu.pipeline_mode<synchronous>, transform_indices = @transform_4, window_bounds = array<i64: 128, 256>}, {pipeline_mode = #tpu.pipeline_mode<synchronous>, transform_indices = @transform_5, window_bounds = array<i64: 128, 128>}, {transform_indices = @transform_6, window_bounds = array<i64: 1, 4, 1, 128>}, {transform_indices = @transform_7, window_bounds = array<i64: 1, 1, 1>}, {transform_indices = @transform_8, window_bounds = array<i64: 1, 1, 1>}]} {
    %c0_i32 = arith.constant 0 : i32
    %0 = arith.cmpi eq, %arg1, %c0_i32 : i32
    %1 = arith.extui %0 : i1 to i32
    %c0_i32_0 = arith.constant 0 : i32
    %2 = arith.cmpi ne, %1, %c0_i32_0 : i32
    scf.if %2 {
      %cst_42 = arith.constant 0.000000e+00 : f32
      %70 = vector.broadcast %cst_42 : f32 to vector<1x1x1xf32>
      %c0_43 = arith.constant 0 : index
      %c0_44 = arith.constant 0 : index
      %c0_45 = arith.constant 0 : index
      %71 = vector.load %arg9[%c0_43, %c0_44, %c0_45] : memref<1x1x1xf32, #tpu.memory_space<vmem>>, vector<1x1x1xf32>
      tpu.vector_store %arg9[%c0_43, %c0_44, %c0_45], %70 {strides = array<i32>} : memref<1x1x1xf32, #tpu.memory_space<vmem>>, vector<1x1x1xf32>,
      %cst_46 = arith.constant 0.000000e+00 : f32
      %72 = vector.broadcast %cst_46 : f32 to vector<1x1x1xf32>
      %c0_47 = arith.constant 0 : index
      %c0_48 = arith.constant 0 : index
      %c0_49 = arith.constant 0 : index
      %73 = vector.load %arg10[%c0_47, %c0_48, %c0_49] : memref<1x1x1xf32, #tpu.memory_space<vmem>>, vector<1x1x1xf32>
      tpu.vector_store %arg10[%c0_47, %c0_48, %c0_49], %72 {strides = array<i32>} : memref<1x1x1xf32, #tpu.memory_space<vmem>>, vector<1x1x1xf32>,
    } else {
    }
    %c0 = arith.constant 0 : index
    %c0_1 = arith.constant 0 : index
    %c0_2 = arith.constant 0 : index
    %c0_3 = arith.constant 0 : index
    %3 = vector.load %arg2[%c0, %c0_1, %c0_2, %c0_3] : memref<1x4x16x128xf32, #tpu.memory_space<vmem>>, vector<1x4x16x128xf32>
    %4 = vector.shape_cast %3 : vector<1x4x16x128xf32> to vector<4x16x128xf32>
    %5 = tpu.iota {dimensions = array<i32: 0>} : vector<16x1xi32>
    %c8_i32 = arith.constant 8 : i32
    %6 = vector.broadcast %c8_i32 : i32 to vector<16x1xi32>
    %7 = arith.cmpi sge, %5, %6 : vector<16x1xi32>
    %c0_4 = arith.constant 0 : index
    %c0_5 = arith.constant 0 : index
    %8 = vector.load %arg4[%c0_4, %c0_5] : memref<1x128xf32, #tpu.memory_space<vmem>>, vector<1x128xf32>
    %9 = vector.shape_cast %8 : vector<1x128xf32> to vector<1x1x128xf32>
    %10 = vector.shape_cast %7 : vector<16x1xi1> to vector<1x16x1xi1>
    %11 = vector.shape_cast %10 : vector<1x16x1xi1> to vector<1x16x1xi1>
    %12 = vector.broadcast %11 : vector<1x16x1xi1> to vector<4x16x128xi1>
    %13 = vector.shape_cast %9 : vector<1x1x128xf32> to vector<1x1x128xf32>
    %14 = vector.broadcast %13 : vector<1x1x128xf32> to vector<4x16x128xf32>
    %15 = arith.select %12, %14, %4 : vector<4x16x128xi1>, vector<4x16x128xf32>
    %16 = arith.extui %7 : vector<16x1xi1> to vector<16x1xi32>
    %17 = arith.sitofp %16 : vector<16x1xi32> to vector<16x1xf32>
    %18 = vector.shape_cast %15 : vector<4x16x128xf32> to vector<64x128xf32>
    %19 = arith.truncf %18 : vector<64x128xf32> to vector<64x128xbf16>
    %c0_6 = arith.constant 0 : index
    %c0_7 = arith.constant 0 : index
    %20 = vector.load %arg5[%c0_6, %c0_7] : memref<128x128xf32, #tpu.memory_space<vmem>>, vector<128x128xf32>
    %21 = arith.truncf %20 : vector<128x128xf32> to vector<128x128xbf16>
    %cst = arith.constant dense<0.000000e+00> : vector<64x128xf32>
    %22 = tpu.matmul %19, %21, %cst {dimension_numbers = #tpu.dot_dimension_numbers<[1], [0], [0], [1], [0, 0, 1, 1], [], []>} : vector<64x128xbf16>, vector<128x128xbf16>, vector<64x128xf32> -> vector<64x128xf32>
    %cst_8 = arith.constant 0.000000e+00 : f32
    %23 = vector.broadcast %cst_8 : f32 to vector<64x128xf32>
    %24 = arith.maximumf %22, %23 : vector<64x128xf32>
    %25 = arith.truncf %24 : vector<64x128xf32> to vector<64x128xbf16>
    %c0_9 = arith.constant 0 : index
    %c0_10 = arith.constant 0 : index
    %26 = vector.load %arg6[%c0_9, %c0_10] : memref<128x256xf32, #tpu.memory_space<vmem>>, vector<128x256xf32>
    %27 = arith.truncf %26 : vector<128x256xf32> to vector<128x256xbf16>
    %cst_11 = arith.constant dense<0.000000e+00> : vector<64x256xf32>
    %28 = tpu.matmul %25, %27, %cst_11 {dimension_numbers = #tpu.dot_dimension_numbers<[1], [0], [0], [1], [0, 0, 1, 1], [], []>} : vector<64x128xbf16>, vector<128x256xbf16>, vector<64x256xf32> -> vector<64x256xf32>
    %29 = vector.shape_cast %28 : vector<64x256xf32> to vector<4x16x256xf32>
    %c0_12 = arith.constant 0 : index
    %c0_13 = arith.constant 0 : index
    %c0_14 = arith.constant 0 : index
    %c0_15 = arith.constant 0 : index
    %30 = vector.load %arg3[%c0_12, %c0_13, %c0_14, %c0_15] : memref<1x4x16x256xf32, #tpu.memory_space<vmem>>, vector<1x4x16x256xf32>
    %31 = vector.shape_cast %30 : vector<1x4x16x256xf32> to vector<4x16x256xf32>
    %32 = arith.subf %29, %31 : vector<4x16x256xf32>
    %33 = arith.mulf %32, %32 : vector<4x16x256xf32>
    %cst_16 = arith.constant dense<0.000000e+00> : vector<4x16xf32>
    %34 = vector.multi_reduction <add>, %33, %cst_16 [2] : vector<4x16x256xf32> to vector<4x16xf32>
    %35 = vector.shape_cast %34 : vector<4x16xf32> to vector<4x16x1xf32>
    %cst_17 = arith.constant 2.560000e+02 : f32
    %36 = vector.broadcast %cst_17 : f32 to vector<4x16x1xf32>
    %37 = arith.divf %35, %36 : vector<4x16x1xf32>
    %c0_18 = arith.constant 0 : index
    %c0_19 = arith.constant 0 : index
    %c0_20 = arith.constant 0 : index
    %38 = vector.load %arg9[%c0_18, %c0_19, %c0_20] : memref<1x1x1xf32, #tpu.memory_space<vmem>>, vector<1x1x1xf32>
    %39 = vector.shape_cast %17 : vector<16x1xf32> to vector<1x16x1xf32>
    %40 = vector.broadcast %39 : vector<1x16x1xf32> to vector<4x16x1xf32>
    %41 = arith.mulf %37, %40 : vector<4x16x1xf32>
    %42 = vector.shape_cast %41 : vector<4x16x1xf32> to vector<1x4x16x1xf32>
    %cst_21 = arith.constant dense<0.000000e+00> : vector<1xf32>
    %43 = vector.multi_reduction <add>, %42, %cst_21 [1, 2, 3] : vector<1x4x16x1xf32> to vector<1xf32>
    %44 = vector.shape_cast %43 : vector<1xf32> to vector<1x1x1x1xf32>
    %45 = vector.extract %44[0, 0, 0, 0] : f32 from vector<1x1x1x1xf32>
    %46 = vector.broadcast %45 : f32 to vector<1x1x1xf32>
    %47 = arith.addf %38, %46 : vector<1x1x1xf32>
    %c0_22 = arith.constant 0 : index
    %c0_23 = arith.constant 0 : index
    %c0_24 = arith.constant 0 : index
    %48 = vector.load %arg9[%c0_22, %c0_23, %c0_24] : memref<1x1x1xf32, #tpu.memory_space<vmem>>, vector<1x1x1xf32>
    tpu.vector_store %arg9[%c0_22, %c0_23, %c0_24], %47 {strides = array<i32>} : memref<1x1x1xf32, #tpu.memory_space<vmem>>, vector<1x1x1xf32>,
    %c0_25 = arith.constant 0 : index
    %c0_26 = arith.constant 0 : index
    %c0_27 = arith.constant 0 : index
    %49 = vector.load %arg10[%c0_25, %c0_26, %c0_27] : memref<1x1x1xf32, #tpu.memory_space<vmem>>, vector<1x1x1xf32>
    %50 = vector.shape_cast %17 : vector<16x1xf32> to vector<1x16x1xf32>
    %cst_28 = arith.constant dense<0.000000e+00> : vector<1xf32>
    %51 = vector.multi_reduction <add>, %50, %cst_28 [1, 2] : vector<1x16x1xf32> to vector<1xf32>
    %52 = vector.shape_cast %51 : vector<1xf32> to vector<1x1x1xf32>
    %53 = vector.extract %52[0, 0, 0] : f32 from vector<1x1x1xf32>
    %cst_29 = arith.constant 4.000000e+00 : f32
    %54 = arith.mulf %53, %cst_29 : f32
    %55 = vector.broadcast %54 : f32 to vector<1x1x1xf32>
    %56 = arith.addf %49, %55 : vector<1x1x1xf32>
    %c0_30 = arith.constant 0 : index
    %c0_31 = arith.constant 0 : index
    %c0_32 = arith.constant 0 : index
    %57 = vector.load %arg10[%c0_30, %c0_31, %c0_32] : memref<1x1x1xf32, #tpu.memory_space<vmem>>, vector<1x1x1xf32>
    tpu.vector_store %arg10[%c0_30, %c0_31, %c0_32], %56 {strides = array<i32>} : memref<1x1x1xf32, #tpu.memory_space<vmem>>, vector<1x1x1xf32>,
    %58 = vector.shape_cast %24 : vector<64x128xf32> to vector<4x16x128xf32>
    %cst_33 = arith.constant dense<0.000000e+00> : vector<4x128xf32>
    %59 = vector.multi_reduction <add>, %58, %cst_33 [1] : vector<4x16x128xf32> to vector<4x128xf32>
    %cst_34 = arith.constant 1.600000e+01 : f32
    %60 = vector.broadcast %cst_34 : f32 to vector<4x128xf32>
    %61 = arith.divf %59, %60 : vector<4x128xf32>
    %62 = arith.truncf %61 : vector<4x128xf32> to vector<4x128xbf16>
    %c0_35 = arith.constant 0 : index
    %c0_36 = arith.constant 0 : index
    %63 = vector.load %arg7[%c0_35, %c0_36] : memref<128x128xf32, #tpu.memory_space<vmem>>, vector<128x128xf32>
    %64 = arith.truncf %63 : vector<128x128xf32> to vector<128x128xbf16>
    %cst_37 = arith.constant dense<0.000000e+00> : vector<4x128xf32>
    %65 = tpu.matmul %62, %64, %cst_37 {dimension_numbers = #tpu.dot_dimension_numbers<[1], [0], [0], [1], [0, 0, 1, 1], [], []>} : vector<4x128xbf16>, vector<128x128xbf16>, vector<4x128xf32> -> vector<4x128xf32>
    %66 = vector.shape_cast %65 : vector<4x128xf32> to vector<4x1x128xf32>
    %c0_38 = arith.constant 0 : index
    %c0_39 = arith.constant 0 : index
    %c0_40 = arith.constant 0 : index
    %c0_41 = arith.constant 0 : index
    %67 = vector.load %arg8[%c0_38, %c0_39, %c0_40, %c0_41] : memref<1x4x1x128xf32, #tpu.memory_space<vmem>>, vector<1x4x1x128xf32>
    %68 = vector.shape_cast %67 : vector<1x4x1x128xf32> to vector<4x1x128xf32>
    %69 = vector.shape_cast %66 : vector<4x1x128xf32> to vector<1x4x1x128xf32>
    tpu.vector_store %arg8[%c0_38, %c0_39, %c0_40, %c0_41], %69 {strides = array<i32>} : memref<1x4x1x128xf32, #tpu.memory_space<vmem>>, vector<1x4x1x128xf32>,
    return
  }
  func.func @transform_0(%arg0: i32, %arg1: i32) -> (i32, i32, i32, i32) {
    %c0_i32 = arith.constant 0 : i32
    %c0_i32_0 = arith.constant 0 : i32
    %c0_i32_1 = arith.constant 0 : i32
    return %arg0, %arg1, %c0_i32, %c0_i32_0 : i32, i32, i32, i32
  }
  func.func @transform_1(%arg0: i32, %arg1: i32) -> (i32, i32, i32, i32) {
    %c0_i32 = arith.constant 0 : i32
    %c0_i32_0 = arith.constant 0 : i32
    %c0_i32_1 = arith.constant 0 : i32
    return %arg0, %arg1, %c0_i32, %c0_i32_0 : i32, i32, i32, i32
  }
  func.func @transform_2(%arg0: i32, %arg1: i32) -> (i32, i32) {
    %c0_i32 = arith.constant 0 : i32
    %c0_i32_0 = arith.constant 0 : i32
    %c0_i32_1 = arith.constant 0 : i32
    return %c0_i32, %c0_i32_0 : i32, i32
  }
  func.func @transform_3(%arg0: i32, %arg1: i32) -> (i32, i32) {
    %c0_i32 = arith.constant 0 : i32
    %c0_i32_0 = arith.constant 0 : i32
    %c0_i32_1 = arith.constant 0 : i32
    return %c0_i32, %c0_i32_0 : i32, i32
  }
  func.func @transform_4(%arg0: i32, %arg1: i32) -> (i32, i32) {
    %c0_i32 = arith.constant 0 : i32
    %c0_i32_0 = arith.constant 0 : i32
    %c0_i32_1 = arith.constant 0 : i32
    return %c0_i32, %c0_i32_0 : i32, i32
  }
  func.func @transform_5(%arg0: i32, %arg1: i32) -> (i32, i32) {
    %c0_i32 = arith.constant 0 : i32
    %c0_i32_0 = arith.constant 0 : i32
    %c0_i32_1 = arith.constant 0 : i32
    return %c0_i32, %c0_i32_0 : i32, i32
  }
  func.func @transform_6(%arg0: i32, %arg1: i32) -> (i32, i32, i32, i32) {
    %c0_i32 = arith.constant 0 : i32
    %c0_i32_0 = arith.constant 0 : i32
    %c0_i32_1 = arith.constant 0 : i32
    return %arg0, %arg1, %c0_i32, %c0_i32_0 : i32, i32, i32, i32
  }
  func.func @transform_7(%arg0: i32, %arg1: i32) -> (i32, i32, i32) {
    %c0_i32 = arith.constant 0 : i32
    %c0_i32_0 = arith.constant 0 : i32
    %c0_i32_1 = arith.constant 0 : i32
    return %arg0, %c0_i32, %c0_i32_0 : i32, i32, i32
  }
  func.func @transform_8(%arg0: i32, %arg1: i32) -> (i32, i32, i32) {
    %c0_i32 = arith.constant 0 : i32
    %c0_i32_0 = arith.constant 0 : i32
    %c0_i32_1 = arith.constant 0 : i32
    return %arg0, %c0_i32, %c0_i32_0 : i32, i32, i32
  }
}

module attributes {stable_mosaic.version = 11 : i64} {
  func.func @_predictor_kernel(%arg0: i32, %arg1: memref<1x4x128xf32, #tpu.memory_space<vmem>>, %arg2: memref<128x256xf32, #tpu.memory_space<vmem>>, %arg3: memref<1x256xf32, #tpu.memory_space<vmem>>, %arg4: memref<1x256xf32, #tpu.memory_space<vmem>>, %arg5: memref<256x128xf32, #tpu.memory_space<vmem>>, %arg6: memref<1x4x128xf32, #tpu.memory_space<vmem>>) attributes {dimension_semantics = [#tpu.dimension_semantics<parallel>], iteration_bounds = array<i64: 2>, scalar_prefetch = 0 : i64, scratch_operands = 0 : i64, tpu.core_type = #tpu.core_type<tc>, window_params = [{transform_indices = @transform_0, window_bounds = array<i64: 1, 4, 128>}, {pipeline_mode = #tpu.pipeline_mode<synchronous>, transform_indices = @transform_1, window_bounds = array<i64: 128, 256>}, {pipeline_mode = #tpu.pipeline_mode<synchronous>, transform_indices = @transform_2, window_bounds = array<i64: 1, 256>}, {pipeline_mode = #tpu.pipeline_mode<synchronous>, transform_indices = @transform_3, window_bounds = array<i64: 1, 256>}, {pipeline_mode = #tpu.pipeline_mode<synchronous>, transform_indices = @transform_4, window_bounds = array<i64: 256, 128>}, {transform_indices = @transform_5, window_bounds = array<i64: 1, 4, 128>}]} {
    %c0 = arith.constant 0 : index
    %c0_0 = arith.constant 0 : index
    %c0_1 = arith.constant 0 : index
    %0 = vector.load %arg1[%c0, %c0_0, %c0_1] : memref<1x4x128xf32, #tpu.memory_space<vmem>>, vector<1x4x128xf32>
    %1 = vector.shape_cast %0 : vector<1x4x128xf32> to vector<4x128xf32>
    %2 = arith.truncf %1 : vector<4x128xf32> to vector<4x128xbf16>
    %c0_2 = arith.constant 0 : index
    %c0_3 = arith.constant 0 : index
    %3 = vector.load %arg2[%c0_2, %c0_3] : memref<128x256xf32, #tpu.memory_space<vmem>>, vector<128x256xf32>
    %4 = arith.truncf %3 : vector<128x256xf32> to vector<128x256xbf16>
    %cst = arith.constant dense<0.000000e+00> : vector<4x256xf32>
    %5 = tpu.matmul %2, %4, %cst {dimension_numbers = #tpu.dot_dimension_numbers<[1], [0], [0], [1], [0, 0, 1, 1], [], []>} : vector<4x128xbf16>, vector<128x256xbf16>, vector<4x256xf32> -> vector<4x256xf32>
    %cst_4 = arith.constant dense<0.000000e+00> : vector<256xf32>
    %6 = vector.multi_reduction <add>, %5, %cst_4 [0] : vector<4x256xf32> to vector<256xf32>
    %7 = vector.shape_cast %6 : vector<256xf32> to vector<1x256xf32>
    %cst_5 = arith.constant 4.000000e+00 : f32
    %8 = vector.broadcast %cst_5 : f32 to vector<1x256xf32>
    %9 = arith.divf %7, %8 : vector<1x256xf32>
    %10 = vector.broadcast %9 : vector<1x256xf32> to vector<4x256xf32>
    %11 = arith.subf %5, %10 : vector<4x256xf32>
    %12 = arith.mulf %11, %11 : vector<4x256xf32>
    %cst_6 = arith.constant dense<0.000000e+00> : vector<256xf32>
    %13 = vector.multi_reduction <add>, %12, %cst_6 [0] : vector<4x256xf32> to vector<256xf32>
    %14 = vector.shape_cast %13 : vector<256xf32> to vector<1x256xf32>
    %cst_7 = arith.constant 4.000000e+00 : f32
    %15 = vector.broadcast %cst_7 : f32 to vector<1x256xf32>
    %16 = arith.divf %14, %15 : vector<1x256xf32>
    %17 = vector.broadcast %9 : vector<1x256xf32> to vector<4x256xf32>
    %18 = arith.subf %5, %17 : vector<4x256xf32>
    %cst_8 = arith.constant 9.99999974E-6 : f32
    %19 = vector.broadcast %cst_8 : f32 to vector<1x256xf32>
    %20 = arith.addf %16, %19 : vector<1x256xf32>
    %21 = math.rsqrt %20 : vector<1x256xf32>
    %22 = vector.broadcast %21 : vector<1x256xf32> to vector<4x256xf32>
    %23 = arith.mulf %18, %22 : vector<4x256xf32>
    %c0_9 = arith.constant 0 : index
    %c0_10 = arith.constant 0 : index
    %24 = vector.load %arg3[%c0_9, %c0_10] : memref<1x256xf32, #tpu.memory_space<vmem>>, vector<1x256xf32>
    %25 = vector.broadcast %24 : vector<1x256xf32> to vector<4x256xf32>
    %26 = arith.mulf %23, %25 : vector<4x256xf32>
    %c0_11 = arith.constant 0 : index
    %c0_12 = arith.constant 0 : index
    %27 = vector.load %arg4[%c0_11, %c0_12] : memref<1x256xf32, #tpu.memory_space<vmem>>, vector<1x256xf32>
    %28 = vector.broadcast %27 : vector<1x256xf32> to vector<4x256xf32>
    %29 = arith.addf %26, %28 : vector<4x256xf32>
    %cst_13 = arith.constant 0.000000e+00 : f32
    %30 = vector.broadcast %cst_13 : f32 to vector<4x256xf32>
    %31 = arith.maximumf %29, %30 : vector<4x256xf32>
    %32 = arith.truncf %31 : vector<4x256xf32> to vector<4x256xbf16>
    %c0_14 = arith.constant 0 : index
    %c0_15 = arith.constant 0 : index
    %33 = vector.load %arg5[%c0_14, %c0_15] : memref<256x128xf32, #tpu.memory_space<vmem>>, vector<256x128xf32>
    %34 = arith.truncf %33 : vector<256x128xf32> to vector<256x128xbf16>
    %cst_16 = arith.constant dense<0.000000e+00> : vector<4x128xf32>
    %35 = tpu.matmul %32, %34, %cst_16 {dimension_numbers = #tpu.dot_dimension_numbers<[1], [0], [0], [1], [0, 0, 1, 1], [], []>} : vector<4x256xbf16>, vector<256x128xbf16>, vector<4x128xf32> -> vector<4x128xf32>
    %c0_17 = arith.constant 0 : index
    %c0_18 = arith.constant 0 : index
    %c0_19 = arith.constant 0 : index
    %36 = vector.load %arg6[%c0_17, %c0_18, %c0_19] : memref<1x4x128xf32, #tpu.memory_space<vmem>>, vector<1x4x128xf32>
    %37 = vector.shape_cast %36 : vector<1x4x128xf32> to vector<4x128xf32>
    %38 = vector.shape_cast %35 : vector<4x128xf32> to vector<1x4x128xf32>
    tpu.vector_store %arg6[%c0_17, %c0_18, %c0_19], %38 {strides = array<i32>} : memref<1x4x128xf32, #tpu.memory_space<vmem>>, vector<1x4x128xf32>,
    return
  }
  func.func @transform_0(%arg0: i32) -> (i32, i32, i32) {
    %c0_i32 = arith.constant 0 : i32
    %c0_i32_0 = arith.constant 0 : i32
    %c0_i32_1 = arith.constant 0 : i32
    return %arg0, %c0_i32, %c0_i32_0 : i32, i32, i32
  }
  func.func @transform_1(%arg0: i32) -> (i32, i32) {
    %c0_i32 = arith.constant 0 : i32
    %c0_i32_0 = arith.constant 0 : i32
    %c0_i32_1 = arith.constant 0 : i32
    return %c0_i32, %c0_i32_0 : i32, i32
  }
  func.func @transform_2(%arg0: i32) -> (i32, i32) {
    %c0_i32 = arith.constant 0 : i32
    %c0_i32_0 = arith.constant 0 : i32
    %c0_i32_1 = arith.constant 0 : i32
    return %c0_i32, %c0_i32_0 : i32, i32
  }
  func.func @transform_3(%arg0: i32) -> (i32, i32) {
    %c0_i32 = arith.constant 0 : i32
    %c0_i32_0 = arith.constant 0 : i32
    %c0_i32_1 = arith.constant 0 : i32
    return %c0_i32, %c0_i32_0 : i32, i32
  }
  func.func @transform_4(%arg0: i32) -> (i32, i32) {
    %c0_i32 = arith.constant 0 : i32
    %c0_i32_0 = arith.constant 0 : i32
    %c0_i32_1 = arith.constant 0 : i32
    return %c0_i32, %c0_i32_0 : i32, i32
  }
  func.func @transform_5(%arg0: i32) -> (i32, i32, i32) {
    %c0_i32 = arith.constant 0 : i32
    %c0_i32_0 = arith.constant 0 : i32
    %c0_i32_1 = arith.constant 0 : i32
    return %arg0, %c0_i32, %c0_i32_0 : i32, i32, i32
  }
}

module attributes {stable_mosaic.version = 11 : i64} {
  func.func @_ema_kernel(%arg0: i32, %arg1: memref<8x128xf32, #tpu.memory_space<vmem>>, %arg2: memref<8x128xf32, #tpu.memory_space<vmem>>, %arg3: memref<1xf32, #tpu.memory_space<smem>>, %arg4: memref<8x128xf32, #tpu.memory_space<vmem>>) attributes {dimension_semantics = [#tpu.dimension_semantics<parallel>], iteration_bounds = array<i64: 113>, scalar_prefetch = 0 : i64, scratch_operands = 0 : i64, tpu.core_type = #tpu.core_type<tc>, window_params = [{transform_indices = @transform_0, window_bounds = array<i64: 8, 128>}, {transform_indices = @transform_1, window_bounds = array<i64: 8, 128>}, {transform_indices = @transform_2, window_bounds = array<i64: 1>}, {transform_indices = @transform_3, window_bounds = array<i64: 8, 128>}]} {
    %c0 = arith.constant 0 : index
    %0 = memref.load %arg3[%c0] : memref<1xf32, #tpu.memory_space<smem>>
    %c0_0 = arith.constant 0 : index
    %c0_1 = arith.constant 0 : index
    %1 = vector.load %arg1[%c0_0, %c0_1] : memref<8x128xf32, #tpu.memory_space<vmem>>, vector<8x128xf32>
    %2 = vector.broadcast %0 : f32 to vector<8x128xf32>
    %3 = arith.mulf %1, %2 : vector<8x128xf32>
    %c0_2 = arith.constant 0 : index
    %c0_3 = arith.constant 0 : index
    %4 = vector.load %arg2[%c0_2, %c0_3] : memref<8x128xf32, #tpu.memory_space<vmem>>, vector<8x128xf32>
    %cst = arith.constant 1.000000e+00 : f32
    %5 = arith.subf %cst, %0 : f32
    %6 = vector.broadcast %5 : f32 to vector<8x128xf32>
    %7 = arith.mulf %4, %6 : vector<8x128xf32>
    %8 = arith.addf %3, %7 : vector<8x128xf32>
    %c0_4 = arith.constant 0 : index
    %c0_5 = arith.constant 0 : index
    %9 = vector.load %arg4[%c0_4, %c0_5] : memref<8x128xf32, #tpu.memory_space<vmem>>, vector<8x128xf32>
    tpu.vector_store %arg4[%c0_4, %c0_5], %8 {strides = array<i32>} : memref<8x128xf32, #tpu.memory_space<vmem>>, vector<8x128xf32>,
    return
  }
  func.func @transform_0(%arg0: i32) -> (i32, i32) {
    %c0_i32 = arith.constant 0 : i32
    %c0_i32_0 = arith.constant 0 : i32
    return %arg0, %c0_i32 : i32, i32
  }
  func.func @transform_1(%arg0: i32) -> (i32, i32) {
    %c0_i32 = arith.constant 0 : i32
    %c0_i32_0 = arith.constant 0 : i32
    return %arg0, %c0_i32 : i32, i32
  }
  func.func @transform_2(%arg0: i32) -> i32 {
    %c0_i32 = arith.constant 0 : i32
    %c0_i32_0 = arith.constant 0 : i32
    return %c0_i32 : i32
  }
  func.func @transform_3(%arg0: i32) -> (i32, i32) {
    %c0_i32 = arith.constant 0 : i32
    %c0_i32_0 = arith.constant 0 : i32
    return %arg0, %c0_i32 : i32, i32
  }
}

module attributes {stable_mosaic.version = 11 : i64} {
  func.func @_encoder_kernel(%arg0: i32, %arg1: memref<8x16x256xf32, #tpu.memory_space<vmem>>, %arg2: memref<256x128xf32, #tpu.memory_space<vmem>>, %arg3: memref<128x128xf32, #tpu.memory_space<vmem>>, %arg4: memref<8x16x128xf32, #tpu.memory_space<vmem>>, %arg5: memref<8x1x128xf32, #tpu.memory_space<vmem>>) attributes {dimension_semantics = [#tpu.dimension_semantics<parallel>], iteration_bounds = array<i64: 1>, scalar_prefetch = 0 : i64, scratch_operands = 0 : i64, tpu.core_type = #tpu.core_type<tc>, window_params = [{transform_indices = @transform_0, window_bounds = array<i64: 8, 16, 256>}, {pipeline_mode = #tpu.pipeline_mode<synchronous>, transform_indices = @transform_1, window_bounds = array<i64: 256, 128>}, {pipeline_mode = #tpu.pipeline_mode<synchronous>, transform_indices = @transform_2, window_bounds = array<i64: 128, 128>}, {transform_indices = @transform_3, window_bounds = array<i64: 8, 16, 128>}, {transform_indices = @transform_4, window_bounds = array<i64: 8, 1, 128>}]} {
    %c0 = arith.constant 0 : index
    %c0_0 = arith.constant 0 : index
    %c0_1 = arith.constant 0 : index
    %0 = vector.load %arg1[%c0, %c0_0, %c0_1] : memref<8x16x256xf32, #tpu.memory_space<vmem>>, vector<8x16x256xf32>
    %1 = vector.shape_cast %0 : vector<8x16x256xf32> to vector<128x256xf32>
    %2 = arith.truncf %1 : vector<128x256xf32> to vector<128x256xbf16>
    %c0_2 = arith.constant 0 : index
    %c0_3 = arith.constant 0 : index
    %3 = vector.load %arg2[%c0_2, %c0_3] : memref<256x128xf32, #tpu.memory_space<vmem>>, vector<256x128xf32>
    %4 = arith.truncf %3 : vector<256x128xf32> to vector<256x128xbf16>
    %cst = arith.constant dense<0.000000e+00> : vector<128x128xf32>
    %5 = tpu.matmul %2, %4, %cst {dimension_numbers = #tpu.dot_dimension_numbers<[1], [0], [0], [1], [0, 0, 1, 1], [], []>} : vector<128x256xbf16>, vector<256x128xbf16>, vector<128x128xf32> -> vector<128x128xf32>
    %6 = vector.shape_cast %5 : vector<128x128xf32> to vector<8x16x128xf32>
    %c0_4 = arith.constant 0 : index
    %c0_5 = arith.constant 0 : index
    %c0_6 = arith.constant 0 : index
    %7 = vector.load %arg4[%c0_4, %c0_5, %c0_6] : memref<8x16x128xf32, #tpu.memory_space<vmem>>, vector<8x16x128xf32>
    tpu.vector_store %arg4[%c0_4, %c0_5, %c0_6], %6 {strides = array<i32>} : memref<8x16x128xf32, #tpu.memory_space<vmem>>, vector<8x16x128xf32>,
    %cst_7 = arith.constant dense<0.000000e+00> : vector<8x128xf32>
    %8 = vector.multi_reduction <add>, %6, %cst_7 [1] : vector<8x16x128xf32> to vector<8x128xf32>
    %cst_8 = arith.constant 1.600000e+01 : f32
    %9 = vector.broadcast %cst_8 : f32 to vector<8x128xf32>
    %10 = arith.divf %8, %9 : vector<8x128xf32>
    %11 = arith.truncf %10 : vector<8x128xf32> to vector<8x128xbf16>
    %c0_9 = arith.constant 0 : index
    %c0_10 = arith.constant 0 : index
    %12 = vector.load %arg3[%c0_9, %c0_10] : memref<128x128xf32, #tpu.memory_space<vmem>>, vector<128x128xf32>
    %13 = arith.truncf %12 : vector<128x128xf32> to vector<128x128xbf16>
    %cst_11 = arith.constant dense<0.000000e+00> : vector<8x128xf32>
    %14 = tpu.matmul %11, %13, %cst_11 {dimension_numbers = #tpu.dot_dimension_numbers<[1], [0], [0], [1], [0, 0, 1, 1], [], []>} : vector<8x128xbf16>, vector<128x128xbf16>, vector<8x128xf32> -> vector<8x128xf32>
    %15 = vector.shape_cast %14 : vector<8x128xf32> to vector<8x1x128xf32>
    %c0_12 = arith.constant 0 : index
    %c0_13 = arith.constant 0 : index
    %c0_14 = arith.constant 0 : index
    %16 = vector.load %arg5[%c0_12, %c0_13, %c0_14] : memref<8x1x128xf32, #tpu.memory_space<vmem>>, vector<8x1x128xf32>
    tpu.vector_store %arg5[%c0_12, %c0_13, %c0_14], %15 {strides = array<i32>} : memref<8x1x128xf32, #tpu.memory_space<vmem>>, vector<8x1x128xf32>,
    return
  }
  func.func @transform_0(%arg0: i32) -> (i32, i32, i32) {
    %c0_i32 = arith.constant 0 : i32
    %c0_i32_0 = arith.constant 0 : i32
    %c0_i32_1 = arith.constant 0 : i32
    return %arg0, %c0_i32, %c0_i32_0 : i32, i32, i32
  }
  func.func @transform_1(%arg0: i32) -> (i32, i32) {
    %c0_i32 = arith.constant 0 : i32
    %c0_i32_0 = arith.constant 0 : i32
    %c0_i32_1 = arith.constant 0 : i32
    return %c0_i32, %c0_i32_0 : i32, i32
  }
  func.func @transform_2(%arg0: i32) -> (i32, i32) {
    %c0_i32 = arith.constant 0 : i32
    %c0_i32_0 = arith.constant 0 : i32
    %c0_i32_1 = arith.constant 0 : i32
    return %c0_i32, %c0_i32_0 : i32, i32
  }
  func.func @transform_3(%arg0: i32) -> (i32, i32, i32) {
    %c0_i32 = arith.constant 0 : i32
    %c0_i32_0 = arith.constant 0 : i32
    %c0_i32_1 = arith.constant 0 : i32
    return %arg0, %c0_i32, %c0_i32_0 : i32, i32, i32
  }
  func.func @transform_4(%arg0: i32) -> (i32, i32, i32) {
    %c0_i32 = arith.constant 0 : i32
    %c0_i32_0 = arith.constant 0 : i32
    %c0_i32_1 = arith.constant 0 : i32
    return %arg0, %c0_i32, %c0_i32_0 : i32, i32, i32
  }
}

module attributes {stable_mosaic.version = 11 : i64} {
  func.func @_decoder_kernel(%arg0: i32, %arg1: i32, %arg2: memref<1x4x16x128xf32, #tpu.memory_space<vmem>>, %arg3: memref<1x4x16x256xf32, #tpu.memory_space<vmem>>, %arg4: memref<1x128xf32, #tpu.memory_space<vmem>>, %arg5: memref<128x128xf32, #tpu.memory_space<vmem>>, %arg6: memref<128x256xf32, #tpu.memory_space<vmem>>, %arg7: memref<128x128xf32, #tpu.memory_space<vmem>>, %arg8: memref<1x4x1x128xf32, #tpu.memory_space<vmem>>, %arg9: memref<1x1x1xf32, #tpu.memory_space<vmem>>, %arg10: memref<1x1x1xf32, #tpu.memory_space<vmem>>) attributes {dimension_semantics = [#tpu.dimension_semantics<parallel>, #tpu.dimension_semantics<arbitrary>], iteration_bounds = array<i64: 2, 1>, scalar_prefetch = 0 : i64, scratch_operands = 0 : i64, tpu.core_type = #tpu.core_type<tc>, window_params = [{transform_indices = @transform_0, window_bounds = array<i64: 1, 4, 16, 128>}, {transform_indices = @transform_1, window_bounds = array<i64: 1, 4, 16, 256>}, {pipeline_mode = #tpu.pipeline_mode<synchronous>, transform_indices = @transform_2, window_bounds = array<i64: 1, 128>}, {pipeline_mode = #tpu.pipeline_mode<synchronous>, transform_indices = @transform_3, window_bounds = array<i64: 128, 128>}, {pipeline_mode = #tpu.pipeline_mode<synchronous>, transform_indices = @transform_4, window_bounds = array<i64: 128, 256>}, {pipeline_mode = #tpu.pipeline_mode<synchronous>, transform_indices = @transform_5, window_bounds = array<i64: 128, 128>}, {transform_indices = @transform_6, window_bounds = array<i64: 1, 4, 1, 128>}, {transform_indices = @transform_7, window_bounds = array<i64: 1, 1, 1>}, {transform_indices = @transform_8, window_bounds = array<i64: 1, 1, 1>}]} {
    %c0_i32 = arith.constant 0 : i32
    %0 = arith.cmpi eq, %arg1, %c0_i32 : i32
    %1 = arith.extui %0 : i1 to i32
    %c0_i32_0 = arith.constant 0 : i32
    %2 = arith.cmpi ne, %1, %c0_i32_0 : i32
    scf.if %2 {
      %cst_41 = arith.constant 0.000000e+00 : f32
      %58 = vector.broadcast %cst_41 : f32 to vector<1x1x1xf32>
      %c0_42 = arith.constant 0 : index
      %c0_43 = arith.constant 0 : index
      %c0_44 = arith.constant 0 : index
      %59 = vector.load %arg9[%c0_42, %c0_43, %c0_44] : memref<1x1x1xf32, #tpu.memory_space<vmem>>, vector<1x1x1xf32>
      tpu.vector_store %arg9[%c0_42, %c0_43, %c0_44], %58 {strides = array<i32>} : memref<1x1x1xf32, #tpu.memory_space<vmem>>, vector<1x1x1xf32>,
      %cst_45 = arith.constant 0.000000e+00 : f32
      %60 = vector.broadcast %cst_45 : f32 to vector<1x1x1xf32>
      %c0_46 = arith.constant 0 : index
      %c0_47 = arith.constant 0 : index
      %c0_48 = arith.constant 0 : index
      %61 = vector.load %arg10[%c0_46, %c0_47, %c0_48] : memref<1x1x1xf32, #tpu.memory_space<vmem>>, vector<1x1x1xf32>
      tpu.vector_store %arg10[%c0_46, %c0_47, %c0_48], %60 {strides = array<i32>} : memref<1x1x1xf32, #tpu.memory_space<vmem>>, vector<1x1x1xf32>,
    } else {
    }
    %c0 = arith.constant 0 : index
    %c0_1 = arith.constant 0 : index
    %c0_2 = arith.constant 0 : index
    %c0_3 = arith.constant 0 : index
    %3 = vector.load %arg2[%c0, %c0_1, %c0_2, %c0_3] : memref<1x4x16x128xf32, #tpu.memory_space<vmem>>, vector<1x4x16x128xf32>
    %4 = vector.shape_cast %3 : vector<1x4x16x128xf32> to vector<4x16x128xf32>
    %cst = arith.constant 1.000000e+00 : f32
    %5 = vector.broadcast %cst : f32 to vector<16x1xf32>
    %6 = vector.shape_cast %4 : vector<4x16x128xf32> to vector<64x128xf32>
    %7 = arith.truncf %6 : vector<64x128xf32> to vector<64x128xbf16>
    %c0_4 = arith.constant 0 : index
    %c0_5 = arith.constant 0 : index
    %8 = vector.load %arg5[%c0_4, %c0_5] : memref<128x128xf32, #tpu.memory_space<vmem>>, vector<128x128xf32>
    %9 = arith.truncf %8 : vector<128x128xf32> to vector<128x128xbf16>
    %cst_6 = arith.constant dense<0.000000e+00> : vector<64x128xf32>
    %10 = tpu.matmul %7, %9, %cst_6 {dimension_numbers = #tpu.dot_dimension_numbers<[1], [0], [0], [1], [0, 0, 1, 1], [], []>} : vector<64x128xbf16>, vector<128x128xbf16>, vector<64x128xf32> -> vector<64x128xf32>
    %cst_7 = arith.constant 0.000000e+00 : f32
    %11 = vector.broadcast %cst_7 : f32 to vector<64x128xf32>
    %12 = arith.maximumf %10, %11 : vector<64x128xf32>
    %13 = arith.truncf %12 : vector<64x128xf32> to vector<64x128xbf16>
    %c0_8 = arith.constant 0 : index
    %c0_9 = arith.constant 0 : index
    %14 = vector.load %arg6[%c0_8, %c0_9] : memref<128x256xf32, #tpu.memory_space<vmem>>, vector<128x256xf32>
    %15 = arith.truncf %14 : vector<128x256xf32> to vector<128x256xbf16>
    %cst_10 = arith.constant dense<0.000000e+00> : vector<64x256xf32>
    %16 = tpu.matmul %13, %15, %cst_10 {dimension_numbers = #tpu.dot_dimension_numbers<[1], [0], [0], [1], [0, 0, 1, 1], [], []>} : vector<64x128xbf16>, vector<128x256xbf16>, vector<64x256xf32> -> vector<64x256xf32>
    %17 = vector.shape_cast %16 : vector<64x256xf32> to vector<4x16x256xf32>
    %c0_11 = arith.constant 0 : index
    %c0_12 = arith.constant 0 : index
    %c0_13 = arith.constant 0 : index
    %c0_14 = arith.constant 0 : index
    %18 = vector.load %arg3[%c0_11, %c0_12, %c0_13, %c0_14] : memref<1x4x16x256xf32, #tpu.memory_space<vmem>>, vector<1x4x16x256xf32>
    %19 = vector.shape_cast %18 : vector<1x4x16x256xf32> to vector<4x16x256xf32>
    %20 = arith.subf %17, %19 : vector<4x16x256xf32>
    %21 = arith.mulf %20, %20 : vector<4x16x256xf32>
    %cst_15 = arith.constant dense<0.000000e+00> : vector<4x16xf32>
    %22 = vector.multi_reduction <add>, %21, %cst_15 [2] : vector<4x16x256xf32> to vector<4x16xf32>
    %23 = vector.shape_cast %22 : vector<4x16xf32> to vector<4x16x1xf32>
    %cst_16 = arith.constant 2.560000e+02 : f32
    %24 = vector.broadcast %cst_16 : f32 to vector<4x16x1xf32>
    %25 = arith.divf %23, %24 : vector<4x16x1xf32>
    %c0_17 = arith.constant 0 : index
    %c0_18 = arith.constant 0 : index
    %c0_19 = arith.constant 0 : index
    %26 = vector.load %arg9[%c0_17, %c0_18, %c0_19] : memref<1x1x1xf32, #tpu.memory_space<vmem>>, vector<1x1x1xf32>
    %27 = vector.shape_cast %5 : vector<16x1xf32> to vector<1x16x1xf32>
    %28 = vector.broadcast %27 : vector<1x16x1xf32> to vector<4x16x1xf32>
    %29 = arith.mulf %25, %28 : vector<4x16x1xf32>
    %30 = vector.shape_cast %29 : vector<4x16x1xf32> to vector<1x4x16x1xf32>
    %cst_20 = arith.constant dense<0.000000e+00> : vector<1xf32>
    %31 = vector.multi_reduction <add>, %30, %cst_20 [1, 2, 3] : vector<1x4x16x1xf32> to vector<1xf32>
    %32 = vector.shape_cast %31 : vector<1xf32> to vector<1x1x1x1xf32>
    %33 = vector.extract %32[0, 0, 0, 0] : f32 from vector<1x1x1x1xf32>
    %34 = vector.broadcast %33 : f32 to vector<1x1x1xf32>
    %35 = arith.addf %26, %34 : vector<1x1x1xf32>
    %c0_21 = arith.constant 0 : index
    %c0_22 = arith.constant 0 : index
    %c0_23 = arith.constant 0 : index
    %36 = vector.load %arg9[%c0_21, %c0_22, %c0_23] : memref<1x1x1xf32, #tpu.memory_space<vmem>>, vector<1x1x1xf32>
    tpu.vector_store %arg9[%c0_21, %c0_22, %c0_23], %35 {strides = array<i32>} : memref<1x1x1xf32, #tpu.memory_space<vmem>>, vector<1x1x1xf32>,
    %c0_24 = arith.constant 0 : index
    %c0_25 = arith.constant 0 : index
    %c0_26 = arith.constant 0 : index
    %37 = vector.load %arg10[%c0_24, %c0_25, %c0_26] : memref<1x1x1xf32, #tpu.memory_space<vmem>>, vector<1x1x1xf32>
    %38 = vector.shape_cast %5 : vector<16x1xf32> to vector<1x16x1xf32>
    %cst_27 = arith.constant dense<0.000000e+00> : vector<1xf32>
    %39 = vector.multi_reduction <add>, %38, %cst_27 [1, 2] : vector<1x16x1xf32> to vector<1xf32>
    %40 = vector.shape_cast %39 : vector<1xf32> to vector<1x1x1xf32>
    %41 = vector.extract %40[0, 0, 0] : f32 from vector<1x1x1xf32>
    %cst_28 = arith.constant 4.000000e+00 : f32
    %42 = arith.mulf %41, %cst_28 : f32
    %43 = vector.broadcast %42 : f32 to vector<1x1x1xf32>
    %44 = arith.addf %37, %43 : vector<1x1x1xf32>
    %c0_29 = arith.constant 0 : index
    %c0_30 = arith.constant 0 : index
    %c0_31 = arith.constant 0 : index
    %45 = vector.load %arg10[%c0_29, %c0_30, %c0_31] : memref<1x1x1xf32, #tpu.memory_space<vmem>>, vector<1x1x1xf32>
    tpu.vector_store %arg10[%c0_29, %c0_30, %c0_31], %44 {strides = array<i32>} : memref<1x1x1xf32, #tpu.memory_space<vmem>>, vector<1x1x1xf32>,
    %46 = vector.shape_cast %12 : vector<64x128xf32> to vector<4x16x128xf32>
    %cst_32 = arith.constant dense<0.000000e+00> : vector<4x128xf32>
    %47 = vector.multi_reduction <add>, %46, %cst_32 [1] : vector<4x16x128xf32> to vector<4x128xf32>
    %cst_33 = arith.constant 1.600000e+01 : f32
    %48 = vector.broadcast %cst_33 : f32 to vector<4x128xf32>
    %49 = arith.divf %47, %48 : vector<4x128xf32>
    %50 = arith.truncf %49 : vector<4x128xf32> to vector<4x128xbf16>
    %c0_34 = arith.constant 0 : index
    %c0_35 = arith.constant 0 : index
    %51 = vector.load %arg7[%c0_34, %c0_35] : memref<128x128xf32, #tpu.memory_space<vmem>>, vector<128x128xf32>
    %52 = arith.truncf %51 : vector<128x128xf32> to vector<128x128xbf16>
    %cst_36 = arith.constant dense<0.000000e+00> : vector<4x128xf32>
    %53 = tpu.matmul %50, %52, %cst_36 {dimension_numbers = #tpu.dot_dimension_numbers<[1], [0], [0], [1], [0, 0, 1, 1], [], []>} : vector<4x128xbf16>, vector<128x128xbf16>, vector<4x128xf32> -> vector<4x128xf32>
    %54 = vector.shape_cast %53 : vector<4x128xf32> to vector<4x1x128xf32>
    %c0_37 = arith.constant 0 : index
    %c0_38 = arith.constant 0 : index
    %c0_39 = arith.constant 0 : index
    %c0_40 = arith.constant 0 : index
    %55 = vector.load %arg8[%c0_37, %c0_38, %c0_39, %c0_40] : memref<1x4x1x128xf32, #tpu.memory_space<vmem>>, vector<1x4x1x128xf32>
    %56 = vector.shape_cast %55 : vector<1x4x1x128xf32> to vector<4x1x128xf32>
    %57 = vector.shape_cast %54 : vector<4x1x128xf32> to vector<1x4x1x128xf32>
    tpu.vector_store %arg8[%c0_37, %c0_38, %c0_39, %c0_40], %57 {strides = array<i32>} : memref<1x4x1x128xf32, #tpu.memory_space<vmem>>, vector<1x4x1x128xf32>,
    return
  }
  func.func @transform_0(%arg0: i32, %arg1: i32) -> (i32, i32, i32, i32) {
    %c0_i32 = arith.constant 0 : i32
    %c0_i32_0 = arith.constant 0 : i32
    %c0_i32_1 = arith.constant 0 : i32
    return %arg0, %arg1, %c0_i32, %c0_i32_0 : i32, i32, i32, i32
  }
  func.func @transform_1(%arg0: i32, %arg1: i32) -> (i32, i32, i32, i32) {
    %c0_i32 = arith.constant 0 : i32
    %c0_i32_0 = arith.constant 0 : i32
    %c0_i32_1 = arith.constant 0 : i32
    return %arg0, %arg1, %c0_i32, %c0_i32_0 : i32, i32, i32, i32
  }
  func.func @transform_2(%arg0: i32, %arg1: i32) -> (i32, i32) {
    %c0_i32 = arith.constant 0 : i32
    %c0_i32_0 = arith.constant 0 : i32
    %c0_i32_1 = arith.constant 0 : i32
    return %c0_i32, %c0_i32_0 : i32, i32
  }
  func.func @transform_3(%arg0: i32, %arg1: i32) -> (i32, i32) {
    %c0_i32 = arith.constant 0 : i32
    %c0_i32_0 = arith.constant 0 : i32
    %c0_i32_1 = arith.constant 0 : i32
    return %c0_i32, %c0_i32_0 : i32, i32
  }
  func.func @transform_4(%arg0: i32, %arg1: i32) -> (i32, i32) {
    %c0_i32 = arith.constant 0 : i32
    %c0_i32_0 = arith.constant 0 : i32
    %c0_i32_1 = arith.constant 0 : i32
    return %c0_i32, %c0_i32_0 : i32, i32
  }
  func.func @transform_5(%arg0: i32, %arg1: i32) -> (i32, i32) {
    %c0_i32 = arith.constant 0 : i32
    %c0_i32_0 = arith.constant 0 : i32
    %c0_i32_1 = arith.constant 0 : i32
    return %c0_i32, %c0_i32_0 : i32, i32
  }
  func.func @transform_6(%arg0: i32, %arg1: i32) -> (i32, i32, i32, i32) {
    %c0_i32 = arith.constant 0 : i32
    %c0_i32_0 = arith.constant 0 : i32
    %c0_i32_1 = arith.constant 0 : i32
    return %arg0, %arg1, %c0_i32, %c0_i32_0 : i32, i32, i32, i32
  }
  func.func @transform_7(%arg0: i32, %arg1: i32) -> (i32, i32, i32) {
    %c0_i32 = arith.constant 0 : i32
    %c0_i32_0 = arith.constant 0 : i32
    %c0_i32_1 = arith.constant 0 : i32
    return %arg0, %c0_i32, %c0_i32_0 : i32, i32, i32
  }
  func.func @transform_8(%arg0: i32, %arg1: i32) -> (i32, i32, i32) {
    %c0_i32 = arith.constant 0 : i32
    %c0_i32_0 = arith.constant 0 : i32
    %c0_i32_1 = arith.constant 0 : i32
    return %arg0, %c0_i32, %c0_i32_0 : i32, i32, i32
  }
}

module attributes {stable_mosaic.version = 11 : i64} {
  func.func @_contrastive_kernel(%arg0: i32, %arg1: memref<1x4x128xf32, #tpu.memory_space<vmem>>, %arg2: memref<1x4x128xf32, #tpu.memory_space<vmem>>, %arg3: memref<1x1x1xf32, #tpu.memory_space<vmem>>) attributes {dimension_semantics = [#tpu.dimension_semantics<parallel>], iteration_bounds = array<i64: 4>, scalar_prefetch = 0 : i64, scratch_operands = 0 : i64, tpu.core_type = #tpu.core_type<tc>, window_params = [{transform_indices = @transform_0, window_bounds = array<i64: 1, 4, 128>}, {transform_indices = @transform_1, window_bounds = array<i64: 1, 4, 128>}, {transform_indices = @transform_2, window_bounds = array<i64: 1, 1, 1>}]} {
    %c0 = arith.constant 0 : index
    %c0_0 = arith.constant 0 : index
    %c0_1 = arith.constant 0 : index
    %0 = vector.load %arg1[%c0, %c0_0, %c0_1] : memref<1x4x128xf32, #tpu.memory_space<vmem>>, vector<1x4x128xf32>
    %1 = vector.shape_cast %0 : vector<1x4x128xf32> to vector<4x128xf32>
    %c0_2 = arith.constant 0 : index
    %c0_3 = arith.constant 0 : index
    %c0_4 = arith.constant 0 : index
    %2 = vector.load %arg2[%c0_2, %c0_3, %c0_4] : memref<1x4x128xf32, #tpu.memory_space<vmem>>, vector<1x4x128xf32>
    %3 = vector.shape_cast %2 : vector<1x4x128xf32> to vector<4x128xf32>
    %4 = arith.mulf %1, %1 : vector<4x128xf32>
    %cst = arith.constant dense<0.000000e+00> : vector<4xf32>
    %5 = vector.multi_reduction <add>, %4, %cst [1] : vector<4x128xf32> to vector<4xf32>
    %6 = vector.shape_cast %5 : vector<4xf32> to vector<4x1xf32>
    %cst_5 = arith.constant 1.000000e-24 : f32
    %7 = vector.broadcast %cst_5 : f32 to vector<4x1xf32>
    %8 = arith.maximumf %6, %7 : vector<4x1xf32>
    %9 = math.rsqrt %8 : vector<4x1xf32>
    %10 = vector.broadcast %9 : vector<4x1xf32> to vector<4x128xf32>
    %11 = arith.mulf %1, %10 : vector<4x128xf32>
    %12 = arith.mulf %3, %3 : vector<4x128xf32>
    %cst_6 = arith.constant dense<0.000000e+00> : vector<4xf32>
    %13 = vector.multi_reduction <add>, %12, %cst_6 [1] : vector<4x128xf32> to vector<4xf32>
    %14 = vector.shape_cast %13 : vector<4xf32> to vector<4x1xf32>
    %cst_7 = arith.constant 1.000000e-24 : f32
    %15 = vector.broadcast %cst_7 : f32 to vector<4x1xf32>
    %16 = arith.maximumf %14, %15 : vector<4x1xf32>
    %17 = math.rsqrt %16 : vector<4x1xf32>
    %18 = vector.broadcast %17 : vector<4x1xf32> to vector<4x128xf32>
    %19 = arith.mulf %3, %18 : vector<4x128xf32>
    %cst_8 = arith.constant dense<0.000000e+00> : vector<4x4xf32>
    %20 = tpu.matmul %11, %19, %cst_8 {dimension_numbers = #tpu.dot_dimension_numbers<[1], [1], [0], [0], [0, 0, 1, 0], [], []>} : vector<4x128xf32>, vector<4x128xf32>, vector<4x4xf32> -> vector<4x4xf32>
    %cst_9 = arith.constant 1.000000e+00 : f32
    %21 = vector.broadcast %cst_9 : f32 to vector<4x4xf32>
    %22 = arith.divf %20, %21 : vector<4x4xf32>
    %23 = arith.mulf %11, %19 : vector<4x128xf32>
    %cst_10 = arith.constant dense<0.000000e+00> : vector<4xf32>
    %24 = vector.multi_reduction <add>, %23, %cst_10 [1] : vector<4x128xf32> to vector<4xf32>
    %25 = vector.shape_cast %24 : vector<4xf32> to vector<4x1xf32>
    %cst_11 = arith.constant 1.000000e+00 : f32
    %26 = vector.broadcast %cst_11 : f32 to vector<4x1xf32>
    %27 = arith.divf %25, %26 : vector<4x1xf32>
    %cst_12 = arith.constant dense<0xFF800000> : vector<4xf32>
    %28 = vector.multi_reduction <maximumf>, %22, %cst_12 [1] : vector<4x4xf32> to vector<4xf32>
    %29 = vector.shape_cast %28 : vector<4xf32> to vector<4x1xf32>
    %30 = vector.broadcast %29 : vector<4x1xf32> to vector<4x4xf32>
    %31 = arith.subf %22, %30 : vector<4x4xf32>
    %32 = math.exp %31 : vector<4x4xf32>
    %cst_13 = arith.constant dense<0.000000e+00> : vector<4xf32>
    %33 = vector.multi_reduction <add>, %32, %cst_13 [1] : vector<4x4xf32> to vector<4xf32>
    %34 = vector.shape_cast %33 : vector<4xf32> to vector<4x1xf32>
    %35 = math.log %34 : vector<4x1xf32>
    %36 = arith.addf %35, %29 : vector<4x1xf32>
    %37 = arith.subf %36, %27 : vector<4x1xf32>
    %cst_14 = arith.constant dense<0.000000e+00> : vector<1xf32>
    %38 = vector.multi_reduction <add>, %37, %cst_14 [0] : vector<4x1xf32> to vector<1xf32>
    %39 = vector.shape_cast %38 : vector<1xf32> to vector<1x1xf32>
    %cst_15 = arith.constant 4.000000e+00 : f32
    %40 = vector.broadcast %cst_15 : f32 to vector<1x1xf32>
    %41 = arith.divf %39, %40 : vector<1x1xf32>
    %cst_16 = arith.constant 2.000000e+00 : f32
    %42 = vector.broadcast %cst_16 : f32 to vector<1x1xf32>
    %43 = arith.mulf %41, %42 : vector<1x1xf32>
    %c0_17 = arith.constant 0 : index
    %c0_18 = arith.constant 0 : index
    %c0_19 = arith.constant 0 : index
    %44 = vector.load %arg3[%c0_17, %c0_18, %c0_19] : memref<1x1x1xf32, #tpu.memory_space<vmem>>, vector<1x1x1xf32>
    %45 = vector.shape_cast %44 : vector<1x1x1xf32> to vector<1x1xf32>
    %46 = vector.shape_cast %43 : vector<1x1xf32> to vector<1x1x1xf32>
    tpu.vector_store %arg3[%c0_17, %c0_18, %c0_19], %46 {strides = array<i32>} : memref<1x1x1xf32, #tpu.memory_space<vmem>>, vector<1x1x1xf32>,
    return
  }
  func.func @transform_0(%arg0: i32) -> (i32, i32, i32) {
    %c0_i32 = arith.constant 0 : i32
    %c0_i32_0 = arith.constant 0 : i32
    %c0_i32_1 = arith.constant 0 : i32
    return %arg0, %c0_i32, %c0_i32_0 : i32, i32, i32
  }
  func.func @transform_1(%arg0: i32) -> (i32, i32, i32) {
    %c0_i32 = arith.constant 0 : i32
    %c0_i32_0 = arith.constant 0 : i32
    %c0_i32_1 = arith.constant 0 : i32
    return %arg0, %c0_i32, %c0_i32_0 : i32, i32, i32
  }
  func.func @transform_2(%arg0: i32) -> (i32, i32, i32) {
    %c0_i32 = arith.constant 0 : i32
    %c0_i32_0 = arith.constant 0 : i32
    %c0_i32_1 = arith.constant 0 : i32
    return %arg0, %c0_i32, %c0_i32_0 : i32, i32, i32
  }
}

</mosaic_0001>

<llo_original>
// kernel: moco_forward.7
$region0: #{moco_forward.7}
  #allocation0 [shape = 'u32[]', space=smem, size = 0x4, offset = 0x4, fixed_abs, tag = 'smem constant byte address 0x4 - core index']
  #allocation1 [shape = 'u32[144,128]{1,0:T(1,128)}', space=vmem, size = 0x12000, scoped, tag = 'internal scratch']
  %s0 = inlined_call_operand.vmem [shape: f32[8,16,256], index: 0, kind: input, shape index: {}]
  %s1 = inlined_call_operand.vmem [shape: f32[256,128], index: 1, kind: input, shape index: {}]
  %s2 = inlined_call_operand.vmem [shape: f32[128,128], index: 2, kind: input, shape index: {}]
  %s3 = inlined_call_operand.vmem [shape: f32[8,16,128], index: 3, kind: output, shape index: {0}]
  %s4 = inlined_call_operand.vmem [shape: f32[8,1,128], index: 4, kind: output, shape index: {1}]
  %5 = xla_tuple %s3, %s4
  %s6 = sld [smem:[#allocation0]]
  $region30: #{moco_forward.7} parent=0
    _
  %s8 = ssub.s32 1, %s6
  %s9 = scalar_select 0, %s8, %s6
  // Predicated region
  $region2: #{moco_forward.7} parent=0 // pred_check
    _
  $region3: #{moco_forward.7} parent=0 // pred_check_branch
    %11 = sbr.rel (0) target = $region5
  $region4: #{moco_forward.7} parent=0 // pred_region
    _
  $region5: #{moco_forward.7} parent=0 // pred_fallthru
    _
  // Predicated region
  $region6: #{moco_forward.7} parent=0 // pred_check
    _
  $region7: #{moco_forward.7} parent=0 // pred_check_branch
    %13 = sbr.rel (0) target = $region9
  $region8: #{moco_forward.7} parent=0 // pred_region
    _
  $region9: #{moco_forward.7} parent=0 // pred_fallthru
    _
  // Predicated region
  $region10: #{moco_forward.7} parent=0 // pred_check
    _
  $region11: #{moco_forward.7} parent=0 // pred_check_branch
    %15 = sbr.rel (0) target = $region13
  $region12: #{moco_forward.7} parent=0 // pred_region
    _
  $region13: #{moco_forward.7} parent=0 // pred_fallthru
    _
  %v17 = vld [vmem:[%s0] sm:$0xff]
  %v18 = vld [vmem:[%s0 + $0x8] sm:$0xff]
  %v19 = vld [vmem:[%s0 + $0x10] sm:$0xff]
  %v20 = vld [vmem:[%s0 + $0x18] sm:$0xff]
  %v21 = vld [vmem:[%s0 + $0x20] sm:$0xff]
  %v22 = vld [vmem:[%s0 + $0x28] sm:$0xff]
  %v23 = vld [vmem:[%s0 + $0x30] sm:$0xff]
  %v24 = vld [vmem:[%s0 + $0x38] sm:$0xff]
  %v25 = vld [vmem:[%s0 + $0x40] sm:$0xff]
  %v26 = vld [vmem:[%s0 + $0x48] sm:$0xff]
  %v27 = vld [vmem:[%s0 + $0x50] sm:$0xff]
  %v28 = vld [vmem:[%s0 + $0x58] sm:$0xff]
  %v29 = vld [vmem:[%s0 + $0x60] sm:$0xff]
  %v30 = vld [vmem:[%s0 + $0x68] sm:$0xff]
  %v31 = vld [vmem:[%s0 + $0x70] sm:$0xff]
  %v32 = vld [vmem:[%s0 + $0x78] sm:$0xff]
  %v33 = vld [vmem:[%s0 + $0x80] sm:$0xff]
  %v34 = vld [vmem:[%s0 + $0x88] sm:$0xff]
  %v35 = vld [vmem:[%s0 + $0x90] sm:$0xff]
  %v36 = vld [vmem:[%s0 + $0x98] sm:$0xff]
  %v37 = vld [vmem:[%s0 + $0xa0] sm:$0xff]
  %v38 = vld [vmem:[%s0 + $0xa8] sm:$0xff]
  %v39 = vld [vmem:[%s0 + $0xb0] sm:$0xff]
  %v40 = vld [vmem:[%s0 + $0xb8] sm:$0xff]
  %v41 = vld [vmem:[%s0 + $0xc0] sm:$0xff]
  %v42 = vld [vmem:[%s0 + $0xc8] sm:$0xff]
  %v43 = vld [vmem:[%s0 + $0xd0] sm:$0xff]
  %v44 = vld [vmem:[%s0 + $0xd8] sm:$0xff]
  %v45 = vld [vmem:[%s0 + $0xe0] sm:$0xff]
  %v46 = vld [vmem:[%s0 + $0xe8] sm:$0xff]
  %v47 = vld [vmem:[%s0 + $0xf0] sm:$0xff]
  %v48 = vld [vmem:[%s0 + $0xf8] sm:$0xff]
  %v49 = vpack.c.bf16 %v19, %v17
  %v50 = vpack.c.bf16 %v20, %v18
  %v51 = vpack.c.bf16 %v23, %v21
  %v52 = vpack.c.bf16 %v24, %v22
  %v53 = vpack.c.bf16 %v27, %v25
  %v54 = vpack.c.bf16 %v28, %v26
  %v55 = vpack.c.bf16 %v31, %v29
  %v56 = vpack.c.bf16 %v32, %v30
  %v57 = vpack.c.bf16 %v35, %v33
  %v58 = vpack.c.bf16 %v36, %v34
  %v59 = vpack.c.bf16 %v39, %v37
  %v60 = vpack.c.bf16 %v40, %v38
  %v61 = vpack.c.bf16 %v43, %v41
  %v62 = vpack.c.bf16 %v44, %v42
  %v63 = vpack.c.bf16 %v47, %v45
  %v64 = vpack.c.bf16 %v48, %v46
  %v65 = vld [vmem:[%s1] sm:$0xff]
  %v66 = vld [vmem:[%s1 + $0x8] sm:$0xff]
  %v67 = vld [vmem:[%s1 + $0x10] sm:$0xff]
  %v68 = vld [vmem:[%s1 + $0x18] sm:$0xff]
  %v69 = vld [vmem:[%s1 + $0x20] sm:$0xff]
  %v70 = vld [vmem:[%s1 + $0x28] sm:$0xff]
  %v71 = vld [vmem:[%s1 + $0x30] sm:$0xff]
  %v72 = vld [vmem:[%s1 + $0x38] sm:$0xff]
  %v73 = vld [vmem:[%s1 + $0x40] sm:$0xff]
  %v74 = vld [vmem:[%s1 + $0x48] sm:$0xff]
  %v75 = vld [vmem:[%s1 + $0x50] sm:$0xff]
  %v76 = vld [vmem:[%s1 + $0x58] sm:$0xff]
  %v77 = vld [vmem:[%s1 + $0x60] sm:$0xff]
  %v78 = vld [vmem:[%s1 + $0x68] sm:$0xff]
  %v79 = vld [vmem:[%s1 + $0x70] sm:$0xff]
  %v80 = vld [vmem:[%s1 + $0x78] sm:$0xff]
  %v81 = vld [vmem:[%s1 + $0x80] sm:$0xff]
  %v82 = vld [vmem:[%s1 + $0x88] sm:$0xff]
  %v83 = vld [vmem:[%s1 + $0x90] sm:$0xff]
  %v84 = vld [vmem:[%s1 + $0x98] sm:$0xff]
  %v85 = vld [vmem:[%s1 + $0xa0] sm:$0xff]
  %v86 = vld [vmem:[%s1 + $0xa8] sm:$0xff]
  %v87 = vld [vmem:[%s1 + $0xb0] sm:$0xff]
  %v88 = vld [vmem:[%s1 + $0xb8] sm:$0xff]
  %v89 = vld [vmem:[%s1 + $0xc0] sm:$0xff]
  %v90 = vld [vmem:[%s1 + $0xc8] sm:$0xff]
  %v91 = vld [vmem:[%s1 + $0xd0] sm:$0xff]
  %v92 = vld [vmem:[%s1 + $0xd8] sm:$0xff]
  %v93 = vld [vmem:[%s1 + $0xe0] sm:$0xff]
  %v94 = vld [vmem:[%s1 + $0xe8] sm:$0xff]
  %v95 = vld [vmem:[%s1 + $0xf0] sm:$0xff]
  %v96 = vld [vmem:[%s1 + $0xf8] sm:$0xff]
  %v97 = vpack.c.bf16 %v66, %v65
  %v98 = vpack.c.bf16 %v68, %v67
  %v99 = vpack.c.bf16 %v70, %v69
  %v100 = vpack.c.bf16 %v72, %v71
  %v101 = vpack.c.bf16 %v74, %v73
  %v102 = vpack.c.bf16 %v76, %v75
  %v103 = vpack.c.bf16 %v78, %v77
  %v104 = vpack.c.bf16 %v80, %v79
  %v105 = vpack.c.bf16 %v82, %v81
  %v106 = vpack.c.bf16 %v84, %v83
  %v107 = vpack.c.bf16 %v86, %v85
  %v108 = vpack.c.bf16 %v88, %v87
  %v109 = vpack.c.bf16 %v90, %v89
  %v110 = vpack.c.bf16 %v92, %v91
  %v111 = vpack.c.bf16 %v94, %v93
  %v112 = vpack.c.bf16 %v96, %v95
  %113 = vmatprep.subr.bf16.mxu0 0
  %114 = vmatpush1.bf16.msra.mxu0 %v97
  %115 = vmatprep.subr.bf16.mxu0 0
  %116 = vmatpush1.bf16.msra.mxu0 %v98
  %117 = vmatprep.subr.bf16.mxu0 0
  %118 = vmatpush1.bf16.msra.mxu0 %v99
  %119 = vmatprep.subr.bf16.mxu0 0
  %120 = vmatpush1.bf16.msra.mxu0 %v100
  %121 = vmatprep.subr.bf16.mxu0 0
  %122 = vmatpush1.bf16.msra.mxu0 %v101
  %123 = vmatprep.subr.bf16.mxu0 0
  %124 = vmatpush1.bf16.msra.mxu0 %v102
  %125 = vmatprep.subr.bf16.mxu0 0
  %126 = vmatpush1.bf16.msra.mxu0 %v103
  %127 = vmatprep.subr.bf16.mxu0 0
  %128 = vmatpush1.bf16.msra.mxu0 %v104
  %129 = vmatprep.subr.bf16.mxu0 0
  %130 = vmatpush1.bf16.msra.mxu0 %v105
  %131 = vmatprep.subr.bf16.mxu0 0
  %132 = vmatpush1.bf16.msra.mxu0 %v106
  %133 = vmatprep.subr.bf16.mxu0 0
  %134 = vmatpush1.bf16.msra.mxu0 %v107
  %135 = vmatprep.subr.bf16.mxu0 0
  %136 = vmatpush1.bf16.msra.mxu0 %v108
  %137 = vmatprep.subr.bf16.mxu0 0
  %138 = vmatpush1.bf16.msra.mxu0 %v109
  %139 = vmatprep.subr.bf16.mxu0 0
  %140 = vmatpush1.bf16.msra.mxu0 %v110
  %141 = vmatprep.subr.bf16.mxu0 0
  %142 = vmatpush1.bf16.msra.mxu0 %v111
  %143 = vmatprep.subr.bf16.mxu0 0
  %144 = vmatpush1.bf16.msra.mxu0 %v112
  %145 = vmatprep.mubr.bf16.mxu0 %v50
  %146 = vmatmul.mubr.bf16.gmra.mrb[0].mxu0 %v49
  %v147 = vpop.f32.mrb[0].mxu0
  %v148 = vadd.f32 0.0, %v147
  %v149 = vpop.f32.mrb[0].mxu0
  %v150 = vpop.f32.mrb[0].mxu0
  %v151 = vadd.f32 0.0, %v150
  %v152 = vpop.f32.mrb[0].mxu0
  %153 = vmatprep.mubr.bf16.mxu0 %v52
  %154 = vmatmul.mubr.bf16.gmra.mrb[0].mxu0 %v51
  %v155 = vpop.f32.mrb[0].mxu0
  %v156 = vadd.f32 0.0, %v155
  %v157 = vpop.f32.mrb[0].mxu0
  %v158 = vpop.f32.mrb[0].mxu0
  %v159 = vadd.f32 0.0, %v158
  %v160 = vpop.f32.mrb[0].mxu0
  %161 = vmatprep.mubr.bf16.mxu0 %v54
  %162 = vmatmul.mubr.bf16.gmra.mrb[0].mxu0 %v53
  %v163 = vpop.f32.mrb[0].mxu0
  %v164 = vadd.f32 0.0, %v163
  %v165 = vpop.f32.mrb[0].mxu0
  %v166 = vpop.f32.mrb[0].mxu0
  %v167 = vadd.f32 0.0, %v166
  %v168 = vpop.f32.mrb[0].mxu0
  %169 = vmatprep.mubr.bf16.mxu0 %v56
  %170 = vmatmul.mubr.bf16.gmra.mrb[0].mxu0 %v55
  %v171 = vpop.f32.mrb[0].mxu0
  %v172 = vadd.f32 0.0, %v171
  %v173 = vpop.f32.mrb[0].mxu0
  %v174 = vpop.f32.mrb[0].mxu0
  %v175 = vadd.f32 0.0, %v174
  %v176 = vpop.f32.mrb[0].mxu0
  %177 = vmatprep.mubr.bf16.mxu0 %v58
  %178 = vmatmul.mubr.bf16.gmra.mrb[0].mxu0 %v57
  %v179 = vpop.f32.mrb[0].mxu0
  %v180 = vadd.f32 0.0, %v179
  %v181 = vpop.f32.mrb[0].mxu0
  %v182 = vpop.f32.mrb[0].mxu0
  %v183 = vadd.f32 0.0, %v182
  %v184 = vpop.f32.mrb[0].mxu0
  %185 = vmatprep.mubr.bf16.mxu0 %v60
  %186 = vmatmul.mubr.bf16.gmra.mrb[0].mxu0 %v59
  %v187 = vpop.f32.mrb[0].mxu0
  %v188 = vadd.f32 0.0, %v187
  %v189 = vpop.f32.mrb[0].mxu0
  %v190 = vpop.f32.mrb[0].mxu0
  %v191 = vadd.f32 0.0, %v190
  %v192 = vpop.f32.mrb[0].mxu0
  %193 = vmatprep.mubr.bf16.mxu0 %v62
  %194 = vmatmul.mubr.bf16.gmra.mrb[0].mxu0 %v61
  %v195 = vpop.f32.mrb[0].mxu0
  %v196 = vadd.f32 0.0, %v195
  %v197 = vpop.f32.mrb[0].mxu0
  %v198 = vpop.f32.mrb[0].mxu0
  %v199 = vadd.f32 0.0, %v198
  %v200 = vpop.f32.mrb[0].mxu0
  %201 = vmatprep.mubr.bf16.mxu0 %v64
  %202 = vmatmul.mubr.bf16.gmra.mrb[0].mxu0 %v63
  %v203 = vpop.f32.mrb[0].mxu0
  %v204 = vadd.f32 0.0, %v203
  %v205 = vpop.f32.mrb[0].mxu0
  %v206 = vpop.f32.mrb[0].mxu0
  %v207 = vadd.f32 0.0, %v206
  %v208 = vpop.f32.mrb[0].mxu0
  %209 = vdwg.mxu0
  %210 = vst [vmem:[%s3] sm:$0xff] %v148
  %211 = vst [vmem:[%s3 + $0x8] sm:$0xff] %v151
  %212 = vst [vmem:[%s3 + $0x10] sm:$0xff] %v156
  %213 = vst [vmem:[%s3 + $0x18] sm:$0xff] %v159
  %214 = vst [vmem:[%s3 + $0x20] sm:$0xff] %v164
  %215 = vst [vmem:[%s3 + $0x28] sm:$0xff] %v167
  %216 = vst [vmem:[%s3 + $0x30] sm:$0xff] %v172
  %217 = vst [vmem:[%s3 + $0x38] sm:$0xff] %v175
  %218 = vst [vmem:[%s3 + $0x40] sm:$0xff] %v180
  %219 = vst [vmem:[%s3 + $0x48] sm:$0xff] %v183
  %220 = vst [vmem:[%s3 + $0x50] sm:$0xff] %v188
  %221 = vst [vmem:[%s3 + $0x58] sm:$0xff] %v191
  %222 = vst [vmem:[%s3 + $0x60] sm:$0xff] %v196
  %223 = vst [vmem:[%s3 + $0x68] sm:$0xff] %v199
  %224 = vst [vmem:[%s3 + $0x70] sm:$0xff] %v204
  %225 = vst [vmem:[%s3 + $0x78] sm:$0xff] %v207
  %v226 = vrot.slane %v148, 4
  %v227 = vadd.f32 %v148, %v226
  %v228 = vrot.slane %v227, 2
  %v229 = vadd.f32 %v227, %v228
  %v230 = vrot.slane %v229, 1
  %v231 = vadd.f32 %v229, %v230
  %v232 = vrot.slane %v156, 4
  %v233 = vadd.f32 %v156, %v232
  %v234 = vrot.slane %v233, 2
  %v235 = vadd.f32 %v233, %v234
  %v236 = vrot.slane %v235, 1
  %v237 = vadd.f32 %v235, %v236
  %v238 = vrot.slane %v164, 4
  %v239 = vadd.f32 %v164, %v238
  %v240 = vrot.slane %v239, 2
  %v241 = vadd.f32 %v239, %v240
  %v242 = vrot.slane %v241, 1
  %v243 = vadd.f32 %v241, %v242
  %v244 = vrot.slane %v172, 4
  %v245 = vadd.f32 %v172, %v244
  %v246 = vrot.slane %v245, 2
  %v247 = vadd.f32 %v245, %v246
  %v248 = vrot.slane %v247, 1
  %v249 = vadd.f32 %v247, %v248
  %v250 = vrot.slane %v180, 4
  %v251 = vadd.f32 %v180, %v250
  %v252 = vrot.slane %v251, 2
  %v253 = vadd.f32 %v251, %v252
  %v254 = vrot.slane %v253, 1
  %v255 = vadd.f32 %v253, %v254
  %v256 = vrot.slane %v188, 4
  %v257 = vadd.f32 %v188, %v256
  %v258 = vrot.slane %v257, 2
  %v259 = vadd.f32 %v257, %v258
  %v260 = vrot.slane %v259, 1
  %v261 = vadd.f32 %v259, %v260
  %v262 = vrot.slane %v196, 4
  %v263 = vadd.f32 %v196, %v262
  %v264 = vrot.slane %v263, 2
  %v265 = vadd.f32 %v263, %v264
  %v266 = vrot.slane %v265, 1
  %v267 = vadd.f32 %v265, %v266
  %v268 = vrot.slane %v204, 4
  %v269 = vadd.f32 %v204, %v268
  %v270 = vrot.slane %v269, 2
  %v271 = vadd.f32 %v269, %v270
  %v272 = vrot.slane %v271, 1
  %v273 = vadd.f32 %v271, %v272
  %v274 = vrcp.pop 8.0
  %v275 = vmul.f32 %v231, %v274
  %v276 = vmul.f32 %v237, %v274
  %v277 = vmul.f32 %v243, %v274
  %v278 = vmul.f32 %v249, %v274
  %v279 = vmul.f32 %v255, %v274
  %v280 = vmul.f32 %v261, %v274
  %v281 = vmul.f32 %v267, %v274
  %v282 = vmul.f32 %v273, %v274
  %v283 = vpack.c.bf16 %v275, %v275
  %v284 = vpack.c.bf16 %v276, %v276
  %v285 = vpack.c.bf16 %v277, %v277
  %v286 = vpack.c.bf16 %v278, %v278
  %v287 = vpack.c.bf16 %v279, %v279
  %v288 = vpack.c.bf16 %v280, %v280
  %v289 = vpack.c.bf16 %v281, %v281
  %v290 = vpack.c.bf16 %v282, %v282
  %v291 = vld [vmem:[%s2] sm:$0xff]
  %v292 = vld [vmem:[%s2 + $0x8] sm:$0xff]
  %v293 = vld [vmem:[%s2 + $0x10] sm:$0xff]
  %v294 = vld [vmem:[%s2 + $0x18] sm:$0xff]
  %v295 = vld [vmem:[%s2 + $0x20] sm:$0xff]
  %v296 = vld [vmem:[%s2 + $0x28] sm:$0xff]
  %v297 = vld [vmem:[%s2 + $0x30] sm:$0xff]
  %v298 = vld [vmem:[%s2 + $0x38] sm:$0xff]
  %v299 = vld [vmem:[%s2 + $0x40] sm:$0xff]
  %v300 = vld [vmem:[%s2 + $0x48] sm:$0xff]
  %v301 = vld [vmem:[%s2 + $0x50] sm:$0xff]
  %v302 = vld [vmem:[%s2 + $0x58] sm:$0xff]
  %v303 = vld [vmem:[%s2 + $0x60] sm:$0xff]
  %v304 = vld [vmem:[%s2 + $0x68] sm:$0xff]
  %v305 = vld [vmem:[%s2 + $0x70] sm:$0xff]
  %v306 = vld [vmem:[%s2 + $0x78] sm:$0xff]
  %v307 = vpack.c.bf16 %v292, %v291
  %v308 = vpack.c.bf16 %v294, %v293
  %v309 = vpack.c.bf16 %v296, %v295
  %v310 = vpack.c.bf16 %v298, %v297
  %v311 = vpack.c.bf16 %v300, %v299
  %v312 = vpack.c.bf16 %v302, %v301
  %v313 = vpack.c.bf16 %v304, %v303
  %v314 = vpack.c.bf16 %v306, %v305
  %v323 = vunpack.c.l.b16 %v283
  %v324 = vunpack.c.l.b16 %v284
  %v325 = vunpack.c.l.b16 %v285
  %v326 = vunpack.c.l.b16 %v286
  %v327 = vunpack.c.l.b16 %v287
  %v328 = vunpack.c.l.b16 %v288
  %v329 = vunpack.c.l.b16 %v289
  %v330 = vunpack.c.l.b16 %v290
  %vm331 = vcmask 1041409
  %v332 = vsel %vm331, %v324, %v323
  %vm333 = vcmask 1042434
  %v334 = vsel %vm333, %v325, %v332
  %vm335 = vcmask 1043459
  %v336 = vsel %vm335, %v326, %v334
  %vm337 = vcmask 1044484
  %v338 = vsel %vm337, %v327, %v336
  %vm339 = vcmask 1045509
  %v340 = vsel %vm339, %v328, %v338
  %vm341 = vcmask 1046534
  %v342 = vsel %vm341, %v329, %v340
  %vm343 = vcmask 1047559
  %v344 = vsel %vm343, %v330, %v342
  %v345 = vpack.c.b16 %v344, %v344
  %347 = vmatprep.subr.bf16.mxu0 0
  %348 = vmatpush1.bf16.msra.mxu0 %v307
  %349 = vmatprep.subr.bf16.mxu0 0
  %350 = vmatpush1.bf16.msra.mxu0 %v308
  %351 = vmatprep.subr.bf16.mxu0 0
  %352 = vmatpush1.bf16.msra.mxu0 %v309
  %353 = vmatprep.subr.bf16.mxu0 0
  %354 = vmatpush1.bf16.msra.mxu0 %v310
  %355 = vmatprep.subr.bf16.mxu0 0
  %356 = vmatpush1.bf16.msra.mxu0 %v311
  %357 = vmatprep.subr.bf16.mxu0 0
  %358 = vmatpush1.bf16.msra.mxu0 %v312
  %359 = vmatprep.subr.bf16.mxu0 0
  %360 = vmatpush1.bf16.msra.mxu0 %v313
  %361 = vmatprep.subr.bf16.mxu0 0
  %362 = vmatpush1.bf16.msra.mxu0 %v314
  %363 = vmatprep.subr.bf16.mxu0 0
  %364 = vmatpush1.bf16.msra.mxu0 0
  %365 = vmatprep.subr.bf16.mxu0 0
  %366 = vmatpush1.bf16.msra.mxu0 0
  %367 = vmatprep.subr.bf16.mxu0 0
  %368 = vmatpush1.bf16.msra.mxu0 0
  %369 = vmatprep.subr.bf16.mxu0 0
  %370 = vmatpush1.bf16.msra.mxu0 0
  %371 = vmatprep.subr.bf16.mxu0 0
  %372 = vmatpush1.bf16.msra.mxu0 0
  %373 = vmatprep.subr.bf16.mxu0 0
  %374 = vmatpush1.bf16.msra.mxu0 0
  %375 = vmatprep.subr.bf16.mxu0 0
  %376 = vmatpush1.bf16.msra.mxu0 0
  %377 = vmatprep.subr.bf16.mxu0 0
  %378 = vmatpush1.bf16.msra.mxu0 0
  %379 = vmatprep.mubr.bf16.mxu0 0
  %380 = vmatmul.mubr.bf16.gmra.mrb[0].mxu0 %v345
  %v381 = vpop.f32.mrb[0].mxu0
  %v382 = vadd.f32 0.0, %v381
  %v383 = vpop.f32.mrb[0].mxu0
  %v384 = vpop.f32.mrb[0].mxu0
  %v385 = vpop.f32.mrb[0].mxu0
  %386 = vdwg.mxu0
  %v388 = vcombine.high %v382, %v382
  %v390 = vunpack.c.l.s4 1966171168
  %v391 = vunpack.c.0.s8 %v390
  %v392 = vlaneseq
  %v393 = vshrl.u32 %v392, 7
  %v394 = vsub.s32 %v391, %v393
  %v395 = vrot.slane %v382, %v394
  %v397 = vunpack.c.l.s4 1966171168
  %v398 = vunpack.c.0.s8 %v397
  %v399 = vlaneseq
  %v400 = vshrl.u32 %v399, 7
  %v401 = vsub.s32 %v398, %v400
  %v402 = vrot.slane %v388, %v401
  %v403 = vcombine.high %v395, %v395
  %v404 = vcombine.high %v402, %v402
  %v406 = vunpack.c.l.s4 1966171168
  %v407 = vunpack.c.0.s8 %v406
  %v408 = vlaneseq
  %v409 = vshrl.u32 %v408, 7
  %v410 = vsub.s32 %v407, %v409
  %v411 = vrot.slane %v395, %v410
  %v413 = vunpack.c.l.s4 1966171168
  %v414 = vunpack.c.0.s8 %v413
  %v415 = vlaneseq
  %v416 = vshrl.u32 %v415, 7
  %v417 = vsub.s32 %v414, %v416
  %v418 = vrot.slane %v402, %v417
  %v420 = vunpack.c.l.s4 1966171168
  %v421 = vunpack.c.0.s8 %v420
  %v422 = vlaneseq
  %v423 = vshrl.u32 %v422, 7
  %v424 = vsub.s32 %v421, %v423
  %v425 = vrot.slane %v403, %v424
  %v427 = vunpack.c.l.s4 1966171168
  %v428 = vunpack.c.0.s8 %v427
  %v429 = vlaneseq
  %v430 = vshrl.u32 %v429, 7
  %v431 = vsub.s32 %v428, %v430
  %v432 = vrot.slane %v404, %v431
  %v433 = vcombine.high %v411, %v411
  %v434 = vcombine.high %v418, %v418
  %v435 = vcombine.high %v425, %v425
  %v436 = vcombine.high %v432, %v432
  %445 = vst [vmem:[%s4] sm:$0x1] %v411
  %446 = vst [vmem:[%s4 + $0x1] sm:$0x1] %v425
  %447 = vst [vmem:[%s4 + $0x2] sm:$0x1] %v433
  %448 = vst [vmem:[%s4 + $0x3] sm:$0x1] %v435
  %449 = vst [vmem:[%s4 + $0x4] sm:$0x1] %v418
  %450 = vst [vmem:[%s4 + $0x5] sm:$0x1] %v432
  %451 = vst [vmem:[%s4 + $0x6] sm:$0x1] %v434
  %452 = vst [vmem:[%s4 + $0x7] sm:$0x1] %v436
  // Predicated region
  $region14: #{moco_forward.7} parent=0 // pred_check
    _
  $region15: #{moco_forward.7} parent=0 // pred_check_branch
    %454 = sbr.rel (0) target = $region17
  $region16: #{moco_forward.7} parent=0 // pred_region
    _
  $region17: #{moco_forward.7} parent=0 // pred_fallthru
    _
  // Predicated region
  $region18: #{moco_forward.7} parent=0 // pred_check
    _
  $region19: #{moco_forward.7} parent=0 // pred_check_branch
    %456 = sbr.rel (0) target = $region21
  $region20: #{moco_forward.7} parent=0 // pred_region
    _
  $region21: #{moco_forward.7} parent=0 // pred_fallthru
    _
  // Predicated region
  $region22: #{moco_forward.7} parent=0 // pred_check
    _
  $region23: #{moco_forward.7} parent=0 // pred_check_branch
    %458 = sbr.rel (0) target = $region25
  $region24: #{moco_forward.7} parent=0 // pred_region
    _
  $region25: #{moco_forward.7} parent=0 // pred_fallthru
    _
  // Predicated region
  $region26: #{moco_forward.7} parent=0 // pred_check
    _
  $region27: #{moco_forward.7} parent=0 // pred_check_branch
    %460 = sbr.rel (0) target = $region29
  $region28: #{moco_forward.7} parent=0 // pred_region
    _
  $region29: #{moco_forward.7} parent=0 // pred_fallthru
    _

// kernel: moco_forward.11
$region0: #{moco_forward.11}
  #allocation0 [shape = 'u32[]', space=smem, size = 0x4, offset = 0x4, fixed_abs, tag = 'smem constant byte address 0x4 - core index']
  #allocation1 [shape = 'u32[144,128]{1,0:T(1,128)}', space=vmem, size = 0x12000, scoped, tag = 'internal scratch']
  %s0 = inlined_call_operand.vmem [shape: f32[2,4,16,128], index: 0, kind: input, shape index: {}]
  %s1 = inlined_call_operand.vmem [shape: f32[2,4,16,256], index: 1, kind: input, shape index: {}]
  %s2 = inlined_call_operand.vmem [shape: f32[1,128], index: 2, kind: input, shape index: {}]
  %s3 = inlined_call_operand.vmem [shape: f32[128,128], index: 3, kind: input, shape index: {}]
  %s4 = inlined_call_operand.vmem [shape: f32[128,256], index: 4, kind: input, shape index: {}]
  %s5 = inlined_call_operand.vmem [shape: f32[128,128], index: 5, kind: input, shape index: {}]
  %s6 = inlined_call_operand.vmem [shape: f32[2,4,1,128], index: 6, kind: output, shape index: {0}]
  %s7 = inlined_call_operand.vmem [shape: f32[2,1,1], index: 7, kind: output, shape index: {1}]
  %s8 = inlined_call_operand.vmem [shape: f32[2,1,1], index: 8, kind: output, shape index: {2}]
  %9 = xla_tuple %s6, %s7, %s8
  %s10 = sld [smem:[#allocation0]]
  $region77: #{moco_forward.11} parent=0
    _
  %s12 = ssub.s32 1, %s10
  %s13 = scalar_select 0, %s12, %s10
  loop: start=0, step=1, limit=4
  $region2: #{moco_forward.11} parent=0 // loop_pre_header
    _
  $region3: #{moco_forward.11} parent=0 // loop_header
    %s15 = sphi 0, %s19
    %p16 = scmp.ge.s32.totalorder %s15, 4
    %s22 = sphi 0, %s34
    %s23 = sphi 0, %s30
    %s24 = sphi 0, %s22
    %s25 = sphi 0, %s23
    %s26 = sphi 0, %s24
    %s27 = sphi 0, %s25
    %s39 = sphi 0, %s41
    %s42 = sphi 0, %s39
    %s43 = sphi 0, %s42
    %s59 = sphi 0, %s43
    %s67 = sphi 0, %s69
    %s70 = sphi 0, %s67
    %s71 = sphi 0, %s70
    %s87 = sphi 0, %s71
    %s91 = sphi 0, %s91
    %s93 = sphi 0, %s91
    %s94 = sphi 0, %s93
    %s108 = sphi 0, %s94
    %s112 = sphi 0, %s112
    %s114 = sphi 0, %s112
    %s115 = sphi 0, %s114
    %s129 = sphi 0, %s115
    %s133 = sphi 0, %s133
    %s135 = sphi 0, %s133
    %s136 = sphi 0, %s135
    %s150 = sphi 0, %s136
    %s154 = sphi 0, %s154
    %s156 = sphi 0, %s154
    %s157 = sphi 0, %s156
    %s171 = sphi 0, %s157
    %s179 = sphi 0, %s181
    %s182 = sphi 0, %s179
    %s183 = sphi 0, %s182
    %s199 = sphi 0, %s183
    %s205 = sphi 0, %s207
    %s208 = sphi 0, %s205
    %s209 = sphi 0, %s208
    %s225 = sphi 0, %s209
    %s231 = sphi 0, %s233
    %s234 = sphi 0, %s231
    %s235 = sphi 0, %s234
    %s251 = sphi 0, %s235
  $region4: #{moco_forward.11} parent=0 // loop_header_branch
    %18 = sbr.rel (%p16) target = $region8
  $region5: #{moco_forward.11} parent=0 // loop_body
    %s20 = ssub.s32 %s15, 1
    %s21 = ssub.s32 %s15, 2
    %s28 = sadd.s32 1, %s23
    %p29 = scmp.ge.s32.totalorder %s28, 1
    %s30 = scalar_select %p29, 0, %s28
    %s31 = sadd.s32 1, %s22
    %s32 = scalar_select %p29, %s31, %s22
    %p33 = scmp.ge.s32.totalorder %s32, 2
    %s34 = scalar_select %p33, 0, %s32
    %s35 = ssub.s32 %s22, %s34
    %s36 = ssub.s32 %s23, %s30
    %s37 = sor.u32 %s35, %s36
    %p38 = scmp.eq.s32.totalorder %s37, 0
    %s40 = sadd.s32 %s39, 1
    %s41 = scalar_select %p38, %s39, %s40
    %p44 = pneg %p38
    %p45 = scmp.eq.s32.totalorder %s15, 1
    %p46 = por %p44, %p45
    %p47 = scmp.ne.s32.totalorder %s39, %s42
    %p48 = scmp.eq.s32.totalorder %s15, 0
    %p49 = por %p47, %p48
    %p50 = scmp.ne.s32.totalorder %s39, %s42
    %p51 = scmp.eq.s32.totalorder %s20, 1
    %p52 = por %p50, %p51
    %p53 = scmp.ne.s32.totalorder %s42, %s43
    %p54 = scmp.eq.s32.totalorder %s20, 0
    %p55 = por %p53, %p54
    %p56 = scmp.ne.s32.totalorder %s42, %s43
    %p57 = scmp.eq.s32.totalorder %s21, 1
    %p58 = por %p56, %p57
    %p60 = scmp.ne.s32.totalorder %s43, %s59
    %p61 = scmp.eq.s32.totalorder %s21, 0
    %p62 = por %p60, %p61
    %s63 = ssub.s32 %s22, %s34
    %s64 = ssub.s32 %s23, %s30
    %s65 = sor.u32 %s63, %s64
    %p66 = scmp.eq.s32.totalorder %s65, 0
    %s68 = sadd.s32 %s67, 1
    %s69 = scalar_select %p66, %s67, %s68
    %p72 = pneg %p66
    %p73 = scmp.eq.s32.totalorder %s15, 1
    %p74 = por %p72, %p73
    %p75 = scmp.ne.s32.totalorder %s67, %s70
    %p76 = scmp.eq.s32.totalorder %s15, 0
    %p77 = por %p75, %p76
    %p78 = scmp.ne.s32.totalorder %s67, %s70
    %p79 = scmp.eq.s32.totalorder %s20, 1
    %p80 = por %p78, %p79
    %p81 = scmp.ne.s32.totalorder %s70, %s71
    %p82 = scmp.eq.s32.totalorder %s20, 0
    %p83 = por %p81, %p82
    %p84 = scmp.ne.s32.totalorder %s70, %s71
    %p85 = scmp.eq.s32.totalorder %s21, 1
    %p86 = por %p84, %p85
    %p88 = scmp.ne.s32.totalorder %s71, %s87
    %p89 = scmp.eq.s32.totalorder %s21, 0
    %p90 = por %p88, %p89
    %s92 = sadd.s32 %s91, 1
    %p95 = scmp.eq.s32.totalorder %s15, 1
    %p96 = scmp.ne.s32.totalorder %s91, %s93
    %p97 = scmp.eq.s32.totalorder %s15, 0
    %p98 = por %p96, %p97
    %p99 = scmp.ne.s32.totalorder %s91, %s93
    %p100 = scmp.eq.s32.totalorder %s20, 1
    %p101 = por %p99, %p100
    %p102 = scmp.ne.s32.totalorder %s93, %s94
    %p103 = scmp.eq.s32.totalorder %s20, 0
    %p104 = por %p102, %p103
    %p105 = scmp.ne.s32.totalorder %s93, %s94
    %p106 = scmp.eq.s32.totalorder %s21, 1
    %p107 = por %p105, %p106
    %p109 = scmp.ne.s32.totalorder %s94, %s108
    %p110 = scmp.eq.s32.totalorder %s21, 0
    %p111 = por %p109, %p110
    %s113 = sadd.s32 %s112, 1
    %p116 = scmp.eq.s32.totalorder %s15, 1
    %p117 = scmp.ne.s32.totalorder %s112, %s114
    %p118 = scmp.eq.s32.totalorder %s15, 0
    %p119 = por %p117, %p118
    %p120 = scmp.ne.s32.totalorder %s112, %s114
    %p121 = scmp.eq.s32.totalorder %s20, 1
    %p122 = por %p120, %p121
    %p123 = scmp.ne.s32.totalorder %s114, %s115
    %p124 = scmp.eq.s32.totalorder %s20, 0
    %p125 = por %p123, %p124
    %p126 = scmp.ne.s32.totalorder %s114, %s115
    %p127 = scmp.eq.s32.totalorder %s21, 1
    %p128 = por %p126, %p127
    %p130 = scmp.ne.s32.totalorder %s115, %s129
    %p131 = scmp.eq.s32.totalorder %s21, 0
    %p132 = por %p130, %p131
    %s134 = sadd.s32 %s133, 1
    %p137 = scmp.eq.s32.totalorder %s15, 1
    %p138 = scmp.ne.s32.totalorder %s133, %s135
    %p139 = scmp.eq.s32.totalorder %s15, 0
    %p140 = por %p138, %p139
    %p141 = scmp.ne.s32.totalorder %s133, %s135
    %p142 = scmp.eq.s32.totalorder %s20, 1
    %p143 = por %p141, %p142
    %p144 = scmp.ne.s32.totalorder %s135, %s136
    %p145 = scmp.eq.s32.totalorder %s20, 0
    %p146 = por %p144, %p145
    %p147 = scmp.ne.s32.totalorder %s135, %s136
    %p148 = scmp.eq.s32.totalorder %s21, 1
    %p149 = por %p147, %p148
    %p151 = scmp.ne.s32.totalorder %s136, %s150
    %p152 = scmp.eq.s32.totalorder %s21, 0
    %p153 = por %p151, %p152
    %s155 = sadd.s32 %s154, 1
    %p158 = scmp.eq.s32.totalorder %s15, 1
    %p159 = scmp.ne.s32.totalorder %s154, %s156
    %p160 = scmp.eq.s32.totalorder %s15, 0
    %p161 = por %p159, %p160
    %p162 = scmp.ne.s32.totalorder %s154, %s156
    %p163 = scmp.eq.s32.totalorder %s20, 1
    %p164 = por %p162, %p163
    %p165 = scmp.ne.s32.totalorder %s156, %s157
    %p166 = scmp.eq.s32.totalorder %s20, 0
    %p167 = por %p165, %p166
    %p168 = scmp.ne.s32.totalorder %s156, %s157
    %p169 = scmp.eq.s32.totalorder %s21, 1
    %p170 = por %p168, %p169
    %p172 = scmp.ne.s32.totalorder %s157, %s171
    %p173 = scmp.eq.s32.totalorder %s21, 0
    %p174 = por %p172, %p173
    %s175 = ssub.s32 %s22, %s34
    %s176 = ssub.s32 %s23, %s30
    %s177 = sor.u32 %s175, %s176
    %p178 = scmp.eq.s32.totalorder %s177, 0
    %s180 = sadd.s32 %s179, 1
    %s181 = scalar_select %p178, %s179, %s180
    %p184 = pneg %p178
    %p185 = scmp.eq.s32.totalorder %s15, 1
    %p186 = por %p184, %p185
    %p187 = scmp.ne.s32.totalorder %s179, %s182
    %p188 = scmp.eq.s32.totalorder %s15, 0
    %p189 = por %p187, %p188
    %p190 = scmp.ne.s32.totalorder %s179, %s182
    %p191 = scmp.eq.s32.totalorder %s20, 1
    %p192 = por %p190, %p191
    %p193 = scmp.ne.s32.totalorder %s182, %s183
    %p194 = scmp.eq.s32.totalorder %s20, 0
    %p195 = por %p193, %p194
    %p196 = scmp.ne.s32.totalorder %s182, %s183
    %p197 = scmp.eq.s32.totalorder %s21, 1
    %p198 = por %p196, %p197
    %p200 = scmp.ne.s32.totalorder %s183, %s199
    %p201 = scmp.eq.s32.totalorder %s21, 0
    %p202 = por %p200, %p201
    %s203 = ssub.s32 %s22, %s34
    %p204 = scmp.eq.s32.totalorder %s203, 0
    %s206 = sadd.s32 %s205, 1
    %s207 = scalar_select %p204, %s205, %s206
    %p210 = pneg %p204
    %p211 = scmp.eq.s32.totalorder %s15, 1
    %p212 = por %p210, %p211
    %p213 = scmp.ne.s32.totalorder %s205, %s208
    %p214 = scmp.eq.s32.totalorder %s15, 0
    %p215 = por %p213, %p214
    %p216 = scmp.ne.s32.totalorder %s205, %s208
    %p217 = scmp.eq.s32.totalorder %s20, 1
    %p218 = por %p216, %p217
    %p219 = scmp.ne.s32.totalorder %s208, %s209
    %p220 = scmp.eq.s32.totalorder %s20, 0
    %p221 = por %p219, %p220
    %p222 = scmp.ne.s32.totalorder %s208, %s209
    %p223 = scmp.eq.s32.totalorder %s21, 1
    %p224 = por %p222, %p223
    %p226 = scmp.ne.s32.totalorder %s209, %s225
    %p227 = scmp.eq.s32.totalorder %s21, 0
    %p228 = por %p226, %p227
    %s229 = ssub.s32 %s22, %s34
    %p230 = scmp.eq.s32.totalorder %s229, 0
    %s232 = sadd.s32 %s231, 1
    %s233 = scalar_select %p230, %s231, %s232
    %p236 = pneg %p230
    %p237 = scmp.eq.s32.totalorder %s15, 1
    %p238 = por %p236, %p237
    %p239 = scmp.ne.s32.totalorder %s231, %s234
    %p240 = scmp.eq.s32.totalorder %s15, 0
    %p241 = por %p239, %p240
    %p242 = scmp.ne.s32.totalorder %s231, %s234
    %p243 = scmp.eq.s32.totalorder %s20, 1
    %p244 = por %p242, %p243
    %p245 = scmp.ne.s32.totalorder %s234, %s235
    %p246 = scmp.eq.s32.totalorder %s20, 0
    %p247 = por %p245, %p246
    %p248 = scmp.ne.s32.totalorder %s234, %s235
    %p249 = scmp.eq.s32.totalorder %s21, 1
    %p250 = por %p248, %p249
    %p252 = scmp.ne.s32.totalorder %s235, %s251
    %p253 = scmp.eq.s32.totalorder %s21, 0
    %p254 = por %p252, %p253
    %p255 = scmp.le.s32.totalorder 1, %s15
    %p256 = scmp.lt.s32.totalorder %s15, 3
    %p257 = pnand %p255, %p256
    %p258 = pneg %p257
    // Predicated region
    $region9: #{moco_forward.11} parent=5 // pred_check
      _
    $region10: #{moco_forward.11} parent=5 // pred_check_branch
      %260 = sbr.rel (%p257) target = $region12
    $region11: #{moco_forward.11} parent=5 // pred_region
      %s261 = ssub.s32 %s15, 1
      // Predicated region
      $region13: #{moco_forward.11} parent=11 // pred_check
        %p262 = pneg %p104
      $region14: #{moco_forward.11} parent=11 // pred_check_branch
        %264 = sbr.rel (%p262) target = $region16
      $region15: #{moco_forward.11} parent=11 // pred_region
        _
      $region16: #{moco_forward.11} parent=11 // pred_fallthru
        _
      // Predicated region
      $region17: #{moco_forward.11} parent=11 // pred_check
        %p265 = pneg %p125
      $region18: #{moco_forward.11} parent=11 // pred_check_branch
        %267 = sbr.rel (%p265) target = $region20
      $region19: #{moco_forward.11} parent=11 // pred_region
        _
      $region20: #{moco_forward.11} parent=11 // pred_fallthru
        _
      // Predicated region
      $region21: #{moco_forward.11} parent=11 // pred_check
        %p268 = pneg %p146
      $region22: #{moco_forward.11} parent=11 // pred_check_branch
        %270 = sbr.rel (%p268) target = $region24
      $region23: #{moco_forward.11} parent=11 // pred_region
        _
      $region24: #{moco_forward.11} parent=11 // pred_fallthru
        _
      // Predicated region
      $region25: #{moco_forward.11} parent=11 // pred_check
        %p271 = pneg %p167
      $region26: #{moco_forward.11} parent=11 // pred_check_branch
        %273 = sbr.rel (%p271) target = $region28
      $region27: #{moco_forward.11} parent=11 // pred_region
        _
      $region28: #{moco_forward.11} parent=11 // pred_fallthru
        _
    $region12: #{moco_forward.11} parent=5 // pred_fallthru
      _
    %p274 = scmp.lt.s32.totalorder %s15, 2
    // Predicated region
    $region29: #{moco_forward.11} parent=5 // pred_check
      %p275 = pneg %p274
    $region30: #{moco_forward.11} parent=5 // pred_check_branch
      %277 = sbr.rel (%p275) target = $region32
    $region31: #{moco_forward.11} parent=5 // pred_region
      // Predicated region
      $region33: #{moco_forward.11} parent=31 // pred_check
        %p278 = pneg %p49
      $region34: #{moco_forward.11} parent=31 // pred_check_branch
        %280 = sbr.rel (%p278) target = $region36
      $region35: #{moco_forward.11} parent=31 // pred_region
        %s281 = smul.u32 4, %s23
        %p282 = scmp.lt.s32.totalorder %s22, 1
        %s283 = scalar_select %p282, %s22, 1
        %p284 = scmp.lt.s32.totalorder %s281, 3
        %s285 = scalar_select %p284, %s281, 3
        %s286 = smul.addr %s285, 2
        %s287 = smul.addr %s283, 8
        %s288 = sadd.s32 %s286, %s287
        %s289 = smul.addr %s288, 8
        %s290 = scalar_lea.vmem %s0, %s289
        %s291 = smul.u32 4, %s23
      $region36: #{moco_forward.11} parent=31 // pred_fallthru
        _
      // Predicated region
      $region37: #{moco_forward.11} parent=31 // pred_check
        %p292 = pneg %p77
      $region38: #{moco_forward.11} parent=31 // pred_check_branch
        %294 = sbr.rel (%p292) target = $region40
      $region39: #{moco_forward.11} parent=31 // pred_region
        %s295 = smul.u32 4, %s23
        %p296 = scmp.lt.s32.totalorder %s22, 1
        %s297 = scalar_select %p296, %s22, 1
        %p298 = scmp.lt.s32.totalorder %s295, 3
        %s299 = scalar_select %p298, %s295, 3
        %s300 = smul.addr %s299, 4
        %s301 = smul.addr %s297, 16
        %s302 = sadd.s32 %s300, %s301
        %s303 = smul.addr %s302, 8
        %s304 = scalar_lea.vmem %s1, %s303
        %s305 = smul.u32 4, %s23
      $region40: #{moco_forward.11} parent=31 // pred_fallthru
        _
    $region32: #{moco_forward.11} parent=5 // pred_fallthru
      _
    %p306 = scmp.le.s32.totalorder 1, %s15
    %p307 = scmp.lt.s32.totalorder %s15, 3
    %p308 = pnand %p306, %p307
    %p309 = pneg %p308
    // Predicated region
    $region41: #{moco_forward.11} parent=5 // pred_check
      _
    $region42: #{moco_forward.11} parent=5 // pred_check_branch
      %311 = sbr.rel (%p308) target = $region44
    $region43: #{moco_forward.11} parent=5 // pred_region
      %s312 = ssub.s32 %s15, 1
      %s313 = smul.u32 4, %s25
      %p314 = scmp.lt.s32.totalorder %s24, 1
      %s315 = scalar_select %p314, %s24, 1
      %p316 = scmp.lt.s32.totalorder %s313, 3
      %s317 = scalar_select %p316, %s313, 3
      %s318 = smul.addr %s317, 2
      %s319 = smul.addr %s315, 8
      %s320 = sadd.s32 %s318, %s319
      %s321 = smul.addr %s320, 8
      %s322 = scalar_lea.vmem %s0, %s321
      %p323 = pneg %p55
      %p324 = pneg %p52
      %s325 = smul.u32 4, %s25
      %p326 = scmp.lt.s32.totalorder %s24, 1
      %s327 = scalar_select %p326, %s24, 1
      %p328 = scmp.lt.s32.totalorder %s325, 3
      %s329 = scalar_select %p328, %s325, 3
      %s330 = smul.addr %s329, 4
      %s331 = smul.addr %s327, 16
      %s332 = sadd.s32 %s330, %s331
      %s333 = smul.addr %s332, 8
      %s334 = scalar_lea.vmem %s1, %s333
      %p335 = pneg %p83
      %p336 = pneg %p80
      %p337 = pneg %p104
      %p338 = pneg %p101
      %p339 = pneg %p125
      %p340 = pneg %p122
      %p341 = pneg %p146
      %p342 = pneg %p143
      %p343 = pneg %p167
      %p344 = pneg %p164
      %p345 = pneg %p195
      %p346 = pneg %p192
      %s347 = smul.u32 4, %s25
      %p348 = scmp.lt.s32.totalorder %s24, 1
      %s349 = scalar_select %p348, %s24, 1
      %p350 = scmp.lt.s32.totalorder %s347, 3
      %s351 = scalar_select %p350, %s347, 3
      %s352 = smul.addr %s349, 4
      %s353 = sadd.s32 %s351, %s352
      %s354 = scalar_lea.vmem %s6, %s353
      %p355 = pneg %p221
      %p356 = pneg %p218
      %p357 = scmp.lt.s32.totalorder %s24, 1
      %s358 = scalar_select %p357, %s24, 1
      %s359 = scalar_lea.vmem %s7, %s358
      %p360 = pneg %p247
      %p361 = pneg %p244
      %p362 = scmp.lt.s32.totalorder %s24, 1
      %s363 = scalar_select %p362, %s24, 1
      %s364 = scalar_lea.vmem %s8, %s363
      %s365 = smul.u32 4, %s25
      %p366 = scmp.lt.s32.totalorder %s24, 1
      %s367 = scalar_select %p366, %s24, 1
      %p368 = scmp.lt.s32.totalorder %s365, 3
      %s369 = scalar_select %p368, %s365, 3
      %s370 = smul.addr %s369, 2
      %s371 = smul.addr %s367, 8
      %s372 = sadd.s32 %s370, %s371
      %s373 = smul.addr %s372, 8
      %s374 = scalar_lea.vmem %s0, %s373
      %s375 = smul.u32 4, %s25
      %s376 = smul.u32 4, %s25
      %p377 = scmp.lt.s32.totalorder %s24, 1
      %s378 = scalar_select %p377, %s24, 1
      %p379 = scmp.lt.s32.totalorder %s376, 3
      %s380 = scalar_select %p379, %s376, 3
      %s381 = smul.addr %s380, 4
      %s382 = smul.addr %s378, 16
      %s383 = sadd.s32 %s381, %s382
      %s384 = smul.addr %s383, 8
      %s385 = scalar_lea.vmem %s1, %s384
      %s386 = smul.u32 4, %s25
      %s387 = smul.u32 4, %s25
      %p388 = scmp.lt.s32.totalorder %s24, 1
      %s389 = scalar_select %p388, %s24, 1
      %p390 = scmp.lt.s32.totalorder %s387, 3
      %s391 = scalar_select %p390, %s387, 3
      %s392 = smul.addr %s389, 4
      %s393 = sadd.s32 %s391, %s392
      %s394 = scalar_lea.vmem %s6, %s393
      %s395 = smul.u32 4, %s25
      %p396 = scmp.lt.s32.totalorder %s24, 1
      %s397 = scalar_select %p396, %s24, 1
      %s398 = scalar_lea.vmem %s7, %s397
      %p399 = scmp.lt.s32.totalorder %s24, 1
      %s400 = scalar_select %p399, %s24, 1
      %s401 = scalar_lea.vmem %s8, %s400
      %p403 = scmp.eq.s32.totalorder %s25, 0
      // Predicated region
      $region45: #{moco_forward.11} parent=43 // pred_check
        %p404 = pneg %p403
      $region46: #{moco_forward.11} parent=43 // pred_check_branch
        %406 = sbr.rel (%p404) target = $region48
      $region47: #{moco_forward.11} parent=43 // pred_region
        %vm407 = vcmask 0
        %408 = vst.msk [vmem:[%s398] sm:$0x1] %vm407, 0.0
        %409 = vst.msk [vmem:[%s401] sm:$0x1] %vm407, 0.0
      $region48: #{moco_forward.11} parent=43 // pred_fallthru
        _
      %v410 = vld [vmem:[%s374] sm:$0xff]
      %v411 = vld [vmem:[%s374 + $0x8] sm:$0xff]
      %v412 = vld [vmem:[%s374 + $0x10] sm:$0xff]
      %v413 = vld [vmem:[%s374 + $0x18] sm:$0xff]
      %v414 = vld [vmem:[%s374 + $0x20] sm:$0xff]
      %v415 = vld [vmem:[%s374 + $0x28] sm:$0xff]
      %v416 = vld [vmem:[%s374 + $0x30] sm:$0xff]
      %v417 = vld [vmem:[%s374 + $0x38] sm:$0xff]
      %v418 = vlaneseq
      %v419 = vshrl.u32 %v418, 7
      %v420 = vadd.s32 %v419, 8
      %vm421 = vcmp.ge.s32.totalorder %v419, 8
      %vm422 = vcmp.ge.s32.totalorder %v420, 8
      %v423 = vld [vmem:[%s2] sm:$0x1]
      %v424 = vsel %vm421, 1, 0
      %v425 = vsel %vm422, 1, 0
      %vm426 = vcmp.eq.s32.totalorder %v424, 1
      %vm427 = vcmp.eq.s32.totalorder %v425, 1
      %v429 = vlaneseq
      %v430 = vshrl.u32 %v429, 7
      %v431 = vsub.s32 0, %v430
      %v432 = vrot.slane %v423, %v431
      %v434 = vsel %vm426, %v432, %v410
      %v435 = vsel %vm427, %v432, %v411
      %v436 = vsel %vm426, %v432, %v412
      %v437 = vsel %vm427, %v432, %v413
      %v438 = vsel %vm426, %v432, %v414
      %v439 = vsel %vm427, %v432, %v415
      %v440 = vsel %vm426, %v432, %v416
      %v441 = vsel %vm427, %v432, %v417
      %v442 = vcvt.s32.f32 %v424
      %v443 = vcvt.s32.f32 %v425
      %v444 = vpack.c.bf16 %v435, %v434
      %v445 = vpack.c.bf16 %v437, %v436
      %v446 = vpack.c.bf16 %v439, %v438
      %v447 = vpack.c.bf16 %v441, %v440
      %v448 = vld [vmem:[%s3] sm:$0xff]
      %v449 = vld [vmem:[%s3 + $0x8] sm:$0xff]
      %v450 = vld [vmem:[%s3 + $0x10] sm:$0xff]
      %v451 = vld [vmem:[%s3 + $0x18] sm:$0xff]
      %v452 = vld [vmem:[%s3 + $0x20] sm:$0xff]
      %v453 = vld [vmem:[%s3 + $0x28] sm:$0xff]
      %v454 = vld [vmem:[%s3 + $0x30] sm:$0xff]
      %v455 = vld [vmem:[%s3 + $0x38] sm:$0xff]
      %v456 = vld [vmem:[%s3 + $0x40] sm:$0xff]
      %v457 = vld [vmem:[%s3 + $0x48] sm:$0xff]
      %v458 = vld [vmem:[%s3 + $0x50] sm:$0xff]
      %v459 = vld [vmem:[%s3 + $0x58] sm:$0xff]
      %v460 = vld [vmem:[%s3 + $0x60] sm:$0xff]
      %v461 = vld [vmem:[%s3 + $0x68] sm:$0xff]
      %v462 = vld [vmem:[%s3 + $0x70] sm:$0xff]
      %v463 = vld [vmem:[%s3 + $0x78] sm:$0xff]
      %v464 = vpack.c.bf16 %v449, %v448
      %v465 = vpack.c.bf16 %v451, %v450
      %v466 = vpack.c.bf16 %v453, %v452
      %v467 = vpack.c.bf16 %v455, %v454
      %v468 = vpack.c.bf16 %v457, %v456
      %v469 = vpack.c.bf16 %v459, %v458
      %v470 = vpack.c.bf16 %v461, %v460
      %v471 = vpack.c.bf16 %v463, %v462
      %472 = vmatprep.subr.bf16.mxu0 0
      %473 = vmatpush1.bf16.msra.mxu0 %v464
      %474 = vmatprep.subr.bf16.mxu0 0
      %475 = vmatpush1.bf16.msra.mxu0 %v465
      %476 = vmatprep.subr.bf16.mxu0 0
      %477 = vmatpush1.bf16.msra.mxu0 %v466
      %478 = vmatprep.subr.bf16.mxu0 0
      %479 = vmatpush1.bf16.msra.mxu0 %v467
      %480 = vmatprep.subr.bf16.mxu0 0
      %481 = vmatpush1.bf16.msra.mxu0 %v468
      %482 = vmatprep.subr.bf16.mxu0 0
      %483 = vmatpush1.bf16.msra.mxu0 %v469
      %484 = vmatprep.subr.bf16.mxu0 0
      %485 = vmatpush1.bf16.msra.mxu0 %v470
      %486 = vmatprep.subr.bf16.mxu0 0
      %487 = vmatpush1.bf16.msra.mxu0 %v471
      %488 = vmatprep.subr.bf16.mxu0 0
      %489 = vmatpush1.bf16.msra.mxu0 0
      %490 = vmatprep.subr.bf16.mxu0 0
      %491 = vmatpush1.bf16.msra.mxu0 0
      %492 = vmatprep.subr.bf16.mxu0 0
      %493 = vmatpush1.bf16.msra.mxu0 0
      %494 = vmatprep.subr.bf16.mxu0 0
      %495 = vmatpush1.bf16.msra.mxu0 0
      %496 = vmatprep.subr.bf16.mxu0 0
      %497 = vmatpush1.bf16.msra.mxu0 0
      %498 = vmatprep.subr.bf16.mxu0 0
      %499 = vmatpush1.bf16.msra.mxu0 0
      %500 = vmatprep.subr.bf16.mxu0 0
      %501 = vmatpush1.bf16.msra.mxu0 0
      %502 = vmatprep.subr.bf16.mxu0 0
      %503 = vmatpush1.bf16.msra.mxu0 0
      %504 = vmatprep.mubr.bf16.mxu0 0
      %505 = vmatmul.mubr.bf16.gmra.mrb[0].mxu0 %v444
      %v506 = vpop.f32.mrb[0].mxu0
      %v507 = vadd.f32 0.0, %v506
      %v508 = vpop.f32.mrb[0].mxu0
      %v509 = vpop.f32.mrb[0].mxu0
      %v510 = vadd.f32 0.0, %v509
      %v511 = vpop.f32.mrb[0].mxu0
      %512 = vmatprep.mubr.bf16.mxu0 0
      %513 = vmatmul.mubr.bf16.gmra.mrb[0].mxu0 %v445
      %v514 = vpop.f32.mrb[0].mxu0
      %v515 = vadd.f32 0.0, %v514
      %v516 = vpop.f32.mrb[0].mxu0
      %v517 = vpop.f32.mrb[0].mxu0
      %v518 = vadd.f32 0.0, %v517
      %v519 = vpop.f32.mrb[0].mxu0
      %520 = vmatprep.mubr.bf16.mxu0 0
      %521 = vmatmul.mubr.bf16.gmra.mrb[0].mxu0 %v446
      %v522 = vpop.f32.mrb[0].mxu0
      %v523 = vadd.f32 0.0, %v522
      %v524 = vpop.f32.mrb[0].mxu0
      %v525 = vpop.f32.mrb[0].mxu0
      %v526 = vadd.f32 0.0, %v525
      %v527 = vpop.f32.mrb[0].mxu0
      %528 = vmatprep.mubr.bf16.mxu0 0
      %529 = vmatmul.mubr.bf16.gmra.mrb[0].mxu0 %v447
      %v530 = vpop.f32.mrb[0].mxu0
      %v531 = vadd.f32 0.0, %v530
      %v532 = vpop.f32.mrb[0].mxu0
      %v533 = vpop.f32.mrb[0].mxu0
      %v534 = vadd.f32 0.0, %v533
      %v535 = vpop.f32.mrb[0].mxu0
      %536 = vdwg.mxu0
      %v537 = vmax.f32 %v507, 0.0
      %v538 = vmax.f32 %v510, 0.0
      %v539 = vmax.f32 %v515, 0.0
      %v540 = vmax.f32 %v518, 0.0
      %v541 = vmax.f32 %v523, 0.0
      %v542 = vmax.f32 %v526, 0.0
      %v543 = vmax.f32 %v531, 0.0
      %v544 = vmax.f32 %v534, 0.0
      %v545 = vpack.c.bf16 %v538, %v537
      %v546 = vpack.c.bf16 %v540, %v539
      %v547 = vpack.c.bf16 %v542, %v541
      %v548 = vpack.c.bf16 %v544, %v543
      %v549 = vld [vmem:[%s4] sm:$0xff]
      %v550 = vld [vmem:[%s4 + $0x8] sm:$0xff]
      %v551 = vld [vmem:[%s4 + $0x10] sm:$0xff]
      %v552 = vld [vmem:[%s4 + $0x18] sm:$0xff]
      %v553 = vld [vmem:[%s4 + $0x20] sm:$0xff]
      %v554 = vld [vmem:[%s4 + $0x28] sm:$0xff]
      %v555 = vld [vmem:[%s4 + $0x30] sm:$0xff]
      %v556 = vld [vmem:[%s4 + $0x38] sm:$0xff]
      %v557 = vld [vmem:[%s4 + $0x40] sm:$0xff]
      %v558 = vld [vmem:[%s4 + $0x48] sm:$0xff]
      %v559 = vld [vmem:[%s4 + $0x50] sm:$0xff]
      %v560 = vld [vmem:[%s4 + $0x58] sm:$0xff]
      %v561 = vld [vmem:[%s4 + $0x60] sm:$0xff]
      %v562 = vld [vmem:[%s4 + $0x68] sm:$0xff]
      %v563 = vld [vmem:[%s4 + $0x70] sm:$0xff]
      %v564 = vld [vmem:[%s4 + $0x78] sm:$0xff]
      %v565 = vld [vmem:[%s4 + $0x80] sm:$0xff]
      %v566 = vld [vmem:[%s4 + $0x88] sm:$0xff]
      %v567 = vld [vmem:[%s4 + $0x90] sm:$0xff]
      %v568 = vld [vmem:[%s4 + $0x98] sm:$0xff]
      %v569 = vld [vmem:[%s4 + $0xa0] sm:$0xff]
      %v570 = vld [vmem:[%s4 + $0xa8] sm:$0xff]
      %v571 = vld [vmem:[%s4 + $0xb0] sm:$0xff]
      %v572 = vld [vmem:[%s4 + $0xb8] sm:$0xff]
      %v573 = vld [vmem:[%s4 + $0xc0] sm:$0xff]
      %v574 = vld [vmem:[%s4 + $0xc8] sm:$0xff]
      %v575 = vld [vmem:[%s4 + $0xd0] sm:$0xff]
      %v576 = vld [vmem:[%s4 + $0xd8] sm:$0xff]
      %v577 = vld [vmem:[%s4 + $0xe0] sm:$0xff]
      %v578 = vld [vmem:[%s4 + $0xe8] sm:$0xff]
      %v579 = vld [vmem:[%s4 + $0xf0] sm:$0xff]
      %v580 = vld [vmem:[%s4 + $0xf8] sm:$0xff]
      %v581 = vpack.c.bf16 %v551, %v549
      %v582 = vpack.c.bf16 %v552, %v550
      %v583 = vpack.c.bf16 %v555, %v553
      %v584 = vpack.c.bf16 %v556, %v554
      %v585 = vpack.c.bf16 %v559, %v557
      %v586 = vpack.c.bf16 %v560, %v558
      %v587 = vpack.c.bf16 %v563, %v561
      %v588 = vpack.c.bf16 %v564, %v562
      %v589 = vpack.c.bf16 %v567, %v565
      %v590 = vpack.c.bf16 %v568, %v566
      %v591 = vpack.c.bf16 %v571, %v569
      %v592 = vpack.c.bf16 %v572, %v570
      %v593 = vpack.c.bf16 %v575, %v573
      %v594 = vpack.c.bf16 %v576, %v574
      %v595 = vpack.c.bf16 %v579, %v577
      %v596 = vpack.c.bf16 %v580, %v578
      %597 = vmatprep.subr.bf16.mxu0 %v582
      %598 = vmatpush1.bf16.msra.mxu0 %v581
      %599 = vmatprep.subr.bf16.mxu0 %v584
      %600 = vmatpush1.bf16.msra.mxu0 %v583
      %601 = vmatprep.subr.bf16.mxu0 %v586
      %602 = vmatpush1.bf16.msra.mxu0 %v585
      %603 = vmatprep.subr.bf16.mxu0 %v588
      %604 = vmatpush1.bf16.msra.mxu0 %v587
      %605 = vmatprep.subr.bf16.mxu0 %v590
      %606 = vmatpush1.bf16.msra.mxu0 %v589
      %607 = vmatprep.subr.bf16.mxu0 %v592
      %608 = vmatpush1.bf16.msra.mxu0 %v591
      %609 = vmatprep.subr.bf16.mxu0 %v594
      %610 = vmatpush1.bf16.msra.mxu0 %v593
      %611 = vmatprep.subr.bf16.mxu0 %v596
      %612 = vmatpush1.bf16.msra.mxu0 %v595
      %613 = vmatprep.subr.bf16.mxu0 0
      %614 = vmatpush1.bf16.msra.mxu0 0
      %615 = vmatprep.subr.bf16.mxu0 0
      %616 = vmatpush1.bf16.msra.mxu0 0
      %617 = vmatprep.subr.bf16.mxu0 0
      %618 = vmatpush1.bf16.msra.mxu0 0
      %619 = vmatprep.subr.bf16.mxu0 0
      %620 = vmatpush1.bf16.msra.mxu0 0
      %621 = vmatprep.subr.bf16.mxu0 0
      %622 = vmatpush1.bf16.msra.mxu0 0
      %623 = vmatprep.subr.bf16.mxu0 0
      %624 = vmatpush1.bf16.msra.mxu0 0
      %625 = vmatprep.subr.bf16.mxu0 0
      %626 = vmatpush1.bf16.msra.mxu0 0
      %627 = vmatprep.subr.bf16.mxu0 0
      %628 = vmatpush1.bf16.msra.mxu0 0
      %629 = vmatprep.mubr.bf16.mxu0 0
      %630 = vmatmul.mubr.bf16.gmra.mrb[0].mxu0 %v545
      %v631 = vpop.f32.mrb[0].mxu0
      %v632 = vadd.f32 0.0, %v631
      %v633 = vpop.f32.mrb[0].mxu0
      %v634 = vadd.f32 0.0, %v633
      %v635 = vpop.f32.mrb[0].mxu0
      %v636 = vadd.f32 0.0, %v635
      %v637 = vpop.f32.mrb[0].mxu0
      %v638 = vadd.f32 0.0, %v637
      %639 = vmatprep.mubr.bf16.mxu0 0
      %640 = vmatmul.mubr.bf16.gmra.mrb[0].mxu0 %v546
      %v641 = vpop.f32.mrb[0].mxu0
      %v642 = vadd.f32 0.0, %v641
      %v643 = vpop.f32.mrb[0].mxu0
      %v644 = vadd.f32 0.0, %v643
      %v645 = vpop.f32.mrb[0].mxu0
      %v646 = vadd.f32 0.0, %v645
      %v647 = vpop.f32.mrb[0].mxu0
      %v648 = vadd.f32 0.0, %v647
      %649 = vmatprep.mubr.bf16.mxu0 0
      %650 = vmatmul.mubr.bf16.gmra.mrb[0].mxu0 %v547
      %v651 = vpop.f32.mrb[0].mxu0
      %v652 = vadd.f32 0.0, %v651
      %v653 = vpop.f32.mrb[0].mxu0
      %v654 = vadd.f32 0.0, %v653
      %v655 = vpop.f32.mrb[0].mxu0
      %v656 = vadd.f32 0.0, %v655
      %v657 = vpop.f32.mrb[0].mxu0
      %v658 = vadd.f32 0.0, %v657
      %659 = vmatprep.mubr.bf16.mxu0 0
      %660 = vmatmul.mubr.bf16.gmra.mrb[0].mxu0 %v548
      %v661 = vpop.f32.mrb[0].mxu0
      %v662 = vadd.f32 0.0, %v661
      %v663 = vpop.f32.mrb[0].mxu0
      %v664 = vadd.f32 0.0, %v663
      %v665 = vpop.f32.mrb[0].mxu0
      %v666 = vadd.f32 0.0, %v665
      %v667 = vpop.f32.mrb[0].mxu0
      %v668 = vadd.f32 0.0, %v667
      %669 = vdwg.mxu0
      %v670 = vld [vmem:[%s385] sm:$0xff]
      %v671 = vld [vmem:[%s385 + $0x8] sm:$0xff]
      %v672 = vld [vmem:[%s385 + $0x10] sm:$0xff]
      %v673 = vld [vmem:[%s385 + $0x18] sm:$0xff]
      %v674 = vld [vmem:[%s385 + $0x20] sm:$0xff]
      %v675 = vld [vmem:[%s385 + $0x28] sm:$0xff]
      %v676 = vld [vmem:[%s385 + $0x30] sm:$0xff]
      %v677 = vld [vmem:[%s385 + $0x38] sm:$0xff]
      %v678 = vld [vmem:[%s385 + $0x40] sm:$0xff]
      %v679 = vld [vmem:[%s385 + $0x48] sm:$0xff]
      %v680 = vld [vmem:[%s385 + $0x50] sm:$0xff]
      %v681 = vld [vmem:[%s385 + $0x58] sm:$0xff]
      %v682 = vld [vmem:[%s385 + $0x60] sm:$0xff]
      %v683 = vld [vmem:[%s385 + $0x68] sm:$0xff]
      %v684 = vld [vmem:[%s385 + $0x70] sm:$0xff]
      %v685 = vld [vmem:[%s385 + $0x78] sm:$0xff]
      %v686 = vsub.f32 %v632, %v670
      %v687 = vsub.f32 %v634, %v671
      %v688 = vsub.f32 %v636, %v672
      %v689 = vsub.f32 %v638, %v673
      %v690 = vsub.f32 %v642, %v674
      %v691 = vsub.f32 %v644, %v675
      %v692 = vsub.f32 %v646, %v676
      %v693 = vsub.f32 %v648, %v677
      %v694 = vsub.f32 %v652, %v678
      %v695 = vsub.f32 %v654, %v679
      %v696 = vsub.f32 %v656, %v680
      %v697 = vsub.f32 %v658, %v681
      %v698 = vsub.f32 %v662, %v682
      %v699 = vsub.f32 %v664, %v683
      %v700 = vsub.f32 %v666, %v684
      %v701 = vsub.f32 %v668, %v685
      %v702 = vmul.f32 %v686, %v686
      %v703 = vmul.f32 %v687, %v687
      %v704 = vmul.f32 %v688, %v688
      %v705 = vmul.f32 %v689, %v689
      %v706 = vmul.f32 %v690, %v690
      %v707 = vmul.f32 %v691, %v691
      %v708 = vmul.f32 %v692, %v692
      %v709 = vmul.f32 %v693, %v693
      %v710 = vmul.f32 %v694, %v694
      %v711 = vmul.f32 %v695, %v695
      %v712 = vmul.f32 %v696, %v696
      %v713 = vmul.f32 %v697, %v697
      %v714 = vmul.f32 %v698, %v698
      %v715 = vmul.f32 %v699, %v699
      %v716 = vmul.f32 %v700, %v700
      %v717 = vmul.f32 %v701, %v701
      %v718 = vadd.f32 %v702, %v703
      %719 = vadd.xlane.f32.xlu0 %v718
      %v720 = vpop.xlane.xlu0 %719
      %v721 = vadd.f32 %v704, %v705
      %722 = vadd.xlane.f32.xlu0 %v721
      %v723 = vpop.xlane.xlu0 %722
      %v724 = vadd.f32 %v706, %v707
      %725 = vadd.xlane.f32.xlu0 %v724
      %v726 = vpop.xlane.xlu0 %725
      %v727 = vadd.f32 %v708, %v709
      %728 = vadd.xlane.f32.xlu0 %v727
      %v729 = vpop.xlane.xlu0 %728
      %v730 = vadd.f32 %v710, %v711
      %731 = vadd.xlane.f32.xlu0 %v730
      %v732 = vpop.xlane.xlu0 %731
      %v733 = vadd.f32 %v712, %v713
      %734 = vadd.xlane.f32.xlu0 %v733
      %v735 = vpop.xlane.xlu0 %734
      %v736 = vadd.f32 %v714, %v715
      %737 = vadd.xlane.f32.xlu0 %v736
      %v738 = vpop.xlane.xlu0 %737
      %v739 = vadd.f32 %v716, %v717
      %740 = vadd.xlane.f32.xlu0 %v739
      %v741 = vpop.xlane.xlu0 %740
      %v742 = vrcp.pop 256.0
      %v743 = vmul.f32 %v720, %v742
      %v744 = vmul.f32 %v723, %v742
      %v745 = vmul.f32 %v726, %v742
      %v746 = vmul.f32 %v729, %v742
      %v747 = vmul.f32 %v732, %v742
      %v748 = vmul.f32 %v735, %v742
      %v749 = vmul.f32 %v738, %v742
      %v750 = vmul.f32 %v741, %v742
      %v751 = vld [vmem:[%s398] sm:$0x1]
      %v752 = vmul.f32 %v743, %v442
      %v753 = vmul.f32 %v744, %v443
      %v754 = vmul.f32 %v745, %v442
      %v755 = vmul.f32 %v746, %v443
      %v756 = vmul.f32 %v747, %v442
      %v757 = vmul.f32 %v748, %v443
      %v758 = vmul.f32 %v749, %v442
      %v759 = vmul.f32 %v750, %v443
      %vm760 = vcmask 7168
      %v761 = vsel %vm760, %v752, 0.0
      %v762 = vsel %vm760, %v753, 0.0
      %v763 = vadd.f32 %v761, %v762
      %v764 = vsel %vm760, %v754, 0.0
      %v765 = vadd.f32 %v763, %v764
      %v766 = vsel %vm760, %v755, 0.0
      %v767 = vadd.f32 %v765, %v766
      %v768 = vsel %vm760, %v756, 0.0
      %v769 = vadd.f32 %v767, %v768
      %v770 = vsel %vm760, %v757, 0.0
      %v771 = vadd.f32 %v769, %v770
      %v772 = vsel %vm760, %v758, 0.0
      %v773 = vadd.f32 %v771, %v772
      %v774 = vsel %vm760, %v759, 0.0
      %v775 = vadd.f32 %v773, %v774
      %776 = vadd.xlane.f32.xlu0 %v775
      %v777 = vpop.xlane.xlu0 %776
      %v778 = vrot.slane %v777, 4
      %v779 = vadd.f32 %v777, %v778
      %v780 = vrot.slane %v779, 2
      %v781 = vadd.f32 %v779, %v780
      %v782 = vrot.slane %v781, 1
      %v783 = vadd.f32 %v781, %v782
      %s784 = vtos %v783
      %v785 = vstv %s784
      %v786 = vadd.f32 %v751, %v785
      %vm787 = vcmask 0
      %788 = vst.msk [vmem:[%s398] sm:$0x1] %vm787, %v786
      %v789 = vld [vmem:[%s401] sm:$0x1]
      %v790 = vsel %vm760, %v442, 0.0
      %v791 = vsel %vm760, %v443, 0.0
      %v792 = vadd.f32 %v790, %v791
      %793 = vadd.xlane.f32.xlu0 %v792
      %v794 = vpop.xlane.xlu0 %793
      %v795 = vrot.slane %v794, 4
      %v796 = vadd.f32 %v794, %v795
      %v797 = vrot.slane %v796, 2
      %v798 = vadd.f32 %v796, %v797
      %v799 = vrot.slane %v798, 1
      %v800 = vadd.f32 %v798, %v799
      %s801 = vtos %v800
      %s802 = smul.f32 %s801, 4.0
      %v803 = vstv %s802
      %v804 = vadd.f32 %v789, %v803
      %805 = vst.msk [vmem:[%s401] sm:$0x1] %vm787, %v804
      %v806 = vadd.f32 %v537, %v538
      %v807 = vrot.slane %v806, 4
      %v808 = vadd.f32 %v806, %v807
      %v809 = vrot.slane %v808, 2
      %v810 = vadd.f32 %v808, %v809
      %v811 = vrot.slane %v810, 1
      %v812 = vadd.f32 %v810, %v811
      %v813 = vadd.f32 %v539, %v540
      %v814 = vrot.slane %v813, 4
      %v815 = vadd.f32 %v813, %v814
      %v816 = vrot.slane %v815, 2
      %v817 = vadd.f32 %v815, %v816
      %v818 = vrot.slane %v817, 1
      %v819 = vadd.f32 %v817, %v818
      %v820 = vadd.f32 %v541, %v542
      %v821 = vrot.slane %v820, 4
      %v822 = vadd.f32 %v820, %v821
      %v823 = vrot.slane %v822, 2
      %v824 = vadd.f32 %v822, %v823
      %v825 = vrot.slane %v824, 1
      %v826 = vadd.f32 %v824, %v825
      %v827 = vadd.f32 %v543, %v544
      %v828 = vrot.slane %v827, 4
      %v829 = vadd.f32 %v827, %v828
      %v830 = vrot.slane %v829, 2
      %v831 = vadd.f32 %v829, %v830
      %v832 = vrot.slane %v831, 1
      %v833 = vadd.f32 %v831, %v832
      %v834 = vrcp.pop 16.0
      %v835 = vmul.f32 %v812, %v834
      %v836 = vmul.f32 %v819, %v834
      %v837 = vmul.f32 %v826, %v834
      %v838 = vmul.f32 %v833, %v834
      %v839 = vpack.c.bf16 %v835, %v835
      %v840 = vpack.c.bf16 %v836, %v836
      %v841 = vpack.c.bf16 %v837, %v837
      %v842 = vpack.c.bf16 %v838, %v838
      %v843 = vld [vmem:[%s5] sm:$0xff]
      %v844 = vld [vmem:[%s5 + $0x8] sm:$0xff]
      %v845 = vld [vmem:[%s5 + $0x10] sm:$0xff]
      %v846 = vld [vmem:[%s5 + $0x18] sm:$0xff]
      %v847 = vld [vmem:[%s5 + $0x20] sm:$0xff]
      %v848 = vld [vmem:[%s5 + $0x28] sm:$0xff]
      %v849 = vld [vmem:[%s5 + $0x30] sm:$0xff]
      %v850 = vld [vmem:[%s5 + $0x38] sm:$0xff]
      %v851 = vld [vmem:[%s5 + $0x40] sm:$0xff]
      %v852 = vld [vmem:[%s5 + $0x48] sm:$0xff]
      %v853 = vld [vmem:[%s5 + $0x50] sm:$0xff]
      %v854 = vld [vmem:[%s5 + $0x58] sm:$0xff]
      %v855 = vld [vmem:[%s5 + $0x60] sm:$0xff]
      %v856 = vld [vmem:[%s5 + $0x68] sm:$0xff]
      %v857 = vld [vmem:[%s5 + $0x70] sm:$0xff]
      %v858 = vld [vmem:[%s5 + $0x78] sm:$0xff]
      %v859 = vpack.c.bf16 %v844, %v843
      %v860 = vpack.c.bf16 %v846, %v845
      %v861 = vpack.c.bf16 %v848, %v847
      %v862 = vpack.c.bf16 %v850, %v849
      %v863 = vpack.c.bf16 %v852, %v851
      %v864 = vpack.c.bf16 %v854, %v853
      %v865 = vpack.c.bf16 %v856, %v855
      %v866 = vpack.c.bf16 %v858, %v857
      %v871 = vunpack.c.l.b16 %v839
      %v872 = vunpack.c.l.b16 %v840
      %v873 = vunpack.c.l.b16 %v841
      %v874 = vunpack.c.l.b16 %v842
      %vm875 = vcmask 1041409
      %v876 = vsel %vm875, %v872, %v871
      %vm877 = vcmask 1042434
      %v878 = vsel %vm877, %v873, %v876
      %vm879 = vcmask 1043459
      %v880 = vsel %vm879, %v874, %v878
      %v881 = vpack.c.b16 %v880, %v880
      %883 = vmatprep.subr.bf16.mxu0 0
      %884 = vmatpush1.bf16.msra.mxu0 %v859
      %885 = vmatprep.subr.bf16.mxu0 0
      %886 = vmatpush1.bf16.msra.mxu0 %v860
      %887 = vmatprep.subr.bf16.mxu0 0
      %888 = vmatpush1.bf16.msra.mxu0 %v861
      %889 = vmatprep.subr.bf16.mxu0 0
      %890 = vmatpush1.bf16.msra.mxu0 %v862
      %891 = vmatprep.subr.bf16.mxu0 0
      %892 = vmatpush1.bf16.msra.mxu0 %v863
      %893 = vmatprep.subr.bf16.mxu0 0
      %894 = vmatpush1.bf16.msra.mxu0 %v864
      %895 = vmatprep.subr.bf16.mxu0 0
      %896 = vmatpush1.bf16.msra.mxu0 %v865
      %897 = vmatprep.subr.bf16.mxu0 0
      %898 = vmatpush1.bf16.msra.mxu0 %v866
      %899 = vmatprep.subr.bf16.mxu0 0
      %900 = vmatpush1.bf16.msra.mxu0 0
      %901 = vmatprep.subr.bf16.mxu0 0
      %902 = vmatpush1.bf16.msra.mxu0 0
      %903 = vmatprep.subr.bf16.mxu0 0
      %904 = vmatpush1.bf16.msra.mxu0 0
      %905 = vmatprep.subr.bf16.mxu0 0
      %906 = vmatpush1.bf16.msra.mxu0 0
      %907 = vmatprep.subr.bf16.mxu0 0
      %908 = vmatpush1.bf16.msra.mxu0 0
      %909 = vmatprep.subr.bf16.mxu0 0
      %910 = vmatpush1.bf16.msra.mxu0 0
      %911 = vmatprep.subr.bf16.mxu0 0
      %912 = vmatpush1.bf16.msra.mxu0 0
      %913 = vmatprep.subr.bf16.mxu0 0
      %914 = vmatpush1.bf16.msra.mxu0 0
      %915 = vmatprep.mubr.bf16.mxu0 0
      %916 = vmatmul.mubr.bf16.gmra.mrb[0].mxu0 %v881
      %v917 = vpop.f32.mrb[0].mxu0
      %v918 = vadd.f32 0.0, %v917
      %v919 = vpop.f32.mrb[0].mxu0
      %v920 = vpop.f32.mrb[0].mxu0
      %v921 = vpop.f32.mrb[0].mxu0
      %922 = vdwg.mxu0
      %v925 = vunpack.c.l.s4 1966171168
      %v926 = vunpack.c.0.s8 %v925
      %v927 = vlaneseq
      %v928 = vshrl.u32 %v927, 7
      %v929 = vsub.s32 %v926, %v928
      %v930 = vrot.slane %v918, %v929
      %v931 = vcombine.high %v930, %v930
      %v933 = vunpack.c.l.s4 1966171168
      %v934 = vunpack.c.0.s8 %v933
      %v935 = vlaneseq
      %v936 = vshrl.u32 %v935, 7
      %v937 = vsub.s32 %v934, %v936
      %v938 = vrot.slane %v930, %v937
      %v940 = vunpack.c.l.s4 1966171168
      %v941 = vunpack.c.0.s8 %v940
      %v942 = vlaneseq
      %v943 = vshrl.u32 %v942, 7
      %v944 = vsub.s32 %v941, %v943
      %v945 = vrot.slane %v931, %v944
      %v946 = vcombine.high %v938, %v938
      %v947 = vcombine.high %v945, %v945
      %952 = vst [vmem:[%s394] sm:$0x1] %v938
      %953 = vst [vmem:[%s394 + $0x1] sm:$0x1] %v945
      %954 = vst [vmem:[%s394 + $0x2] sm:$0x1] %v946
      %955 = vst [vmem:[%s394 + $0x3] sm:$0x1] %v947
      %s956 = smul.u32 4, %s25
      %p957 = scmp.lt.s32.totalorder %s24, 1
      %s958 = scalar_select %p957, %s24, 1
      %p959 = scmp.lt.s32.totalorder %s956, 3
      %s960 = scalar_select %p959, %s956, 3
      %s961 = smul.addr %s958, 4
      %s962 = sadd.s32 %s960, %s961
      %s963 = scalar_lea.vmem %s6, %s962
      %p964 = scmp.lt.s32.totalorder %s24, 1
      %s965 = scalar_select %p964, %s24, 1
      %s966 = scalar_lea.vmem %s7, %s965
      %p967 = scmp.lt.s32.totalorder %s24, 1
      %s968 = scalar_select %p967, %s24, 1
      %s969 = scalar_lea.vmem %s8, %s968
      // Predicated region
      $region49: #{moco_forward.11} parent=43 // pred_check
        %p970 = pneg %p192
      $region50: #{moco_forward.11} parent=43 // pred_check_branch
        %972 = sbr.rel (%p970) target = $region52
      $region51: #{moco_forward.11} parent=43 // pred_region
        %s973 = smul.u32 4, %s25
      $region52: #{moco_forward.11} parent=43 // pred_fallthru
        _
      // Predicated region
      $region53: #{moco_forward.11} parent=43 // pred_check
        %p974 = pneg %p218
      $region54: #{moco_forward.11} parent=43 // pred_check_branch
        %976 = sbr.rel (%p974) target = $region56
      $region55: #{moco_forward.11} parent=43 // pred_region
        _
      $region56: #{moco_forward.11} parent=43 // pred_fallthru
        _
      // Predicated region
      $region57: #{moco_forward.11} parent=43 // pred_check
        %p977 = pneg %p244
      $region58: #{moco_forward.11} parent=43 // pred_check_branch
        %979 = sbr.rel (%p977) target = $region60
      $region59: #{moco_forward.11} parent=43 // pred_region
        _
      $region60: #{moco_forward.11} parent=43 // pred_fallthru
        _
    $region44: #{moco_forward.11} parent=5 // pred_fallthru
      _
    %p980 = scmp.le.s32.totalorder 2, %s15
    // Predicated region
    $region61: #{moco_forward.11} parent=5 // pred_check
      %p981 = pneg %p980
    $region62: #{moco_forward.11} parent=5 // pred_check_branch
      %983 = sbr.rel (%p981) target = $region64
    $region63: #{moco_forward.11} parent=5 // pred_region
      %s984 = ssub.s32 %s15, 2
      // Predicated region
      $region65: #{moco_forward.11} parent=63 // pred_check
        %p985 = pneg %p198
      $region66: #{moco_forward.11} parent=63 // pred_check_branch
        %987 = sbr.rel (%p985) target = $region68
      $region67: #{moco_forward.11} parent=63 // pred_region
        %s988 = smul.u32 4, %s27
        %p989 = scmp.lt.s32.totalorder %s26, 1
        %s990 = scalar_select %p989, %s26, 1
        %p991 = scmp.lt.s32.totalorder %s988, 3
        %s992 = scalar_select %p991, %s988, 3
        %s993 = smul.addr %s990, 4
        %s994 = sadd.s32 %s992, %s993
        %s995 = scalar_lea.vmem %s6, %s994
      $region68: #{moco_forward.11} parent=63 // pred_fallthru
        _
      // Predicated region
      $region69: #{moco_forward.11} parent=63 // pred_check
        %p996 = pneg %p224
      $region70: #{moco_forward.11} parent=63 // pred_check_branch
        %998 = sbr.rel (%p996) target = $region72
      $region71: #{moco_forward.11} parent=63 // pred_region
        %p999 = scmp.lt.s32.totalorder %s26, 1
        %s1000 = scalar_select %p999, %s26, 1
        %s1001 = scalar_lea.vmem %s7, %s1000
      $region72: #{moco_forward.11} parent=63 // pred_fallthru
        _
      // Predicated region
      $region73: #{moco_forward.11} parent=63 // pred_check
        %p1002 = pneg %p250
      $region74: #{moco_forward.11} parent=63 // pred_check_branch
        %1004 = sbr.rel (%p1002) target = $region76
      $region75: #{moco_forward.11} parent=63 // pred_region
        %p1005 = scmp.lt.s32.totalorder %s26, 1
        %s1006 = scalar_select %p1005, %s26, 1
        %s1007 = scalar_lea.vmem %s8, %s1006
      $region76: #{moco_forward.11} parent=63 // pred_fallthru
        _
    $region64: #{moco_forward.11} parent=5 // pred_fallthru
      _
  $region6: #{moco_forward.11} parent=0 // loop_footer
    %s19 = sadd.s32 1, %s15
  $region7: #{moco_forward.11} parent=0 // loop_footer_branch
    %14 = sbr.rel target = $region3
  $region8: #{moco_forward.11} parent=0 // loop_exit
    _

// kernel: moco_forward.8
$region0: #{moco_forward.8}
  #allocation0 [shape = 'u32[]', space=smem, size = 0x4, offset = 0x4, fixed_abs, tag = 'smem constant byte address 0x4 - core index']
  #allocation1 [shape = 'u32[144,128]{1,0:T(1,128)}', space=vmem, size = 0x12000, scoped, tag = 'internal scratch']
  %s0 = inlined_call_operand.vmem [shape: f32[2,4,128], index: 0, kind: input, shape index: {}]
  %s1 = inlined_call_operand.vmem [shape: f32[128,256], index: 1, kind: input, shape index: {}]
  %s2 = inlined_call_operand.vmem [shape: f32[1,256], index: 2, kind: input, shape index: {}]
  %s3 = inlined_call_operand.vmem [shape: f32[1,256], index: 3, kind: input, shape index: {}]
  %s4 = inlined_call_operand.vmem [shape: f32[256,128], index: 4, kind: input, shape index: {}]
  %s5 = inlined_call_operand.vmem [shape: f32[2,4,128], index: 5, kind: output, shape index: {}]
  %s6 = sld [smem:[#allocation0]]
  $region53: #{moco_forward.8} parent=0
    _
  %s8 = ssub.s32 1, %s6
  %s9 = scalar_select 0, %s8, %s6
  loop: start=0, step=1, limit=4
  $region2: #{moco_forward.8} parent=0 // loop_pre_header
    _
  $region3: #{moco_forward.8} parent=0 // loop_header
    %s11 = sphi 0, %s15
    %p12 = scmp.ge.s32.totalorder %s11, 4
    %s21 = sphi 0, %s23
    %s24 = sphi 0, %s21
    %s25 = sphi 0, %s24
    %s41 = sphi 0, %s25
    %s45 = sphi 0, %s45
    %s47 = sphi 0, %s45
    %s48 = sphi 0, %s47
    %s62 = sphi 0, %s48
    %s66 = sphi 0, %s66
    %s68 = sphi 0, %s66
    %s69 = sphi 0, %s68
    %s83 = sphi 0, %s69
    %s87 = sphi 0, %s87
    %s89 = sphi 0, %s87
    %s90 = sphi 0, %s89
    %s104 = sphi 0, %s90
    %s108 = sphi 0, %s108
    %s110 = sphi 0, %s108
    %s111 = sphi 0, %s110
    %s125 = sphi 0, %s111
    %s131 = sphi 0, %s133
    %s134 = sphi 0, %s131
    %s135 = sphi 0, %s134
    %s151 = sphi 0, %s135
  $region4: #{moco_forward.8} parent=0 // loop_header_branch
    %14 = sbr.rel (%p12) target = $region8
  $region5: #{moco_forward.8} parent=0 // loop_body
    %s16 = ssub.s32 %s11, 1
    %s17 = ssub.s32 %s11, 2
    %s18 = sadd.s32 %s11, 1
    %s19 = ssub.s32 %s11, %s18
    %p20 = scmp.eq.s32.totalorder %s19, 0
    %s22 = sadd.s32 %s21, 1
    %s23 = scalar_select %p20, %s21, %s22
    %p26 = pneg %p20
    %p27 = scmp.eq.s32.totalorder %s11, 1
    %p28 = por %p26, %p27
    %p29 = scmp.ne.s32.totalorder %s21, %s24
    %p30 = scmp.eq.s32.totalorder %s11, 0
    %p31 = por %p29, %p30
    %p32 = scmp.ne.s32.totalorder %s21, %s24
    %p33 = scmp.eq.s32.totalorder %s16, 1
    %p34 = por %p32, %p33
    %p35 = scmp.ne.s32.totalorder %s24, %s25
    %p36 = scmp.eq.s32.totalorder %s16, 0
    %p37 = por %p35, %p36
    %p38 = scmp.ne.s32.totalorder %s24, %s25
    %p39 = scmp.eq.s32.totalorder %s17, 1
    %p40 = por %p38, %p39
    %p42 = scmp.ne.s32.totalorder %s25, %s41
    %p43 = scmp.eq.s32.totalorder %s17, 0
    %p44 = por %p42, %p43
    %s46 = sadd.s32 %s45, 1
    %p49 = scmp.eq.s32.totalorder %s11, 1
    %p50 = scmp.ne.s32.totalorder %s45, %s47
    %p51 = scmp.eq.s32.totalorder %s11, 0
    %p52 = por %p50, %p51
    %p53 = scmp.ne.s32.totalorder %s45, %s47
    %p54 = scmp.eq.s32.totalorder %s16, 1
    %p55 = por %p53, %p54
    %p56 = scmp.ne.s32.totalorder %s47, %s48
    %p57 = scmp.eq.s32.totalorder %s16, 0
    %p58 = por %p56, %p57
    %p59 = scmp.ne.s32.totalorder %s47, %s48
    %p60 = scmp.eq.s32.totalorder %s17, 1
    %p61 = por %p59, %p60
    %p63 = scmp.ne.s32.totalorder %s48, %s62
    %p64 = scmp.eq.s32.totalorder %s17, 0
    %p65 = por %p63, %p64
    %s67 = sadd.s32 %s66, 1
    %p70 = scmp.eq.s32.totalorder %s11, 1
    %p71 = scmp.ne.s32.totalorder %s66, %s68
    %p72 = scmp.eq.s32.totalorder %s11, 0
    %p73 = por %p71, %p72
    %p74 = scmp.ne.s32.totalorder %s66, %s68
    %p75 = scmp.eq.s32.totalorder %s16, 1
    %p76 = por %p74, %p75
    %p77 = scmp.ne.s32.totalorder %s68, %s69
    %p78 = scmp.eq.s32.totalorder %s16, 0
    %p79 = por %p77, %p78
    %p80 = scmp.ne.s32.totalorder %s68, %s69
    %p81 = scmp.eq.s32.totalorder %s17, 1
    %p82 = por %p80, %p81
    %p84 = scmp.ne.s32.totalorder %s69, %s83
    %p85 = scmp.eq.s32.totalorder %s17, 0
    %p86 = por %p84, %p85
    %s88 = sadd.s32 %s87, 1
    %p91 = scmp.eq.s32.totalorder %s11, 1
    %p92 = scmp.ne.s32.totalorder %s87, %s89
    %p93 = scmp.eq.s32.totalorder %s11, 0
    %p94 = por %p92, %p93
    %p95 = scmp.ne.s32.totalorder %s87, %s89
    %p96 = scmp.eq.s32.totalorder %s16, 1
    %p97 = por %p95, %p96
    %p98 = scmp.ne.s32.totalorder %s89, %s90
    %p99 = scmp.eq.s32.totalorder %s16, 0
    %p100 = por %p98, %p99
    %p101 = scmp.ne.s32.totalorder %s89, %s90
    %p102 = scmp.eq.s32.totalorder %s17, 1
    %p103 = por %p101, %p102
    %p105 = scmp.ne.s32.totalorder %s90, %s104
    %p106 = scmp.eq.s32.totalorder %s17, 0
    %p107 = por %p105, %p106
    %s109 = sadd.s32 %s108, 1
    %p112 = scmp.eq.s32.totalorder %s11, 1
    %p113 = scmp.ne.s32.totalorder %s108, %s110
    %p114 = scmp.eq.s32.totalorder %s11, 0
    %p115 = por %p113, %p114
    %p116 = scmp.ne.s32.totalorder %s108, %s110
    %p117 = scmp.eq.s32.totalorder %s16, 1
    %p118 = por %p116, %p117
    %p119 = scmp.ne.s32.totalorder %s110, %s111
    %p120 = scmp.eq.s32.totalorder %s16, 0
    %p121 = por %p119, %p120
    %p122 = scmp.ne.s32.totalorder %s110, %s111
    %p123 = scmp.eq.s32.totalorder %s17, 1
    %p124 = por %p122, %p123
    %p126 = scmp.ne.s32.totalorder %s111, %s125
    %p127 = scmp.eq.s32.totalorder %s17, 0
    %p128 = por %p126, %p127
    %s129 = ssub.s32 %s11, %s18
    %p130 = scmp.eq.s32.totalorder %s129, 0
    %s132 = sadd.s32 %s131, 1
    %s133 = scalar_select %p130, %s131, %s132
    %p136 = pneg %p130
    %p137 = scmp.eq.s32.totalorder %s11, 1
    %p138 = por %p136, %p137
    %p139 = scmp.ne.s32.totalorder %s131, %s134
    %p140 = scmp.eq.s32.totalorder %s11, 0
    %p141 = por %p139, %p140
    %p142 = scmp.ne.s32.totalorder %s131, %s134
    %p143 = scmp.eq.s32.totalorder %s16, 1
    %p144 = por %p142, %p143
    %p145 = scmp.ne.s32.totalorder %s134, %s135
    %p146 = scmp.eq.s32.totalorder %s16, 0
    %p147 = por %p145, %p146
    %p148 = scmp.ne.s32.totalorder %s134, %s135
    %p149 = scmp.eq.s32.totalorder %s17, 1
    %p150 = por %p148, %p149
    %p152 = scmp.ne.s32.totalorder %s135, %s151
    %p153 = scmp.eq.s32.totalorder %s17, 0
    %p154 = por %p152, %p153
    %p155 = scmp.le.s32.totalorder 1, %s11
    %p156 = scmp.lt.s32.totalorder %s11, 3
    %p157 = pnand %p155, %p156
    %p158 = pneg %p157
    // Predicated region
    $region9: #{moco_forward.8} parent=5 // pred_check
      _
    $region10: #{moco_forward.8} parent=5 // pred_check_branch
      %160 = sbr.rel (%p157) target = $region12
    $region11: #{moco_forward.8} parent=5 // pred_region
      %s161 = ssub.s32 %s11, 1
      // Predicated region
      $region13: #{moco_forward.8} parent=11 // pred_check
        %p162 = pneg %p58
      $region14: #{moco_forward.8} parent=11 // pred_check_branch
        %164 = sbr.rel (%p162) target = $region16
      $region15: #{moco_forward.8} parent=11 // pred_region
        _
      $region16: #{moco_forward.8} parent=11 // pred_fallthru
        _
      // Predicated region
      $region17: #{moco_forward.8} parent=11 // pred_check
        %p165 = pneg %p79
      $region18: #{moco_forward.8} parent=11 // pred_check_branch
        %167 = sbr.rel (%p165) target = $region20
      $region19: #{moco_forward.8} parent=11 // pred_region
        _
      $region20: #{moco_forward.8} parent=11 // pred_fallthru
        _
      // Predicated region
      $region21: #{moco_forward.8} parent=11 // pred_check
        %p168 = pneg %p100
      $region22: #{moco_forward.8} parent=11 // pred_check_branch
        %170 = sbr.rel (%p168) target = $region24
      $region23: #{moco_forward.8} parent=11 // pred_region
        _
      $region24: #{moco_forward.8} parent=11 // pred_fallthru
        _
      // Predicated region
      $region25: #{moco_forward.8} parent=11 // pred_check
        %p171 = pneg %p121
      $region26: #{moco_forward.8} parent=11 // pred_check_branch
        %173 = sbr.rel (%p171) target = $region28
      $region27: #{moco_forward.8} parent=11 // pred_region
        _
      $region28: #{moco_forward.8} parent=11 // pred_fallthru
        _
    $region12: #{moco_forward.8} parent=5 // pred_fallthru
      _
    %p174 = scmp.lt.s32.totalorder %s11, 2
    // Predicated region
    $region29: #{moco_forward.8} parent=5 // pred_check
      %p175 = pneg %p174
    $region30: #{moco_forward.8} parent=5 // pred_check_branch
      %177 = sbr.rel (%p175) target = $region32
    $region31: #{moco_forward.8} parent=5 // pred_region
      // Predicated region
      $region33: #{moco_forward.8} parent=31 // pred_check
        %p178 = pneg %p31
      $region34: #{moco_forward.8} parent=31 // pred_check_branch
        %180 = sbr.rel (%p178) target = $region36
      $region35: #{moco_forward.8} parent=31 // pred_region
        %p181 = scmp.lt.s32.totalorder %s11, 1
        %s182 = scalar_select %p181, %s11, 1
        %s183 = smul.addr %s182, 4
        %s184 = scalar_lea.vmem %s0, %s183
      $region36: #{moco_forward.8} parent=31 // pred_fallthru
        _
    $region32: #{moco_forward.8} parent=5 // pred_fallthru
      _
    %p185 = scmp.le.s32.totalorder 1, %s11
    %p186 = scmp.lt.s32.totalorder %s11, 3
    %p187 = pnand %p185, %p186
    %p188 = pneg %p187
    // Predicated region
    $region37: #{moco_forward.8} parent=5 // pred_check
      _
    $region38: #{moco_forward.8} parent=5 // pred_check_branch
      %190 = sbr.rel (%p187) target = $region40
    $region39: #{moco_forward.8} parent=5 // pred_region
      %s191 = ssub.s32 %s11, 1
      %p192 = scmp.lt.s32.totalorder %s16, 1
      %s193 = scalar_select %p192, %s16, 1
      %s194 = smul.addr %s193, 4
      %s195 = scalar_lea.vmem %s0, %s194
      %p196 = pneg %p37
      %p197 = pneg %p34
      %p198 = pneg %p58
      %p199 = pneg %p55
      %p200 = pneg %p79
      %p201 = pneg %p76
      %p202 = pneg %p100
      %p203 = pneg %p97
      %p204 = pneg %p121
      %p205 = pneg %p118
      %p206 = pneg %p147
      %p207 = pneg %p144
      %p208 = scmp.lt.s32.totalorder %s16, 1
      %s209 = scalar_select %p208, %s16, 1
      %s210 = smul.addr %s209, 4
      %s211 = scalar_lea.vmem %s5, %s210
      %p212 = scmp.lt.s32.totalorder %s16, 1
      %s213 = scalar_select %p212, %s16, 1
      %s214 = smul.addr %s213, 4
      %s215 = scalar_lea.vmem %s0, %s214
      %p216 = scmp.lt.s32.totalorder %s16, 1
      %s217 = scalar_select %p216, %s16, 1
      %s218 = smul.addr %s217, 4
      %s219 = scalar_lea.vmem %s5, %s218
      %v221 = vld [vmem:[%s215] sm:$0xf]
      %v222 = vpack.c.bf16 %v221, %v221
      %v223 = vld [vmem:[%s1] sm:$0xff]
      %v224 = vld [vmem:[%s1 + $0x8] sm:$0xff]
      %v225 = vld [vmem:[%s1 + $0x10] sm:$0xff]
      %v226 = vld [vmem:[%s1 + $0x18] sm:$0xff]
      %v227 = vld [vmem:[%s1 + $0x20] sm:$0xff]
      %v228 = vld [vmem:[%s1 + $0x28] sm:$0xff]
      %v229 = vld [vmem:[%s1 + $0x30] sm:$0xff]
      %v230 = vld [vmem:[%s1 + $0x38] sm:$0xff]
      %v231 = vld [vmem:[%s1 + $0x40] sm:$0xff]
      %v232 = vld [vmem:[%s1 + $0x48] sm:$0xff]
      %v233 = vld [vmem:[%s1 + $0x50] sm:$0xff]
      %v234 = vld [vmem:[%s1 + $0x58] sm:$0xff]
      %v235 = vld [vmem:[%s1 + $0x60] sm:$0xff]
      %v236 = vld [vmem:[%s1 + $0x68] sm:$0xff]
      %v237 = vld [vmem:[%s1 + $0x70] sm:$0xff]
      %v238 = vld [vmem:[%s1 + $0x78] sm:$0xff]
      %v239 = vld [vmem:[%s1 + $0x80] sm:$0xff]
      %v240 = vld [vmem:[%s1 + $0x88] sm:$0xff]
      %v241 = vld [vmem:[%s1 + $0x90] sm:$0xff]
      %v242 = vld [vmem:[%s1 + $0x98] sm:$0xff]
      %v243 = vld [vmem:[%s1 + $0xa0] sm:$0xff]
      %v244 = vld [vmem:[%s1 + $0xa8] sm:$0xff]
      %v245 = vld [vmem:[%s1 + $0xb0] sm:$0xff]
      %v246 = vld [vmem:[%s1 + $0xb8] sm:$0xff]
      %v247 = vld [vmem:[%s1 + $0xc0] sm:$0xff]
      %v248 = vld [vmem:[%s1 + $0xc8] sm:$0xff]
      %v249 = vld [vmem:[%s1 + $0xd0] sm:$0xff]
      %v250 = vld [vmem:[%s1 + $0xd8] sm:$0xff]
      %v251 = vld [vmem:[%s1 + $0xe0] sm:$0xff]
      %v252 = vld [vmem:[%s1 + $0xe8] sm:$0xff]
      %v253 = vld [vmem:[%s1 + $0xf0] sm:$0xff]
      %v254 = vld [vmem:[%s1 + $0xf8] sm:$0xff]
      %v255 = vpack.c.bf16 %v225, %v223
      %v256 = vpack.c.bf16 %v226, %v224
      %v257 = vpack.c.bf16 %v229, %v227
      %v258 = vpack.c.bf16 %v230, %v228
      %v259 = vpack.c.bf16 %v233, %v231
      %v260 = vpack.c.bf16 %v234, %v232
      %v261 = vpack.c.bf16 %v237, %v235
      %v262 = vpack.c.bf16 %v238, %v236
      %v263 = vpack.c.bf16 %v241, %v239
      %v264 = vpack.c.bf16 %v242, %v240
      %v265 = vpack.c.bf16 %v245, %v243
      %v266 = vpack.c.bf16 %v246, %v244
      %v267 = vpack.c.bf16 %v249, %v247
      %v268 = vpack.c.bf16 %v250, %v248
      %v269 = vpack.c.bf16 %v253, %v251
      %v270 = vpack.c.bf16 %v254, %v252
      %271 = vmatprep.subr.bf16.mxu0 %v256
      %272 = vmatpush1.bf16.msra.mxu0 %v255
      %273 = vmatprep.subr.bf16.mxu0 %v258
      %274 = vmatpush1.bf16.msra.mxu0 %v257
      %275 = vmatprep.subr.bf16.mxu0 %v260
      %276 = vmatpush1.bf16.msra.mxu0 %v259
      %277 = vmatprep.subr.bf16.mxu0 %v262
      %278 = vmatpush1.bf16.msra.mxu0 %v261
      %279 = vmatprep.subr.bf16.mxu0 %v264
      %280 = vmatpush1.bf16.msra.mxu0 %v263
      %281 = vmatprep.subr.bf16.mxu0 %v266
      %282 = vmatpush1.bf16.msra.mxu0 %v265
      %283 = vmatprep.subr.bf16.mxu0 %v268
      %284 = vmatpush1.bf16.msra.mxu0 %v267
      %285 = vmatprep.subr.bf16.mxu0 %v270
      %286 = vmatpush1.bf16.msra.mxu0 %v269
      %287 = vmatprep.subr.bf16.mxu0 0
      %288 = vmatpush1.bf16.msra.mxu0 0
      %289 = vmatprep.subr.bf16.mxu0 0
      %290 = vmatpush1.bf16.msra.mxu0 0
      %291 = vmatprep.subr.bf16.mxu0 0
      %292 = vmatpush1.bf16.msra.mxu0 0
      %293 = vmatprep.subr.bf16.mxu0 0
      %294 = vmatpush1.bf16.msra.mxu0 0
      %295 = vmatprep.subr.bf16.mxu0 0
      %296 = vmatpush1.bf16.msra.mxu0 0
      %297 = vmatprep.subr.bf16.mxu0 0
      %298 = vmatpush1.bf16.msra.mxu0 0
      %299 = vmatprep.subr.bf16.mxu0 0
      %300 = vmatpush1.bf16.msra.mxu0 0
      %301 = vmatprep.subr.bf16.mxu0 0
      %302 = vmatpush1.bf16.msra.mxu0 0
      %303 = vmatprep.mubr.bf16.mxu0 0
      %304 = vmatmul.mubr.bf16.gmra.mrb[0].mxu0 %v222
      %v305 = vpop.f32.mrb[0].mxu0
      %v306 = vadd.f32 0.0, %v305
      %v307 = vpop.f32.mrb[0].mxu0
      %v308 = vadd.f32 0.0, %v307
      %v309 = vpop.f32.mrb[0].mxu0
      %v310 = vpop.f32.mrb[0].mxu0
      %311 = vdwg.mxu0
      %vm312 = vcmask 1043456
      %v313 = vsel %vm312, %v306, 0.0
      %v314 = vrot.slane %v313, 4
      %v315 = vadd.f32 %v313, %v314
      %v316 = vrot.slane %v315, 2
      %v317 = vadd.f32 %v315, %v316
      %v318 = vrot.slane %v317, 1
      %v319 = vadd.f32 %v317, %v318
      %v320 = vsel %vm312, %v308, 0.0
      %v321 = vrot.slane %v320, 4
      %v322 = vadd.f32 %v320, %v321
      %v323 = vrot.slane %v322, 2
      %v324 = vadd.f32 %v322, %v323
      %v325 = vrot.slane %v324, 1
      %v326 = vadd.f32 %v324, %v325
      %v327 = vrcp.pop 4.0
      %v328 = vmul.f32 %v319, %v327
      %v329 = vmul.f32 %v326, %v327
      %v330 = vsub.f32 %v306, %v328
      %v331 = vsub.f32 %v308, %v329
      %v332 = vmul.f32 %v330, %v330
      %v333 = vmul.f32 %v331, %v331
      %v334 = vsel %vm312, %v332, 0.0
      %v335 = vrot.slane %v334, 4
      %v336 = vadd.f32 %v334, %v335
      %v337 = vrot.slane %v336, 2
      %v338 = vadd.f32 %v336, %v337
      %v339 = vrot.slane %v338, 1
      %v340 = vadd.f32 %v338, %v339
      %v341 = vsel %vm312, %v333, 0.0
      %v342 = vrot.slane %v341, 4
      %v343 = vadd.f32 %v341, %v342
      %v344 = vrot.slane %v343, 2
      %v345 = vadd.f32 %v343, %v344
      %v346 = vrot.slane %v345, 1
      %v347 = vadd.f32 %v345, %v346
      %v348 = vmul.f32 %v340, %v327
      %v349 = vmul.f32 %v347, %v327
      %v350 = vadd.f32 %v348, 1e-05
      %v351 = vadd.f32 %v349, 1e-05
      %v352 = vrsqrt.pop %v350
      %v353 = vrsqrt.pop %v351
      %v354 = vmul.f32 %v330, %v352
      %v355 = vmul.f32 %v331, %v353
      %v356 = vld [vmem:[%s2] sm:$0x3]
      %v358 = vlaneseq
      %v359 = vshrl.u32 %v358, 7
      %v360 = vsub.s32 0, %v359
      %v361 = vrot.slane %v356, %v360
      %v362 = vlaneseq
      %v363 = vshrl.u32 %v362, 7
      %v364 = vsub.s32 1, %v363
      %v365 = vrot.slane %v356, %v364
      %v368 = vmul.f32 %v354, %v361
      %v369 = vmul.f32 %v355, %v365
      %v370 = vld [vmem:[%s3] sm:$0x3]
      %v372 = vlaneseq
      %v373 = vshrl.u32 %v372, 7
      %v374 = vsub.s32 0, %v373
      %v375 = vrot.slane %v370, %v374
      %v376 = vlaneseq
      %v377 = vshrl.u32 %v376, 7
      %v378 = vsub.s32 1, %v377
      %v379 = vrot.slane %v370, %v378
      %v382 = vadd.f32 %v368, %v375
      %v383 = vadd.f32 %v369, %v379
      %v384 = vmax.f32 %v382, 0.0
      %v385 = vmax.f32 %v383, 0.0
      %v386 = vpack.c.bf16 %v384, %v384
      %v387 = vpack.c.bf16 %v385, %v385
      %v388 = vld [vmem:[%s4] sm:$0xff]
      %v389 = vld [vmem:[%s4 + $0x8] sm:$0xff]
      %v390 = vld [vmem:[%s4 + $0x10] sm:$0xff]
      %v391 = vld [vmem:[%s4 + $0x18] sm:$0xff]
      %v392 = vld [vmem:[%s4 + $0x20] sm:$0xff]
      %v393 = vld [vmem:[%s4 + $0x28] sm:$0xff]
      %v394 = vld [vmem:[%s4 + $0x30] sm:$0xff]
      %v395 = vld [vmem:[%s4 + $0x38] sm:$0xff]
      %v396 = vld [vmem:[%s4 + $0x40] sm:$0xff]
      %v397 = vld [vmem:[%s4 + $0x48] sm:$0xff]
      %v398 = vld [vmem:[%s4 + $0x50] sm:$0xff]
      %v399 = vld [vmem:[%s4 + $0x58] sm:$0xff]
      %v400 = vld [vmem:[%s4 + $0x60] sm:$0xff]
      %v401 = vld [vmem:[%s4 + $0x68] sm:$0xff]
      %v402 = vld [vmem:[%s4 + $0x70] sm:$0xff]
      %v403 = vld [vmem:[%s4 + $0x78] sm:$0xff]
      %v404 = vld [vmem:[%s4 + $0x80] sm:$0xff]
      %v405 = vld [vmem:[%s4 + $0x88] sm:$0xff]
      %v406 = vld [vmem:[%s4 + $0x90] sm:$0xff]
      %v407 = vld [vmem:[%s4 + $0x98] sm:$0xff]
      %v408 = vld [vmem:[%s4 + $0xa0] sm:$0xff]
      %v409 = vld [vmem:[%s4 + $0xa8] sm:$0xff]
      %v410 = vld [vmem:[%s4 + $0xb0] sm:$0xff]
      %v411 = vld [vmem:[%s4 + $0xb8] sm:$0xff]
      %v412 = vld [vmem:[%s4 + $0xc0] sm:$0xff]
      %v413 = vld [vmem:[%s4 + $0xc8] sm:$0xff]
      %v414 = vld [vmem:[%s4 + $0xd0] sm:$0xff]
      %v415 = vld [vmem:[%s4 + $0xd8] sm:$0xff]
      %v416 = vld [vmem:[%s4 + $0xe0] sm:$0xff]
      %v417 = vld [vmem:[%s4 + $0xe8] sm:$0xff]
      %v418 = vld [vmem:[%s4 + $0xf0] sm:$0xff]
      %v419 = vld [vmem:[%s4 + $0xf8] sm:$0xff]
      %v420 = vpack.c.bf16 %v389, %v388
      %v421 = vpack.c.bf16 %v391, %v390
      %v422 = vpack.c.bf16 %v393, %v392
      %v423 = vpack.c.bf16 %v395, %v394
      %v424 = vpack.c.bf16 %v397, %v396
      %v425 = vpack.c.bf16 %v399, %v398
      %v426 = vpack.c.bf16 %v401, %v400
      %v427 = vpack.c.bf16 %v403, %v402
      %v428 = vpack.c.bf16 %v405, %v404
      %v429 = vpack.c.bf16 %v407, %v406
      %v430 = vpack.c.bf16 %v409, %v408
      %v431 = vpack.c.bf16 %v411, %v410
      %v432 = vpack.c.bf16 %v413, %v412
      %v433 = vpack.c.bf16 %v415, %v414
      %v434 = vpack.c.bf16 %v417, %v416
      %v435 = vpack.c.bf16 %v419, %v418
      %436 = vmatprep.subr.bf16.mxu0 0
      %437 = vmatpush1.bf16.msra.mxu0 %v420
      %438 = vmatprep.subr.bf16.mxu0 0
      %439 = vmatpush1.bf16.msra.mxu0 %v421
      %440 = vmatprep.subr.bf16.mxu0 0
      %441 = vmatpush1.bf16.msra.mxu0 %v422
      %442 = vmatprep.subr.bf16.mxu0 0
      %443 = vmatpush1.bf16.msra.mxu0 %v423
      %444 = vmatprep.subr.bf16.mxu0 0
      %445 = vmatpush1.bf16.msra.mxu0 %v424
      %446 = vmatprep.subr.bf16.mxu0 0
      %447 = vmatpush1.bf16.msra.mxu0 %v425
      %448 = vmatprep.subr.bf16.mxu0 0
      %449 = vmatpush1.bf16.msra.mxu0 %v426
      %450 = vmatprep.subr.bf16.mxu0 0
      %451 = vmatpush1.bf16.msra.mxu0 %v427
      %452 = vmatprep.subr.bf16.mxu0 0
      %453 = vmatpush1.bf16.msra.mxu0 %v428
      %454 = vmatprep.subr.bf16.mxu0 0
      %455 = vmatpush1.bf16.msra.mxu0 %v429
      %456 = vmatprep.subr.bf16.mxu0 0
      %457 = vmatpush1.bf16.msra.mxu0 %v430
      %458 = vmatprep.subr.bf16.mxu0 0
      %459 = vmatpush1.bf16.msra.mxu0 %v431
      %460 = vmatprep.subr.bf16.mxu0 0
      %461 = vmatpush1.bf16.msra.mxu0 %v432
      %462 = vmatprep.subr.bf16.mxu0 0
      %463 = vmatpush1.bf16.msra.mxu0 %v433
      %464 = vmatprep.subr.bf16.mxu0 0
      %465 = vmatpush1.bf16.msra.mxu0 %v434
      %466 = vmatprep.subr.bf16.mxu0 0
      %467 = vmatpush1.bf16.msra.mxu0 %v435
      %468 = vmatprep.mubr.bf16.mxu0 %v387
      %469 = vmatmul.mubr.bf16.gmra.mrb[0].mxu0 %v386
      %v470 = vpop.f32.mrb[0].mxu0
      %v471 = vadd.f32 0.0, %v470
      %v472 = vpop.f32.mrb[0].mxu0
      %v473 = vpop.f32.mrb[0].mxu0
      %v474 = vpop.f32.mrb[0].mxu0
      %475 = vdwg.mxu0
      %476 = vst [vmem:[%s219] sm:$0xf] %v471
      %p477 = scmp.lt.s32.totalorder %s16, 1
      %s478 = scalar_select %p477, %s16, 1
      %s479 = smul.addr %s478, 4
      %s480 = scalar_lea.vmem %s5, %s479
      // Predicated region
      $region41: #{moco_forward.8} parent=39 // pred_check
        %p481 = pneg %p144
      $region42: #{moco_forward.8} parent=39 // pred_check_branch
        %483 = sbr.rel (%p481) target = $region44
      $region43: #{moco_forward.8} parent=39 // pred_region
        _
      $region44: #{moco_forward.8} parent=39 // pred_fallthru
        _
    $region40: #{moco_forward.8} parent=5 // pred_fallthru
      _
    %p484 = scmp.le.s32.totalorder 2, %s11
    // Predicated region
    $region45: #{moco_forward.8} parent=5 // pred_check
      %p485 = pneg %p484
    $region46: #{moco_forward.8} parent=5 // pred_check_branch
      %487 = sbr.rel (%p485) target = $region48
    $region47: #{moco_forward.8} parent=5 // pred_region
      %s488 = ssub.s32 %s11, 2
      // Predicated region
      $region49: #{moco_forward.8} parent=47 // pred_check
        %p489 = pneg %p150
      $region50: #{moco_forward.8} parent=47 // pred_check_branch
        %491 = sbr.rel (%p489) target = $region52
      $region51: #{moco_forward.8} parent=47 // pred_region
        %p492 = scmp.lt.s32.totalorder %s17, 1
        %s493 = scalar_select %p492, %s17, 1
        %s494 = smul.addr %s493, 4
        %s495 = scalar_lea.vmem %s5, %s494
      $region52: #{moco_forward.8} parent=47 // pred_fallthru
        _
    $region48: #{moco_forward.8} parent=5 // pred_fallthru
      _
  $region6: #{moco_forward.8} parent=0 // loop_footer
    %s15 = sadd.s32 1, %s11
  $region7: #{moco_forward.8} parent=0 // loop_footer_branch
    %10 = sbr.rel target = $region3
  $region8: #{moco_forward.8} parent=0 // loop_exit
    _

// kernel: moco_forward.9
$region0: #{moco_forward.9}
  #allocation0 [shape = 'u32[]', space=smem, size = 0x4, offset = 0x4, fixed_abs, tag = 'smem constant byte address 0x4 - core index']
  #allocation1 [shape = 'u32[144,128]{1,0:T(1,128)}', space=vmem, size = 0x12000, scoped, tag = 'internal scratch']
  #allocation2 [shape = 'f32[1]{0:T(128)S(6)}', space=smem, size = 0x200, scoped, tag = 'scoped memory for moco_forward.9']
  %s0 = inlined_call_operand.vmem [shape: f32[904,128], index: 0, kind: input, shape index: {}, may-alias: {0,3}]
  %s1 = inlined_call_operand.vmem [shape: f32[904,128], index: 1, kind: input, shape index: {}]
  %s2 = inlined_call_operand.<no memory space> [shape: f32[1], index: 2, kind: input, shape index: {}]
  %s3 = inlined_call_operand.vmem [shape: f32[904,128], index: 3, kind: output, shape index: {}, may-alias: {0,3}]
  %s4 = sld [smem:[#allocation0]]
  $region45: #{moco_forward.9} parent=0
    _
  %s6 = ssub.s32 1, %s4
  %s7 = scalar_select 0, %s6, %s4
  %8 = sst [smem:[#allocation2]] %s2
  loop: start=0, step=1, limit=115
  $region2: #{moco_forward.9} parent=0 // loop_pre_header
    _
  $region3: #{moco_forward.9} parent=0 // loop_header
    %s10 = sphi 0, %s14
    %p11 = scmp.ge.s32.totalorder %s10, 115
    %s20 = sphi 0, %s22
    %s23 = sphi 0, %s20
    %s24 = sphi 0, %s23
    %s40 = sphi 0, %s24
    %s46 = sphi 0, %s48
    %s49 = sphi 0, %s46
    %s50 = sphi 0, %s49
    %s66 = sphi 0, %s50
    %s70 = sphi 0, %s70
    %s72 = sphi 0, %s70
    %s73 = sphi 0, %s72
    %s87 = sphi 0, %s73
    %s93 = sphi 0, %s95
    %s96 = sphi 0, %s93
    %s97 = sphi 0, %s96
    %s113 = sphi 0, %s97
  $region4: #{moco_forward.9} parent=0 // loop_header_branch
    %13 = sbr.rel (%p11) target = $region8
  $region5: #{moco_forward.9} parent=0 // loop_body
    %s15 = ssub.s32 %s10, 1
    %s16 = ssub.s32 %s10, 2
    %s17 = sadd.s32 %s10, 1
    %s18 = ssub.s32 %s10, %s17
    %p19 = scmp.eq.s32.totalorder %s18, 0
    %s21 = sadd.s32 %s20, 1
    %s22 = scalar_select %p19, %s20, %s21
    %p25 = pneg %p19
    %p26 = scmp.eq.s32.totalorder %s10, 112
    %p27 = por %p25, %p26
    %p28 = scmp.ne.s32.totalorder %s20, %s23
    %p29 = scmp.eq.s32.totalorder %s10, 0
    %p30 = por %p28, %p29
    %p31 = scmp.ne.s32.totalorder %s20, %s23
    %p32 = scmp.eq.s32.totalorder %s15, 112
    %p33 = por %p31, %p32
    %p34 = scmp.ne.s32.totalorder %s23, %s24
    %p35 = scmp.eq.s32.totalorder %s15, 0
    %p36 = por %p34, %p35
    %p37 = scmp.ne.s32.totalorder %s23, %s24
    %p38 = scmp.eq.s32.totalorder %s16, 112
    %p39 = por %p37, %p38
    %p41 = scmp.ne.s32.totalorder %s24, %s40
    %p42 = scmp.eq.s32.totalorder %s16, 0
    %p43 = por %p41, %p42
    %s44 = ssub.s32 %s10, %s17
    %p45 = scmp.eq.s32.totalorder %s44, 0
    %s47 = sadd.s32 %s46, 1
    %s48 = scalar_select %p45, %s46, %s47
    %p51 = pneg %p45
    %p52 = scmp.eq.s32.totalorder %s10, 112
    %p53 = por %p51, %p52
    %p54 = scmp.ne.s32.totalorder %s46, %s49
    %p55 = scmp.eq.s32.totalorder %s10, 0
    %p56 = por %p54, %p55
    %p57 = scmp.ne.s32.totalorder %s46, %s49
    %p58 = scmp.eq.s32.totalorder %s15, 112
    %p59 = por %p57, %p58
    %p60 = scmp.ne.s32.totalorder %s49, %s50
    %p61 = scmp.eq.s32.totalorder %s15, 0
    %p62 = por %p60, %p61
    %p63 = scmp.ne.s32.totalorder %s49, %s50
    %p64 = scmp.eq.s32.totalorder %s16, 112
    %p65 = por %p63, %p64
    %p67 = scmp.ne.s32.totalorder %s50, %s66
    %p68 = scmp.eq.s32.totalorder %s16, 0
    %p69 = por %p67, %p68
    %s71 = sadd.s32 %s70, 1
    %p74 = scmp.eq.s32.totalorder %s10, 112
    %p75 = scmp.ne.s32.totalorder %s70, %s72
    %p76 = scmp.eq.s32.totalorder %s10, 0
    %p77 = por %p75, %p76
    %p78 = scmp.ne.s32.totalorder %s70, %s72
    %p79 = scmp.eq.s32.totalorder %s15, 112
    %p80 = por %p78, %p79
    %p81 = scmp.ne.s32.totalorder %s72, %s73
    %p82 = scmp.eq.s32.totalorder %s15, 0
    %p83 = por %p81, %p82
    %p84 = scmp.ne.s32.totalorder %s72, %s73
    %p85 = scmp.eq.s32.totalorder %s16, 112
    %p86 = por %p84, %p85
    %p88 = scmp.ne.s32.totalorder %s73, %s87
    %p89 = scmp.eq.s32.totalorder %s16, 0
    %p90 = por %p88, %p89
    %s91 = ssub.s32 %s10, %s17
    %p92 = scmp.eq.s32.totalorder %s91, 0
    %s94 = sadd.s32 %s93, 1
    %s95 = scalar_select %p92, %s93, %s94
    %p98 = pneg %p92
    %p99 = scmp.eq.s32.totalorder %s10, 112
    %p100 = por %p98, %p99
    %p101 = scmp.ne.s32.totalorder %s93, %s96
    %p102 = scmp.eq.s32.totalorder %s10, 0
    %p103 = por %p101, %p102
    %p104 = scmp.ne.s32.totalorder %s93, %s96
    %p105 = scmp.eq.s32.totalorder %s15, 112
    %p106 = por %p104, %p105
    %p107 = scmp.ne.s32.totalorder %s96, %s97
    %p108 = scmp.eq.s32.totalorder %s15, 0
    %p109 = por %p107, %p108
    %p110 = scmp.ne.s32.totalorder %s96, %s97
    %p111 = scmp.eq.s32.totalorder %s16, 112
    %p112 = por %p110, %p111
    %p114 = scmp.ne.s32.totalorder %s97, %s113
    %p115 = scmp.eq.s32.totalorder %s16, 0
    %p116 = por %p114, %p115
    %p117 = scmp.le.s32.totalorder 1, %s10
    %p118 = scmp.lt.s32.totalorder %s10, 114
    %p119 = pnand %p117, %p118
    %p120 = pneg %p119
    // Predicated region
    $region9: #{moco_forward.9} parent=5 // pred_check
      _
    $region10: #{moco_forward.9} parent=5 // pred_check_branch
      %122 = sbr.rel (%p119) target = $region12
    $region11: #{moco_forward.9} parent=5 // pred_region
      %s123 = ssub.s32 %s10, 1
      // Predicated region
      $region13: #{moco_forward.9} parent=11 // pred_check
        %p124 = pneg %p83
      $region14: #{moco_forward.9} parent=11 // pred_check_branch
        %126 = sbr.rel (%p124) target = $region16
      $region15: #{moco_forward.9} parent=11 // pred_region
        _
      $region16: #{moco_forward.9} parent=11 // pred_fallthru
        _
    $region12: #{moco_forward.9} parent=5 // pred_fallthru
      _
    %p127 = scmp.lt.s32.totalorder %s10, 113
    // Predicated region
    $region17: #{moco_forward.9} parent=5 // pred_check
      %p128 = pneg %p127
    $region18: #{moco_forward.9} parent=5 // pred_check_branch
      %130 = sbr.rel (%p128) target = $region20
    $region19: #{moco_forward.9} parent=5 // pred_region
      // Predicated region
      $region21: #{moco_forward.9} parent=19 // pred_check
        %p131 = pneg %p30
      $region22: #{moco_forward.9} parent=19 // pred_check_branch
        %133 = sbr.rel (%p131) target = $region24
      $region23: #{moco_forward.9} parent=19 // pred_region
        %p134 = scmp.lt.s32.totalorder %s10, 112
        %s135 = scalar_select %p134, %s10, 112
        %s136 = smul.addr %s135, 8
        %s137 = scalar_lea.vmem %s0, %s136
      $region24: #{moco_forward.9} parent=19 // pred_fallthru
        _
      // Predicated region
      $region25: #{moco_forward.9} parent=19 // pred_check
        %p138 = pneg %p56
      $region26: #{moco_forward.9} parent=19 // pred_check_branch
        %140 = sbr.rel (%p138) target = $region28
      $region27: #{moco_forward.9} parent=19 // pred_region
        %p141 = scmp.lt.s32.totalorder %s10, 112
        %s142 = scalar_select %p141, %s10, 112
        %s143 = smul.addr %s142, 8
        %s144 = scalar_lea.vmem %s1, %s143
      $region28: #{moco_forward.9} parent=19 // pred_fallthru
        _
    $region20: #{moco_forward.9} parent=5 // pred_fallthru
      _
    %p145 = scmp.le.s32.totalorder 1, %s10
    %p146 = scmp.lt.s32.totalorder %s10, 114
    %p147 = pnand %p145, %p146
    %p148 = pneg %p147
    // Predicated region
    $region29: #{moco_forward.9} parent=5 // pred_check
      _
    $region30: #{moco_forward.9} parent=5 // pred_check_branch
      %150 = sbr.rel (%p147) target = $region32
    $region31: #{moco_forward.9} parent=5 // pred_region
      %s151 = ssub.s32 %s10, 1
      %p152 = scmp.lt.s32.totalorder %s15, 112
      %s153 = scalar_select %p152, %s15, 112
      %s154 = smul.addr %s153, 8
      %s155 = scalar_lea.vmem %s0, %s154
      %p156 = pneg %p36
      %p157 = pneg %p33
      %p158 = scmp.lt.s32.totalorder %s15, 112
      %s159 = scalar_select %p158, %s15, 112
      %s160 = smul.addr %s159, 8
      %s161 = scalar_lea.vmem %s1, %s160
      %p162 = pneg %p62
      %p163 = pneg %p59
      %p164 = pneg %p83
      %p165 = pneg %p80
      %p166 = pneg %p109
      %p167 = pneg %p106
      %p168 = scmp.lt.s32.totalorder %s15, 112
      %s169 = scalar_select %p168, %s15, 112
      %s170 = smul.addr %s169, 8
      %s171 = scalar_lea.vmem %s3, %s170
      %p172 = scmp.lt.s32.totalorder %s15, 112
      %s173 = scalar_select %p172, %s15, 112
      %s174 = smul.addr %s173, 8
      %s175 = scalar_lea.vmem %s0, %s174
      %p176 = scmp.lt.s32.totalorder %s15, 112
      %s177 = scalar_select %p176, %s15, 112
      %s178 = smul.addr %s177, 8
      %s179 = scalar_lea.vmem %s1, %s178
      %p180 = scmp.lt.s32.totalorder %s15, 112
      %s181 = scalar_select %p180, %s15, 112
      %s182 = smul.addr %s181, 8
      %s183 = scalar_lea.vmem %s3, %s182
      %s184 = sld [smem:[#allocation2]]
      %v185 = vld [vmem:[%s175] sm:$0xff]
      %v186 = vstv %s184
      %v187 = vmul.f32 %v185, %v186
      %v188 = vld [vmem:[%s179] sm:$0xff]
      %s189 = ssub.f32 1.0, %s184
      %v190 = vstv %s189
      %v191 = vmul.f32 %v188, %v190
      %v192 = vadd.f32 %v187, %v191
      %193 = vst [vmem:[%s183] sm:$0xff] %v192
      %p194 = scmp.lt.s32.totalorder %s15, 112
      %s195 = scalar_select %p194, %s15, 112
      %s196 = smul.addr %s195, 8
      %s197 = scalar_lea.vmem %s3, %s196
      // Predicated region
      $region33: #{moco_forward.9} parent=31 // pred_check
        %p198 = pneg %p106
      $region34: #{moco_forward.9} parent=31 // pred_check_branch
        %200 = sbr.rel (%p198) target = $region36
      $region35: #{moco_forward.9} parent=31 // pred_region
        _
      $region36: #{moco_forward.9} parent=31 // pred_fallthru
        _
    $region32: #{moco_forward.9} parent=5 // pred_fallthru
      _
    %p201 = scmp.le.s32.totalorder 2, %s10
    // Predicated region
    $region37: #{moco_forward.9} parent=5 // pred_check
      %p202 = pneg %p201
    $region38: #{moco_forward.9} parent=5 // pred_check_branch
      %204 = sbr.rel (%p202) target = $region40
    $region39: #{moco_forward.9} parent=5 // pred_region
      %s205 = ssub.s32 %s10, 2
      // Predicated region
      $region41: #{moco_forward.9} parent=39 // pred_check
        %p206 = pneg %p112
      $region42: #{moco_forward.9} parent=39 // pred_check_branch
        %208 = sbr.rel (%p206) target = $region44
      $region43: #{moco_forward.9} parent=39 // pred_region
        %p209 = scmp.lt.s32.totalorder %s16, 112
        %s210 = scalar_select %p209, %s16, 112
        %s211 = smul.addr %s210, 8
        %s212 = scalar_lea.vmem %s3, %s211
      $region44: #{moco_forward.9} parent=39 // pred_fallthru
        _
    $region40: #{moco_forward.9} parent=5 // pred_fallthru
      _
  $region6: #{moco_forward.9} parent=0 // loop_footer
    %s14 = sadd.s32 1, %s10
  $region7: #{moco_forward.9} parent=0 // loop_footer_branch
    %9 = sbr.rel target = $region3
  $region8: #{moco_forward.9} parent=0 // loop_exit
    _

// kernel: moco_forward.10
$region0: #{moco_forward.10}
  #allocation0 [shape = 'u32[]', space=smem, size = 0x4, offset = 0x4, fixed_abs, tag = 'smem constant byte address 0x4 - core index']
  #allocation1 [shape = 'u32[144,128]{1,0:T(1,128)}', space=vmem, size = 0x12000, scoped, tag = 'internal scratch']
  %s0 = inlined_call_operand.vmem [shape: f32[8,16,256], index: 0, kind: input, shape index: {}]
  %s1 = inlined_call_operand.vmem [shape: f32[256,128], index: 1, kind: input, shape index: {}]
  %s2 = inlined_call_operand.vmem [shape: f32[128,128], index: 2, kind: input, shape index: {}]
  %s3 = inlined_call_operand.vmem [shape: f32[8,16,128], index: 3, kind: output, shape index: {0}]
  %s4 = inlined_call_operand.vmem [shape: f32[8,1,128], index: 4, kind: output, shape index: {1}]
  %5 = xla_tuple %s3, %s4
  %s6 = sld [smem:[#allocation0]]
  $region30: #{moco_forward.10} parent=0
    _
  %s8 = ssub.s32 1, %s6
  %s9 = scalar_select 0, %s8, %s6
  // Predicated region
  $region2: #{moco_forward.10} parent=0 // pred_check
    _
  $region3: #{moco_forward.10} parent=0 // pred_check_branch
    %11 = sbr.rel (0) target = $region5
  $region4: #{moco_forward.10} parent=0 // pred_region
    _
  $region5: #{moco_forward.10} parent=0 // pred_fallthru
    _
  // Predicated region
  $region6: #{moco_forward.10} parent=0 // pred_check
    _
  $region7: #{moco_forward.10} parent=0 // pred_check_branch
    %13 = sbr.rel (0) target = $region9
  $region8: #{moco_forward.10} parent=0 // pred_region
    _
  $region9: #{moco_forward.10} parent=0 // pred_fallthru
    _
  // Predicated region
  $region10: #{moco_forward.10} parent=0 // pred_check
    _
  $region11: #{moco_forward.10} parent=0 // pred_check_branch
    %15 = sbr.rel (0) target = $region13
  $region12: #{moco_forward.10} parent=0 // pred_region
    _
  $region13: #{moco_forward.10} parent=0 // pred_fallthru
    _
  %v17 = vld [vmem:[%s0] sm:$0xff]
  %v18 = vld [vmem:[%s0 + $0x8] sm:$0xff]
  %v19 = vld [vmem:[%s0 + $0x10] sm:$0xff]
  %v20 = vld [vmem:[%s0 + $0x18] sm:$0xff]
  %v21 = vld [vmem:[%s0 + $0x20] sm:$0xff]
  %v22 = vld [vmem:[%s0 + $0x28] sm:$0xff]
  %v23 = vld [vmem:[%s0 + $0x30] sm:$0xff]
  %v24 = vld [vmem:[%s0 + $0x38] sm:$0xff]
  %v25 = vld [vmem:[%s0 + $0x40] sm:$0xff]
  %v26 = vld [vmem:[%s0 + $0x48] sm:$0xff]
  %v27 = vld [vmem:[%s0 + $0x50] sm:$0xff]
  %v28 = vld [vmem:[%s0 + $0x58] sm:$0xff]
  %v29 = vld [vmem:[%s0 + $0x60] sm:$0xff]
  %v30 = vld [vmem:[%s0 + $0x68] sm:$0xff]
  %v31 = vld [vmem:[%s0 + $0x70] sm:$0xff]
  %v32 = vld [vmem:[%s0 + $0x78] sm:$0xff]
  %v33 = vld [vmem:[%s0 + $0x80] sm:$0xff]
  %v34 = vld [vmem:[%s0 + $0x88] sm:$0xff]
  %v35 = vld [vmem:[%s0 + $0x90] sm:$0xff]
  %v36 = vld [vmem:[%s0 + $0x98] sm:$0xff]
  %v37 = vld [vmem:[%s0 + $0xa0] sm:$0xff]
  %v38 = vld [vmem:[%s0 + $0xa8] sm:$0xff]
  %v39 = vld [vmem:[%s0 + $0xb0] sm:$0xff]
  %v40 = vld [vmem:[%s0 + $0xb8] sm:$0xff]
  %v41 = vld [vmem:[%s0 + $0xc0] sm:$0xff]
  %v42 = vld [vmem:[%s0 + $0xc8] sm:$0xff]
  %v43 = vld [vmem:[%s0 + $0xd0] sm:$0xff]
  %v44 = vld [vmem:[%s0 + $0xd8] sm:$0xff]
  %v45 = vld [vmem:[%s0 + $0xe0] sm:$0xff]
  %v46 = vld [vmem:[%s0 + $0xe8] sm:$0xff]
  %v47 = vld [vmem:[%s0 + $0xf0] sm:$0xff]
  %v48 = vld [vmem:[%s0 + $0xf8] sm:$0xff]
  %v49 = vpack.c.bf16 %v19, %v17
  %v50 = vpack.c.bf16 %v20, %v18
  %v51 = vpack.c.bf16 %v23, %v21
  %v52 = vpack.c.bf16 %v24, %v22
  %v53 = vpack.c.bf16 %v27, %v25
  %v54 = vpack.c.bf16 %v28, %v26
  %v55 = vpack.c.bf16 %v31, %v29
  %v56 = vpack.c.bf16 %v32, %v30
  %v57 = vpack.c.bf16 %v35, %v33
  %v58 = vpack.c.bf16 %v36, %v34
  %v59 = vpack.c.bf16 %v39, %v37
  %v60 = vpack.c.bf16 %v40, %v38
  %v61 = vpack.c.bf16 %v43, %v41
  %v62 = vpack.c.bf16 %v44, %v42
  %v63 = vpack.c.bf16 %v47, %v45
  %v64 = vpack.c.bf16 %v48, %v46
  %v65 = vld [vmem:[%s1] sm:$0xff]
  %v66 = vld [vmem:[%s1 + $0x8] sm:$0xff]
  %v67 = vld [vmem:[%s1 + $0x10] sm:$0xff]
  %v68 = vld [vmem:[%s1 + $0x18] sm:$0xff]
  %v69 = vld [vmem:[%s1 + $0x20] sm:$0xff]
  %v70 = vld [vmem:[%s1 + $0x28] sm:$0xff]
  %v71 = vld [vmem:[%s1 + $0x30] sm:$0xff]
  %v72 = vld [vmem:[%s1 + $0x38] sm:$0xff]
  %v73 = vld [vmem:[%s1 + $0x40] sm:$0xff]
  %v74 = vld [vmem:[%s1 + $0x48] sm:$0xff]
  %v75 = vld [vmem:[%s1 + $0x50] sm:$0xff]
  %v76 = vld [vmem:[%s1 + $0x58] sm:$0xff]
  %v77 = vld [vmem:[%s1 + $0x60] sm:$0xff]
  %v78 = vld [vmem:[%s1 + $0x68] sm:$0xff]
  %v79 = vld [vmem:[%s1 + $0x70] sm:$0xff]
  %v80 = vld [vmem:[%s1 + $0x78] sm:$0xff]
  %v81 = vld [vmem:[%s1 + $0x80] sm:$0xff]
  %v82 = vld [vmem:[%s1 + $0x88] sm:$0xff]
  %v83 = vld [vmem:[%s1 + $0x90] sm:$0xff]
  %v84 = vld [vmem:[%s1 + $0x98] sm:$0xff]
  %v85 = vld [vmem:[%s1 + $0xa0] sm:$0xff]
  %v86 = vld [vmem:[%s1 + $0xa8] sm:$0xff]
  %v87 = vld [vmem:[%s1 + $0xb0] sm:$0xff]
  %v88 = vld [vmem:[%s1 + $0xb8] sm:$0xff]
  %v89 = vld [vmem:[%s1 + $0xc0] sm:$0xff]
  %v90 = vld [vmem:[%s1 + $0xc8] sm:$0xff]
  %v91 = vld [vmem:[%s1 + $0xd0] sm:$0xff]
  %v92 = vld [vmem:[%s1 + $0xd8] sm:$0xff]
  %v93 = vld [vmem:[%s1 + $0xe0] sm:$0xff]
  %v94 = vld [vmem:[%s1 + $0xe8] sm:$0xff]
  %v95 = vld [vmem:[%s1 + $0xf0] sm:$0xff]
  %v96 = vld [vmem:[%s1 + $0xf8] sm:$0xff]
  %v97 = vpack.c.bf16 %v66, %v65
  %v98 = vpack.c.bf16 %v68, %v67
  %v99 = vpack.c.bf16 %v70, %v69
  %v100 = vpack.c.bf16 %v72, %v71
  %v101 = vpack.c.bf16 %v74, %v73
  %v102 = vpack.c.bf16 %v76, %v75
  %v103 = vpack.c.bf16 %v78, %v77
  %v104 = vpack.c.bf16 %v80, %v79
  %v105 = vpack.c.bf16 %v82, %v81
  %v106 = vpack.c.bf16 %v84, %v83
  %v107 = vpack.c.bf16 %v86, %v85
  %v108 = vpack.c.bf16 %v88, %v87
  %v109 = vpack.c.bf16 %v90, %v89
  %v110 = vpack.c.bf16 %v92, %v91
  %v111 = vpack.c.bf16 %v94, %v93
  %v112 = vpack.c.bf16 %v96, %v95
  %113 = vmatprep.subr.bf16.mxu0 0
  %114 = vmatpush1.bf16.msra.mxu0 %v97
  %115 = vmatprep.subr.bf16.mxu0 0
  %116 = vmatpush1.bf16.msra.mxu0 %v98
  %117 = vmatprep.subr.bf16.mxu0 0
  %118 = vmatpush1.bf16.msra.mxu0 %v99
  %119 = vmatprep.subr.bf16.mxu0 0
  %120 = vmatpush1.bf16.msra.mxu0 %v100
  %121 = vmatprep.subr.bf16.mxu0 0
  %122 = vmatpush1.bf16.msra.mxu0 %v101
  %123 = vmatprep.subr.bf16.mxu0 0
  %124 = vmatpush1.bf16.msra.mxu0 %v102
  %125 = vmatprep.subr.bf16.mxu0 0
  %126 = vmatpush1.bf16.msra.mxu0 %v103
  %127 = vmatprep.subr.bf16.mxu0 0
  %128 = vmatpush1.bf16.msra.mxu0 %v104
  %129 = vmatprep.subr.bf16.mxu0 0
  %130 = vmatpush1.bf16.msra.mxu0 %v105
  %131 = vmatprep.subr.bf16.mxu0 0
  %132 = vmatpush1.bf16.msra.mxu0 %v106
  %133 = vmatprep.subr.bf16.mxu0 0
  %134 = vmatpush1.bf16.msra.mxu0 %v107
  %135 = vmatprep.subr.bf16.mxu0 0
  %136 = vmatpush1.bf16.msra.mxu0 %v108
  %137 = vmatprep.subr.bf16.mxu0 0
  %138 = vmatpush1.bf16.msra.mxu0 %v109
  %139 = vmatprep.subr.bf16.mxu0 0
  %140 = vmatpush1.bf16.msra.mxu0 %v110
  %141 = vmatprep.subr.bf16.mxu0 0
  %142 = vmatpush1.bf16.msra.mxu0 %v111
  %143 = vmatprep.subr.bf16.mxu0 0
  %144 = vmatpush1.bf16.msra.mxu0 %v112
  %145 = vmatprep.mubr.bf16.mxu0 %v50
  %146 = vmatmul.mubr.bf16.gmra.mrb[0].mxu0 %v49
  %v147 = vpop.f32.mrb[0].mxu0
  %v148 = vadd.f32 0.0, %v147
  %v149 = vpop.f32.mrb[0].mxu0
  %v150 = vpop.f32.mrb[0].mxu0
  %v151 = vadd.f32 0.0, %v150
  %v152 = vpop.f32.mrb[0].mxu0
  %153 = vmatprep.mubr.bf16.mxu0 %v52
  %154 = vmatmul.mubr.bf16.gmra.mrb[0].mxu0 %v51
  %v155 = vpop.f32.mrb[0].mxu0
  %v156 = vadd.f32 0.0, %v155
  %v157 = vpop.f32.mrb[0].mxu0
  %v158 = vpop.f32.mrb[0].mxu0
  %v159 = vadd.f32 0.0, %v158
  %v160 = vpop.f32.mrb[0].mxu0
  %161 = vmatprep.mubr.bf16.mxu0 %v54
  %162 = vmatmul.mubr.bf16.gmra.mrb[0].mxu0 %v53
  %v163 = vpop.f32.mrb[0].mxu0
  %v164 = vadd.f32 0.0, %v163
  %v165 = vpop.f32.mrb[0].mxu0
  %v166 = vpop.f32.mrb[0].mxu0
  %v167 = vadd.f32 0.0, %v166
  %v168 = vpop.f32.mrb[0].mxu0
  %169 = vmatprep.mubr.bf16.mxu0 %v56
  %170 = vmatmul.mubr.bf16.gmra.mrb[0].mxu0 %v55
  %v171 = vpop.f32.mrb[0].mxu0
  %v172 = vadd.f32 0.0, %v171
  %v173 = vpop.f32.mrb[0].mxu0
  %v174 = vpop.f32.mrb[0].mxu0
  %v175 = vadd.f32 0.0, %v174
  %v176 = vpop.f32.mrb[0].mxu0
  %177 = vmatprep.mubr.bf16.mxu0 %v58
  %178 = vmatmul.mubr.bf16.gmra.mrb[0].mxu0 %v57
  %v179 = vpop.f32.mrb[0].mxu0
  %v180 = vadd.f32 0.0, %v179
  %v181 = vpop.f32.mrb[0].mxu0
  %v182 = vpop.f32.mrb[0].mxu0
  %v183 = vadd.f32 0.0, %v182
  %v184 = vpop.f32.mrb[0].mxu0
  %185 = vmatprep.mubr.bf16.mxu0 %v60
  %186 = vmatmul.mubr.bf16.gmra.mrb[0].mxu0 %v59
  %v187 = vpop.f32.mrb[0].mxu0
  %v188 = vadd.f32 0.0, %v187
  %v189 = vpop.f32.mrb[0].mxu0
  %v190 = vpop.f32.mrb[0].mxu0
  %v191 = vadd.f32 0.0, %v190
  %v192 = vpop.f32.mrb[0].mxu0
  %193 = vmatprep.mubr.bf16.mxu0 %v62
  %194 = vmatmul.mubr.bf16.gmra.mrb[0].mxu0 %v61
  %v195 = vpop.f32.mrb[0].mxu0
  %v196 = vadd.f32 0.0, %v195
  %v197 = vpop.f32.mrb[0].mxu0
  %v198 = vpop.f32.mrb[0].mxu0
  %v199 = vadd.f32 0.0, %v198
  %v200 = vpop.f32.mrb[0].mxu0
  %201 = vmatprep.mubr.bf16.mxu0 %v64
  %202 = vmatmul.mubr.bf16.gmra.mrb[0].mxu0 %v63
  %v203 = vpop.f32.mrb[0].mxu0
  %v204 = vadd.f32 0.0, %v203
  %v205 = vpop.f32.mrb[0].mxu0
  %v206 = vpop.f32.mrb[0].mxu0
  %v207 = vadd.f32 0.0, %v206
  %v208 = vpop.f32.mrb[0].mxu0
  %209 = vdwg.mxu0
  %210 = vst [vmem:[%s3] sm:$0xff] %v148
  %211 = vst [vmem:[%s3 + $0x8] sm:$0xff] %v151
  %212 = vst [vmem:[%s3 + $0x10] sm:$0xff] %v156
  %213 = vst [vmem:[%s3 + $0x18] sm:$0xff] %v159
  %214 = vst [vmem:[%s3 + $0x20] sm:$0xff] %v164
  %215 = vst [vmem:[%s3 + $0x28] sm:$0xff] %v167
  %216 = vst [vmem:[%s3 + $0x30] sm:$0xff] %v172
  %217 = vst [vmem:[%s3 + $0x38] sm:$0xff] %v175
  %218 = vst [vmem:[%s3 + $0x40] sm:$0xff] %v180
  %219 = vst [vmem:[%s3 + $0x48] sm:$0xff] %v183
  %220 = vst [vmem:[%s3 + $0x50] sm:$0xff] %v188
  %221 = vst [vmem:[%s3 + $0x58] sm:$0xff] %v191
  %222 = vst [vmem:[%s3 + $0x60] sm:$0xff] %v196
  %223 = vst [vmem:[%s3 + $0x68] sm:$0xff] %v199
  %224 = vst [vmem:[%s3 + $0x70] sm:$0xff] %v204
  %225 = vst [vmem:[%s3 + $0x78] sm:$0xff] %v207
  %v226 = vadd.f32 %v148, %v151
  %v227 = vrot.slane %v226, 4
  %v228 = vadd.f32 %v226, %v227
  %v229 = vrot.slane %v228, 2
  %v230 = vadd.f32 %v228, %v229
  %v231 = vrot.slane %v230, 1
  %v232 = vadd.f32 %v230, %v231
  %v233 = vadd.f32 %v156, %v159
  %v234 = vrot.slane %v233, 4
  %v235 = vadd.f32 %v233, %v234
  %v236 = vrot.slane %v235, 2
  %v237 = vadd.f32 %v235, %v236
  %v238 = vrot.slane %v237, 1
  %v239 = vadd.f32 %v237, %v238
  %v240 = vadd.f32 %v164, %v167
  %v241 = vrot.slane %v240, 4
  %v242 = vadd.f32 %v240, %v241
  %v243 = vrot.slane %v242, 2
  %v244 = vadd.f32 %v242, %v243
  %v245 = vrot.slane %v244, 1
  %v246 = vadd.f32 %v244, %v245
  %v247 = vadd.f32 %v172, %v175
  %v248 = vrot.slane %v247, 4
  %v249 = vadd.f32 %v247, %v248
  %v250 = vrot.slane %v249, 2
  %v251 = vadd.f32 %v249, %v250
  %v252 = vrot.slane %v251, 1
  %v253 = vadd.f32 %v251, %v252
  %v254 = vadd.f32 %v180, %v183
  %v255 = vrot.slane %v254, 4
  %v256 = vadd.f32 %v254, %v255
  %v257 = vrot.slane %v256, 2
  %v258 = vadd.f32 %v256, %v257
  %v259 = vrot.slane %v258, 1
  %v260 = vadd.f32 %v258, %v259
  %v261 = vadd.f32 %v188, %v191
  %v262 = vrot.slane %v261, 4
  %v263 = vadd.f32 %v261, %v262
  %v264 = vrot.slane %v263, 2
  %v265 = vadd.f32 %v263, %v264
  %v266 = vrot.slane %v265, 1
  %v267 = vadd.f32 %v265, %v266
  %v268 = vadd.f32 %v196, %v199
  %v269 = vrot.slane %v268, 4
  %v270 = vadd.f32 %v268, %v269
  %v271 = vrot.slane %v270, 2
  %v272 = vadd.f32 %v270, %v271
  %v273 = vrot.slane %v272, 1
  %v274 = vadd.f32 %v272, %v273
  %v275 = vadd.f32 %v204, %v207
  %v276 = vrot.slane %v275, 4
  %v277 = vadd.f32 %v275, %v276
  %v278 = vrot.slane %v277, 2
  %v279 = vadd.f32 %v277, %v278
  %v280 = vrot.slane %v279, 1
  %v281 = vadd.f32 %v279, %v280
  %v282 = vrcp.pop 16.0
  %v283 = vmul.f32 %v232, %v282
  %v284 = vmul.f32 %v239, %v282
  %v285 = vmul.f32 %v246, %v282
  %v286 = vmul.f32 %v253, %v282
  %v287 = vmul.f32 %v260, %v282
  %v288 = vmul.f32 %v267, %v282
  %v289 = vmul.f32 %v274, %v282
  %v290 = vmul.f32 %v281, %v282
  %v291 = vpack.c.bf16 %v283, %v283
  %v292 = vpack.c.bf16 %v284, %v284
  %v293 = vpack.c.bf16 %v285, %v285
  %v294 = vpack.c.bf16 %v286, %v286
  %v295 = vpack.c.bf16 %v287, %v287
  %v296 = vpack.c.bf16 %v288, %v288
  %v297 = vpack.c.bf16 %v289, %v289
  %v298 = vpack.c.bf16 %v290, %v290
  %v299 = vld [vmem:[%s2] sm:$0xff]
  %v300 = vld [vmem:[%s2 + $0x8] sm:$0xff]
  %v301 = vld [vmem:[%s2 + $0x10] sm:$0xff]
  %v302 = vld [vmem:[%s2 + $0x18] sm:$0xff]
  %v303 = vld [vmem:[%s2 + $0x20] sm:$0xff]
  %v304 = vld [vmem:[%s2 + $0x28] sm:$0xff]
  %v305 = vld [vmem:[%s2 + $0x30] sm:$0xff]
  %v306 = vld [vmem:[%s2 + $0x38] sm:$0xff]
  %v307 = vld [vmem:[%s2 + $0x40] sm:$0xff]
  %v308 = vld [vmem:[%s2 + $0x48] sm:$0xff]
  %v309 = vld [vmem:[%s2 + $0x50] sm:$0xff]
  %v310 = vld [vmem:[%s2 + $0x58] sm:$0xff]
  %v311 = vld [vmem:[%s2 + $0x60] sm:$0xff]
  %v312 = vld [vmem:[%s2 + $0x68] sm:$0xff]
  %v313 = vld [vmem:[%s2 + $0x70] sm:$0xff]
  %v314 = vld [vmem:[%s2 + $0x78] sm:$0xff]
  %v315 = vpack.c.bf16 %v300, %v299
  %v316 = vpack.c.bf16 %v302, %v301
  %v317 = vpack.c.bf16 %v304, %v303
  %v318 = vpack.c.bf16 %v306, %v305
  %v319 = vpack.c.bf16 %v308, %v307
  %v320 = vpack.c.bf16 %v310, %v309
  %v321 = vpack.c.bf16 %v312, %v311
  %v322 = vpack.c.bf16 %v314, %v313
  %v331 = vunpack.c.l.b16 %v291
  %v332 = vunpack.c.l.b16 %v292
  %v333 = vunpack.c.l.b16 %v293
  %v334 = vunpack.c.l.b16 %v294
  %v335 = vunpack.c.l.b16 %v295
  %v336 = vunpack.c.l.b16 %v296
  %v337 = vunpack.c.l.b16 %v297
  %v338 = vunpack.c.l.b16 %v298
  %vm339 = vcmask 1041409
  %v340 = vsel %vm339, %v332, %v331
  %vm341 = vcmask 1042434
  %v342 = vsel %vm341, %v333, %v340
  %vm343 = vcmask 1043459
  %v344 = vsel %vm343, %v334, %v342
  %vm345 = vcmask 1044484
  %v346 = vsel %vm345, %v335, %v344
  %vm347 = vcmask 1045509
  %v348 = vsel %vm347, %v336, %v346
  %vm349 = vcmask 1046534
  %v350 = vsel %vm349, %v337, %v348
  %vm351 = vcmask 1047559
  %v352 = vsel %vm351, %v338, %v350
  %v353 = vpack.c.b16 %v352, %v352
  %355 = vmatprep.subr.bf16.mxu0 0
  %356 = vmatpush1.bf16.msra.mxu0 %v315
  %357 = vmatprep.subr.bf16.mxu0 0
  %358 = vmatpush1.bf16.msra.mxu0 %v316
  %359 = vmatprep.subr.bf16.mxu0 0
  %360 = vmatpush1.bf16.msra.mxu0 %v317
  %361 = vmatprep.subr.bf16.mxu0 0
  %362 = vmatpush1.bf16.msra.mxu0 %v318
  %363 = vmatprep.subr.bf16.mxu0 0
  %364 = vmatpush1.bf16.msra.mxu0 %v319
  %365 = vmatprep.subr.bf16.mxu0 0
  %366 = vmatpush1.bf16.msra.mxu0 %v320
  %367 = vmatprep.subr.bf16.mxu0 0
  %368 = vmatpush1.bf16.msra.mxu0 %v321
  %369 = vmatprep.subr.bf16.mxu0 0
  %370 = vmatpush1.bf16.msra.mxu0 %v322
  %371 = vmatprep.subr.bf16.mxu0 0
  %372 = vmatpush1.bf16.msra.mxu0 0
  %373 = vmatprep.subr.bf16.mxu0 0
  %374 = vmatpush1.bf16.msra.mxu0 0
  %375 = vmatprep.subr.bf16.mxu0 0
  %376 = vmatpush1.bf16.msra.mxu0 0
  %377 = vmatprep.subr.bf16.mxu0 0
  %378 = vmatpush1.bf16.msra.mxu0 0
  %379 = vmatprep.subr.bf16.mxu0 0
  %380 = vmatpush1.bf16.msra.mxu0 0
  %381 = vmatprep.subr.bf16.mxu0 0
  %382 = vmatpush1.bf16.msra.mxu0 0
  %383 = vmatprep.subr.bf16.mxu0 0
  %384 = vmatpush1.bf16.msra.mxu0 0
  %385 = vmatprep.subr.bf16.mxu0 0
  %386 = vmatpush1.bf16.msra.mxu0 0
  %387 = vmatprep.mubr.bf16.mxu0 0
  %388 = vmatmul.mubr.bf16.gmra.mrb[0].mxu0 %v353
  %v389 = vpop.f32.mrb[0].mxu0
  %v390 = vadd.f32 0.0, %v389
  %v391 = vpop.f32.mrb[0].mxu0
  %v392 = vpop.f32.mrb[0].mxu0
  %v393 = vpop.f32.mrb[0].mxu0
  %394 = vdwg.mxu0
  %v396 = vcombine.high %v390, %v390
  %v398 = vunpack.c.l.s4 1966171168
  %v399 = vunpack.c.0.s8 %v398
  %v400 = vlaneseq
  %v401 = vshrl.u32 %v400, 7
  %v402 = vsub.s32 %v399, %v401
  %v403 = vrot.slane %v390, %v402
  %v405 = vunpack.c.l.s4 1966171168
  %v406 = vunpack.c.0.s8 %v405
  %v407 = vlaneseq
  %v408 = vshrl.u32 %v407, 7
  %v409 = vsub.s32 %v406, %v408
  %v410 = vrot.slane %v396, %v409
  %v411 = vcombine.high %v403, %v403
  %v412 = vcombine.high %v410, %v410
  %v414 = vunpack.c.l.s4 1966171168
  %v415 = vunpack.c.0.s8 %v414
  %v416 = vlaneseq
  %v417 = vshrl.u32 %v416, 7
  %v418 = vsub.s32 %v415, %v417
  %v419 = vrot.slane %v403, %v418
  %v421 = vunpack.c.l.s4 1966171168
  %v422 = vunpack.c.0.s8 %v421
  %v423 = vlaneseq
  %v424 = vshrl.u32 %v423, 7
  %v425 = vsub.s32 %v422, %v424
  %v426 = vrot.slane %v410, %v425
  %v428 = vunpack.c.l.s4 1966171168
  %v429 = vunpack.c.0.s8 %v428
  %v430 = vlaneseq
  %v431 = vshrl.u32 %v430, 7
  %v432 = vsub.s32 %v429, %v431
  %v433 = vrot.slane %v411, %v432
  %v435 = vunpack.c.l.s4 1966171168
  %v436 = vunpack.c.0.s8 %v435
  %v437 = vlaneseq
  %v438 = vshrl.u32 %v437, 7
  %v439 = vsub.s32 %v436, %v438
  %v440 = vrot.slane %v412, %v439
  %v441 = vcombine.high %v419, %v419
  %v442 = vcombine.high %v426, %v426
  %v443 = vcombine.high %v433, %v433
  %v444 = vcombine.high %v440, %v440
  %453 = vst [vmem:[%s4] sm:$0x1] %v419
  %454 = vst [vmem:[%s4 + $0x1] sm:$0x1] %v433
  %455 = vst [vmem:[%s4 + $0x2] sm:$0x1] %v441
  %456 = vst [vmem:[%s4 + $0x3] sm:$0x1] %v443
  %457 = vst [vmem:[%s4 + $0x4] sm:$0x1] %v426
  %458 = vst [vmem:[%s4 + $0x5] sm:$0x1] %v440
  %459 = vst [vmem:[%s4 + $0x6] sm:$0x1] %v442
  %460 = vst [vmem:[%s4 + $0x7] sm:$0x1] %v444
  // Predicated region
  $region14: #{moco_forward.10} parent=0 // pred_check
    _
  $region15: #{moco_forward.10} parent=0 // pred_check_branch
    %462 = sbr.rel (0) target = $region17
  $region16: #{moco_forward.10} parent=0 // pred_region
    _
  $region17: #{moco_forward.10} parent=0 // pred_fallthru
    _
  // Predicated region
  $region18: #{moco_forward.10} parent=0 // pred_check
    _
  $region19: #{moco_forward.10} parent=0 // pred_check_branch
    %464 = sbr.rel (0) target = $region21
  $region20: #{moco_forward.10} parent=0 // pred_region
    _
  $region21: #{moco_forward.10} parent=0 // pred_fallthru
    _
  // Predicated region
  $region22: #{moco_forward.10} parent=0 // pred_check
    _
  $region23: #{moco_forward.10} parent=0 // pred_check_branch
    %466 = sbr.rel (0) target = $region25
  $region24: #{moco_forward.10} parent=0 // pred_region
    _
  $region25: #{moco_forward.10} parent=0 // pred_fallthru
    _
  // Predicated region
  $region26: #{moco_forward.10} parent=0 // pred_check
    _
  $region27: #{moco_forward.10} parent=0 // pred_check_branch
    %468 = sbr.rel (0) target = $region29
  $region28: #{moco_forward.10} parent=0 // pred_region
    _
  $region29: #{moco_forward.10} parent=0 // pred_fallthru
    _

// kernel: moco_forward.12
$region0: #{moco_forward.12}
  #allocation0 [shape = 'u32[]', space=smem, size = 0x4, offset = 0x4, fixed_abs, tag = 'smem constant byte address 0x4 - core index']
  #allocation1 [shape = 'u32[144,128]{1,0:T(1,128)}', space=vmem, size = 0x12000, scoped, tag = 'internal scratch']
  %s0 = inlined_call_operand.vmem [shape: f32[2,4,16,128], index: 0, kind: input, shape index: {}]
  %s1 = inlined_call_operand.vmem [shape: f32[2,4,16,256], index: 1, kind: input, shape index: {}]
  %s2 = inlined_call_operand.vmem [shape: f32[1,128], index: 2, kind: input, shape index: {}]
  %s3 = inlined_call_operand.vmem [shape: f32[128,128], index: 3, kind: input, shape index: {}]
  %s4 = inlined_call_operand.vmem [shape: f32[128,256], index: 4, kind: input, shape index: {}]
  %s5 = inlined_call_operand.vmem [shape: f32[128,128], index: 5, kind: input, shape index: {}]
  %s6 = inlined_call_operand.vmem [shape: f32[2,4,1,128], index: 6, kind: output, shape index: {0}]
  %s7 = inlined_call_operand.hbm [shape: f32[2,1,1], index: 7, kind: output, shape index: {1}]
  %s8 = inlined_call_operand.hbm [shape: f32[2,1,1], index: 8, kind: output, shape index: {2}]
  %9 = xla_tuple %s6, %s7, %s8
  %s10 = sld [smem:[#allocation0]]
  $region77: #{moco_forward.12} parent=0
    _
  %s12 = ssub.s32 1, %s10
  %s13 = scalar_select 0, %s12, %s10
  $region1: #{moco_forward.12} parent=0
    #allocation2 [shape = 'u8[1024]{0}', space=vmem, size = 0x400, scoped, tag = 'output window, operand 1']
    #allocation3 [shape = 's32[2]{0}', space=sflag, size = 0x8, scoped, tag = 'scoped memory for moco_forward.12']
    #allocation4 [shape = 'u8[1024]{0}', space=vmem, size = 0x400, scoped, tag = 'output window, operand 2']
    #allocation5 [shape = 's32[2]{0}', space=sflag, size = 0x8, scoped, tag = 'scoped memory for moco_forward.12']
    %14 = vsyncpa [#allocation3], 0
    %s15 = scalar_lea.sflag [#allocation3], 1
    %16 = vsyncpa %s15, 0
    %17 = vsyncpa [#allocation5], 0
    %s18 = scalar_lea.sflag [#allocation5], 1
    %19 = vsyncpa %s18, 0
    loop: start=0, step=1, limit=4
    $region2: #{moco_forward.12} parent=1 // loop_pre_header
      _
    $region3: #{moco_forward.12} parent=1 // loop_header
      %s21 = sphi 0, %s25
      %p22 = scmp.ge.s32.totalorder %s21, 4
      %s28 = sphi 0, %s40
      %s29 = sphi 0, %s36
      %s30 = sphi 0, %s28
      %s31 = sphi 0, %s29
      %s32 = sphi 0, %s30
      %s33 = sphi 0, %s31
      %s45 = sphi 0, %s47
      %s48 = sphi 0, %s45
      %s49 = sphi 0, %s48
      %s65 = sphi 0, %s49
      %s73 = sphi 0, %s75
      %s76 = sphi 0, %s73
      %s77 = sphi 0, %s76
      %s93 = sphi 0, %s77
      %s97 = sphi 0, %s97
      %s99 = sphi 0, %s97
      %s100 = sphi 0, %s99
      %s114 = sphi 0, %s100
      %s118 = sphi 0, %s118
      %s120 = sphi 0, %s118
      %s121 = sphi 0, %s120
      %s135 = sphi 0, %s121
      %s139 = sphi 0, %s139
      %s141 = sphi 0, %s139
      %s142 = sphi 0, %s141
      %s156 = sphi 0, %s142
      %s160 = sphi 0, %s160
      %s162 = sphi 0, %s160
      %s163 = sphi 0, %s162
      %s177 = sphi 0, %s163
      %s185 = sphi 0, %s187
      %s188 = sphi 0, %s185
      %s189 = sphi 0, %s188
      %s205 = sphi 0, %s189
      %s211 = sphi 0, %s213
      %s214 = sphi 0, %s211
      %s215 = sphi 0, %s214
      %s231 = sphi 0, %s215
      %s237 = sphi 0, %s239
      %s240 = sphi 0, %s237
      %s241 = sphi 0, %s240
      %s257 = sphi 0, %s241
    $region4: #{moco_forward.12} parent=1 // loop_header_branch
      %24 = sbr.rel (%p22) target = $region8
    $region5: #{moco_forward.12} parent=1 // loop_body
      %s26 = ssub.s32 %s21, 1
      %s27 = ssub.s32 %s21, 2
      %s34 = sadd.s32 1, %s29
      %p35 = scmp.ge.s32.totalorder %s34, 1
      %s36 = scalar_select %p35, 0, %s34
      %s37 = sadd.s32 1, %s28
      %s38 = scalar_select %p35, %s37, %s28
      %p39 = scmp.ge.s32.totalorder %s38, 2
      %s40 = scalar_select %p39, 0, %s38
      %s41 = ssub.s32 %s28, %s40
      %s42 = ssub.s32 %s29, %s36
      %s43 = sor.u32 %s41, %s42
      %p44 = scmp.eq.s32.totalorder %s43, 0
      %s46 = sadd.s32 %s45, 1
      %s47 = scalar_select %p44, %s45, %s46
      %p50 = pneg %p44
      %p51 = scmp.eq.s32.totalorder %s21, 1
      %p52 = por %p50, %p51
      %p53 = scmp.ne.s32.totalorder %s45, %s48
      %p54 = scmp.eq.s32.totalorder %s21, 0
      %p55 = por %p53, %p54
      %p56 = scmp.ne.s32.totalorder %s45, %s48
      %p57 = scmp.eq.s32.totalorder %s26, 1
      %p58 = por %p56, %p57
      %p59 = scmp.ne.s32.totalorder %s48, %s49
      %p60 = scmp.eq.s32.totalorder %s26, 0
      %p61 = por %p59, %p60
      %p62 = scmp.ne.s32.totalorder %s48, %s49
      %p63 = scmp.eq.s32.totalorder %s27, 1
      %p64 = por %p62, %p63
      %p66 = scmp.ne.s32.totalorder %s49, %s65
      %p67 = scmp.eq.s32.totalorder %s27, 0
      %p68 = por %p66, %p67
      %s69 = ssub.s32 %s28, %s40
      %s70 = ssub.s32 %s29, %s36
      %s71 = sor.u32 %s69, %s70
      %p72 = scmp.eq.s32.totalorder %s71, 0
      %s74 = sadd.s32 %s73, 1
      %s75 = scalar_select %p72, %s73, %s74
      %p78 = pneg %p72
      %p79 = scmp.eq.s32.totalorder %s21, 1
      %p80 = por %p78, %p79
      %p81 = scmp.ne.s32.totalorder %s73, %s76
      %p82 = scmp.eq.s32.totalorder %s21, 0
      %p83 = por %p81, %p82
      %p84 = scmp.ne.s32.totalorder %s73, %s76
      %p85 = scmp.eq.s32.totalorder %s26, 1
      %p86 = por %p84, %p85
      %p87 = scmp.ne.s32.totalorder %s76, %s77
      %p88 = scmp.eq.s32.totalorder %s26, 0
      %p89 = por %p87, %p88
      %p90 = scmp.ne.s32.totalorder %s76, %s77
      %p91 = scmp.eq.s32.totalorder %s27, 1
      %p92 = por %p90, %p91
      %p94 = scmp.ne.s32.totalorder %s77, %s93
      %p95 = scmp.eq.s32.totalorder %s27, 0
      %p96 = por %p94, %p95
      %s98 = sadd.s32 %s97, 1
      %p101 = scmp.eq.s32.totalorder %s21, 1
      %p102 = scmp.ne.s32.totalorder %s97, %s99
      %p103 = scmp.eq.s32.totalorder %s21, 0
      %p104 = por %p102, %p103
      %p105 = scmp.ne.s32.totalorder %s97, %s99
      %p106 = scmp.eq.s32.totalorder %s26, 1
      %p107 = por %p105, %p106
      %p108 = scmp.ne.s32.totalorder %s99, %s100
      %p109 = scmp.eq.s32.totalorder %s26, 0
      %p110 = por %p108, %p109
      %p111 = scmp.ne.s32.totalorder %s99, %s100
      %p112 = scmp.eq.s32.totalorder %s27, 1
      %p113 = por %p111, %p112
      %p115 = scmp.ne.s32.totalorder %s100, %s114
      %p116 = scmp.eq.s32.totalorder %s27, 0
      %p117 = por %p115, %p116
      %s119 = sadd.s32 %s118, 1
      %p122 = scmp.eq.s32.totalorder %s21, 1
      %p123 = scmp.ne.s32.totalorder %s118, %s120
      %p124 = scmp.eq.s32.totalorder %s21, 0
      %p125 = por %p123, %p124
      %p126 = scmp.ne.s32.totalorder %s118, %s120
      %p127 = scmp.eq.s32.totalorder %s26, 1
      %p128 = por %p126, %p127
      %p129 = scmp.ne.s32.totalorder %s120, %s121
      %p130 = scmp.eq.s32.totalorder %s26, 0
      %p131 = por %p129, %p130
      %p132 = scmp.ne.s32.totalorder %s120, %s121
      %p133 = scmp.eq.s32.totalorder %s27, 1
      %p134 = por %p132, %p133
      %p136 = scmp.ne.s32.totalorder %s121, %s135
      %p137 = scmp.eq.s32.totalorder %s27, 0
      %p138 = por %p136, %p137
      %s140 = sadd.s32 %s139, 1
      %p143 = scmp.eq.s32.totalorder %s21, 1
      %p144 = scmp.ne.s32.totalorder %s139, %s141
      %p145 = scmp.eq.s32.totalorder %s21, 0
      %p146 = por %p144, %p145
      %p147 = scmp.ne.s32.totalorder %s139, %s141
      %p148 = scmp.eq.s32.totalorder %s26, 1
      %p149 = por %p147, %p148
      %p150 = scmp.ne.s32.totalorder %s141, %s142
      %p151 = scmp.eq.s32.totalorder %s26, 0
      %p152 = por %p150, %p151
      %p153 = scmp.ne.s32.totalorder %s141, %s142
      %p154 = scmp.eq.s32.totalorder %s27, 1
      %p155 = por %p153, %p154
      %p157 = scmp.ne.s32.totalorder %s142, %s156
      %p158 = scmp.eq.s32.totalorder %s27, 0
      %p159 = por %p157, %p158
      %s161 = sadd.s32 %s160, 1
      %p164 = scmp.eq.s32.totalorder %s21, 1
      %p165 = scmp.ne.s32.totalorder %s160, %s162
      %p166 = scmp.eq.s32.totalorder %s21, 0
      %p167 = por %p165, %p166
      %p168 = scmp.ne.s32.totalorder %s160, %s162
      %p169 = scmp.eq.s32.totalorder %s26, 1
      %p170 = por %p168, %p169
      %p171 = scmp.ne.s32.totalorder %s162, %s163
      %p172 = scmp.eq.s32.totalorder %s26, 0
      %p173 = por %p171, %p172
      %p174 = scmp.ne.s32.totalorder %s162, %s163
      %p175 = scmp.eq.s32.totalorder %s27, 1
      %p176 = por %p174, %p175
      %p178 = scmp.ne.s32.totalorder %s163, %s177
      %p179 = scmp.eq.s32.totalorder %s27, 0
      %p180 = por %p178, %p179
      %s181 = ssub.s32 %s28, %s40
      %s182 = ssub.s32 %s29, %s36
      %s183 = sor.u32 %s181, %s182
      %p184 = scmp.eq.s32.totalorder %s183, 0
      %s186 = sadd.s32 %s185, 1
      %s187 = scalar_select %p184, %s185, %s186
      %p190 = pneg %p184
      %p191 = scmp.eq.s32.totalorder %s21, 1
      %p192 = por %p190, %p191
      %p193 = scmp.ne.s32.totalorder %s185, %s188
      %p194 = scmp.eq.s32.totalorder %s21, 0
      %p195 = por %p193, %p194
      %p196 = scmp.ne.s32.totalorder %s185, %s188
      %p197 = scmp.eq.s32.totalorder %s26, 1
      %p198 = por %p196, %p197
      %p199 = scmp.ne.s32.totalorder %s188, %s189
      %p200 = scmp.eq.s32.totalorder %s26, 0
      %p201 = por %p199, %p200
      %p202 = scmp.ne.s32.totalorder %s188, %s189
      %p203 = scmp.eq.s32.totalorder %s27, 1
      %p204 = por %p202, %p203
      %p206 = scmp.ne.s32.totalorder %s189, %s205
      %p207 = scmp.eq.s32.totalorder %s27, 0
      %p208 = por %p206, %p207
      %s209 = ssub.s32 %s28, %s40
      %p210 = scmp.eq.s32.totalorder %s209, 0
      %s212 = sadd.s32 %s211, 1
      %s213 = scalar_select %p210, %s211, %s212
      %p216 = pneg %p210
      %p217 = scmp.eq.s32.totalorder %s21, 1
      %p218 = por %p216, %p217
      %p219 = scmp.ne.s32.totalorder %s211, %s214
      %p220 = scmp.eq.s32.totalorder %s21, 0
      %p221 = por %p219, %p220
      %p222 = scmp.ne.s32.totalorder %s211, %s214
      %p223 = scmp.eq.s32.totalorder %s26, 1
      %p224 = por %p222, %p223
      %p225 = scmp.ne.s32.totalorder %s214, %s215
      %p226 = scmp.eq.s32.totalorder %s26, 0
      %p227 = por %p225, %p226
      %p228 = scmp.ne.s32.totalorder %s214, %s215
      %p229 = scmp.eq.s32.totalorder %s27, 1
      %p230 = por %p228, %p229
      %p232 = scmp.ne.s32.totalorder %s215, %s231
      %p233 = scmp.eq.s32.totalorder %s27, 0
      %p234 = por %p232, %p233
      %s235 = ssub.s32 %s28, %s40
      %p236 = scmp.eq.s32.totalorder %s235, 0
      %s238 = sadd.s32 %s237, 1
      %s239 = scalar_select %p236, %s237, %s238
      %p242 = pneg %p236
      %p243 = scmp.eq.s32.totalorder %s21, 1
      %p244 = por %p242, %p243
      %p245 = scmp.ne.s32.totalorder %s237, %s240
      %p246 = scmp.eq.s32.totalorder %s21, 0
      %p247 = por %p245, %p246
      %p248 = scmp.ne.s32.totalorder %s237, %s240
      %p249 = scmp.eq.s32.totalorder %s26, 1
      %p250 = por %p248, %p249
      %p251 = scmp.ne.s32.totalorder %s240, %s241
      %p252 = scmp.eq.s32.totalorder %s26, 0
      %p253 = por %p251, %p252
      %p254 = scmp.ne.s32.totalorder %s240, %s241
      %p255 = scmp.eq.s32.totalorder %s27, 1
      %p256 = por %p254, %p255
      %p258 = scmp.ne.s32.totalorder %s241, %s257
      %p259 = scmp.eq.s32.totalorder %s27, 0
      %p260 = por %p258, %p259
      %p261 = scmp.le.s32.totalorder 1, %s21
      %p262 = scmp.lt.s32.totalorder %s21, 3
      %p263 = pnand %p261, %p262
      %p264 = pneg %p263
      // Predicated region
      $region9: #{moco_forward.12} parent=5 // pred_check
        _
      $region10: #{moco_forward.12} parent=5 // pred_check_branch
        %266 = sbr.rel (%p263) target = $region12
      $region11: #{moco_forward.12} parent=5 // pred_region
        %s267 = ssub.s32 %s21, 1
        // Predicated region
        $region13: #{moco_forward.12} parent=11 // pred_check
          %p268 = pneg %p110
        $region14: #{moco_forward.12} parent=11 // pred_check_branch
          %270 = sbr.rel (%p268) target = $region16
        $region15: #{moco_forward.12} parent=11 // pred_region
          _
        $region16: #{moco_forward.12} parent=11 // pred_fallthru
          _
        // Predicated region
        $region17: #{moco_forward.12} parent=11 // pred_check
          %p271 = pneg %p131
        $region18: #{moco_forward.12} parent=11 // pred_check_branch
          %273 = sbr.rel (%p271) target = $region20
        $region19: #{moco_forward.12} parent=11 // pred_region
          _
        $region20: #{moco_forward.12} parent=11 // pred_fallthru
          _
        // Predicated region
        $region21: #{moco_forward.12} parent=11 // pred_check
          %p274 = pneg %p152
        $region22: #{moco_forward.12} parent=11 // pred_check_branch
          %276 = sbr.rel (%p274) target = $region24
        $region23: #{moco_forward.12} parent=11 // pred_region
          _
        $region24: #{moco_forward.12} parent=11 // pred_fallthru
          _
        // Predicated region
        $region25: #{moco_forward.12} parent=11 // pred_check
          %p277 = pneg %p173
        $region26: #{moco_forward.12} parent=11 // pred_check_branch
          %279 = sbr.rel (%p277) target = $region28
        $region27: #{moco_forward.12} parent=11 // pred_region
          _
        $region28: #{moco_forward.12} parent=11 // pred_fallthru
          _
      $region12: #{moco_forward.12} parent=5 // pred_fallthru
        _
      %p280 = scmp.lt.s32.totalorder %s21, 2
      // Predicated region
      $region29: #{moco_forward.12} parent=5 // pred_check
        %p281 = pneg %p280
      $region30: #{moco_forward.12} parent=5 // pred_check_branch
        %283 = sbr.rel (%p281) target = $region32
      $region31: #{moco_forward.12} parent=5 // pred_region
        // Predicated region
        $region33: #{moco_forward.12} parent=31 // pred_check
          %p284 = pneg %p55
        $region34: #{moco_forward.12} parent=31 // pred_check_branch
          %286 = sbr.rel (%p284) target = $region36
        $region35: #{moco_forward.12} parent=31 // pred_region
          %s287 = smul.u32 4, %s29
          %p288 = scmp.lt.s32.totalorder %s28, 1
          %s289 = scalar_select %p288, %s28, 1
          %p290 = scmp.lt.s32.totalorder %s287, 3
          %s291 = scalar_select %p290, %s287, 3
          %s292 = smul.addr %s291, 2
          %s293 = smul.addr %s289, 8
          %s294 = sadd.s32 %s292, %s293
          %s295 = smul.addr %s294, 8
          %s296 = scalar_lea.vmem %s0, %s295
          %s297 = smul.u32 4, %s29
        $region36: #{moco_forward.12} parent=31 // pred_fallthru
          _
        // Predicated region
        $region37: #{moco_forward.12} parent=31 // pred_check
          %p298 = pneg %p83
        $region38: #{moco_forward.12} parent=31 // pred_check_branch
          %300 = sbr.rel (%p298) target = $region40
        $region39: #{moco_forward.12} parent=31 // pred_region
          %s301 = smul.u32 4, %s29
          %p302 = scmp.lt.s32.totalorder %s28, 1
          %s303 = scalar_select %p302, %s28, 1
          %p304 = scmp.lt.s32.totalorder %s301, 3
          %s305 = scalar_select %p304, %s301, 3
          %s306 = smul.addr %s305, 4
          %s307 = smul.addr %s303, 16
          %s308 = sadd.s32 %s306, %s307
          %s309 = smul.addr %s308, 8
          %s310 = scalar_lea.vmem %s1, %s309
          %s311 = smul.u32 4, %s29
        $region40: #{moco_forward.12} parent=31 // pred_fallthru
          _
      $region32: #{moco_forward.12} parent=5 // pred_fallthru
        _
      %p312 = scmp.le.s32.totalorder 1, %s21
      %p313 = scmp.lt.s32.totalorder %s21, 3
      %p314 = pnand %p312, %p313
      %p315 = pneg %p314
      // Predicated region
      $region41: #{moco_forward.12} parent=5 // pred_check
        _
      $region42: #{moco_forward.12} parent=5 // pred_check_branch
        %317 = sbr.rel (%p314) target = $region44
      $region43: #{moco_forward.12} parent=5 // pred_region
        %s318 = ssub.s32 %s21, 1
        %s319 = smul.u32 4, %s31
        %p320 = scmp.lt.s32.totalorder %s30, 1
        %s321 = scalar_select %p320, %s30, 1
        %p322 = scmp.lt.s32.totalorder %s319, 3
        %s323 = scalar_select %p322, %s319, 3
        %s324 = smul.addr %s323, 2
        %s325 = smul.addr %s321, 8
        %s326 = sadd.s32 %s324, %s325
        %s327 = smul.addr %s326, 8
        %s328 = scalar_lea.vmem %s0, %s327
        %p329 = pneg %p61
        %p330 = pneg %p58
        %s331 = smul.u32 4, %s31
        %p332 = scmp.lt.s32.totalorder %s30, 1
        %s333 = scalar_select %p332, %s30, 1
        %p334 = scmp.lt.s32.totalorder %s331, 3
        %s335 = scalar_select %p334, %s331, 3
        %s336 = smul.addr %s335, 4
        %s337 = smul.addr %s333, 16
        %s338 = sadd.s32 %s336, %s337
        %s339 = smul.addr %s338, 8
        %s340 = scalar_lea.vmem %s1, %s339
        %p341 = pneg %p89
        %p342 = pneg %p86
        %p343 = pneg %p110
        %p344 = pneg %p107
        %p345 = pneg %p131
        %p346 = pneg %p128
        %p347 = pneg %p152
        %p348 = pneg %p149
        %p349 = pneg %p173
        %p350 = pneg %p170
        %p351 = pneg %p201
        %p352 = pneg %p198
        %s353 = smul.u32 4, %s31
        %p354 = scmp.lt.s32.totalorder %s30, 1
        %s355 = scalar_select %p354, %s30, 1
        %p356 = scmp.lt.s32.totalorder %s353, 3
        %s357 = scalar_select %p356, %s353, 3
        %s358 = smul.addr %s355, 4
        %s359 = sadd.s32 %s357, %s358
        %s360 = scalar_lea.vmem %s6, %s359
        %p361 = pneg %p227
        %p362 = pneg %p224
        %s363 = sand.u32 %s214, 1
        %s364 = scalar_lea.sflag [#allocation3], %s363
        %s365 = sand.u32 %s214, 1
        %s366 = scalar_lea.vmem [#allocation2], %s365
        %p367 = pneg %p253
        %p368 = pneg %p250
        %s369 = sand.u32 %s240, 1
        %s370 = scalar_lea.sflag [#allocation5], %s369
        %s371 = sand.u32 %s240, 1
        %s372 = scalar_lea.vmem [#allocation4], %s371
        %s373 = smul.u32 4, %s31
        %p374 = scmp.lt.s32.totalorder %s30, 1
        %s375 = scalar_select %p374, %s30, 1
        %p376 = scmp.lt.s32.totalorder %s373, 3
        %s377 = scalar_select %p376, %s373, 3
        %s378 = smul.addr %s377, 2
        %s379 = smul.addr %s375, 8
        %s380 = sadd.s32 %s378, %s379
        %s381 = smul.addr %s380, 8
        %s382 = scalar_lea.vmem %s0, %s381
        %s383 = smul.u32 4, %s31
        %s384 = smul.u32 4, %s31
        %p385 = scmp.lt.s32.totalorder %s30, 1
        %s386 = scalar_select %p385, %s30, 1
        %p387 = scmp.lt.s32.totalorder %s384, 3
        %s388 = scalar_select %p387, %s384, 3
        %s389 = smul.addr %s388, 4
        %s390 = smul.addr %s386, 16
        %s391 = sadd.s32 %s389, %s390
        %s392 = smul.addr %s391, 8
        %s393 = scalar_lea.vmem %s1, %s392
        %s394 = smul.u32 4, %s31
        %s395 = smul.u32 4, %s31
        %p396 = scmp.lt.s32.totalorder %s30, 1
        %s397 = scalar_select %p396, %s30, 1
        %p398 = scmp.lt.s32.totalorder %s395, 3
        %s399 = scalar_select %p398, %s395, 3
        %s400 = smul.addr %s397, 4
        %s401 = sadd.s32 %s399, %s400
        %s402 = scalar_lea.vmem %s6, %s401
        %s403 = smul.u32 4, %s31
        %p405 = scmp.eq.s32.totalorder %s31, 0
        // Predicated region
        $region45: #{moco_forward.12} parent=43 // pred_check
          %p406 = pneg %p405
        $region46: #{moco_forward.12} parent=43 // pred_check_branch
          %408 = sbr.rel (%p406) target = $region48
        $region47: #{moco_forward.12} parent=43 // pred_region
          %vm409 = vcmask 0
          %410 = vst.msk [vmem:[%s366] sm:$0x1] %vm409, 0.0
          %411 = vst.msk [vmem:[%s372] sm:$0x1] %vm409, 0.0
        $region48: #{moco_forward.12} parent=43 // pred_fallthru
          _
        %v412 = vld [vmem:[%s382] sm:$0xff]
        %v413 = vld [vmem:[%s382 + $0x8] sm:$0xff]
        %v414 = vld [vmem:[%s382 + $0x10] sm:$0xff]
        %v415 = vld [vmem:[%s382 + $0x18] sm:$0xff]
        %v416 = vld [vmem:[%s382 + $0x20] sm:$0xff]
        %v417 = vld [vmem:[%s382 + $0x28] sm:$0xff]
        %v418 = vld [vmem:[%s382 + $0x30] sm:$0xff]
        %v419 = vld [vmem:[%s382 + $0x38] sm:$0xff]
        %v420 = vpack.c.bf16 %v413, %v412
        %v421 = vpack.c.bf16 %v415, %v414
        %v422 = vpack.c.bf16 %v417, %v416
        %v423 = vpack.c.bf16 %v419, %v418
        %v424 = vld [vmem:[%s3] sm:$0xff]
        %v425 = vld [vmem:[%s3 + $0x8] sm:$0xff]
        %v426 = vld [vmem:[%s3 + $0x10] sm:$0xff]
        %v427 = vld [vmem:[%s3 + $0x18] sm:$0xff]
        %v428 = vld [vmem:[%s3 + $0x20] sm:$0xff]
        %v429 = vld [vmem:[%s3 + $0x28] sm:$0xff]
        %v430 = vld [vmem:[%s3 + $0x30] sm:$0xff]
        %v431 = vld [vmem:[%s3 + $0x38] sm:$0xff]
        %v432 = vld [vmem:[%s3 + $0x40] sm:$0xff]
        %v433 = vld [vmem:[%s3 + $0x48] sm:$0xff]
        %v434 = vld [vmem:[%s3 + $0x50] sm:$0xff]
        %v435 = vld [vmem:[%s3 + $0x58] sm:$0xff]
        %v436 = vld [vmem:[%s3 + $0x60] sm:$0xff]
        %v437 = vld [vmem:[%s3 + $0x68] sm:$0xff]
        %v438 = vld [vmem:[%s3 + $0x70] sm:$0xff]
        %v439 = vld [vmem:[%s3 + $0x78] sm:$0xff]
        %v440 = vpack.c.bf16 %v425, %v424
        %v441 = vpack.c.bf16 %v427, %v426
        %v442 = vpack.c.bf16 %v429, %v428
        %v443 = vpack.c.bf16 %v431, %v430
        %v444 = vpack.c.bf16 %v433, %v432
        %v445 = vpack.c.bf16 %v435, %v434
        %v446 = vpack.c.bf16 %v437, %v436
        %v447 = vpack.c.bf16 %v439, %v438
        %448 = vmatprep.subr.bf16.mxu0 0
        %449 = vmatpush1.bf16.msra.mxu0 %v440
        %450 = vmatprep.subr.bf16.mxu0 0
        %451 = vmatpush1.bf16.msra.mxu0 %v441
        %452 = vmatprep.subr.bf16.mxu0 0
        %453 = vmatpush1.bf16.msra.mxu0 %v442
        %454 = vmatprep.subr.bf16.mxu0 0
        %455 = vmatpush1.bf16.msra.mxu0 %v443
        %456 = vmatprep.subr.bf16.mxu0 0
        %457 = vmatpush1.bf16.msra.mxu0 %v444
        %458 = vmatprep.subr.bf16.mxu0 0
        %459 = vmatpush1.bf16.msra.mxu0 %v445
        %460 = vmatprep.subr.bf16.mxu0 0
        %461 = vmatpush1.bf16.msra.mxu0 %v446
        %462 = vmatprep.subr.bf16.mxu0 0
        %463 = vmatpush1.bf16.msra.mxu0 %v447
        %464 = vmatprep.subr.bf16.mxu0 0
        %465 = vmatpush1.bf16.msra.mxu0 0
        %466 = vmatprep.subr.bf16.mxu0 0
        %467 = vmatpush1.bf16.msra.mxu0 0
        %468 = vmatprep.subr.bf16.mxu0 0
        %469 = vmatpush1.bf16.msra.mxu0 0
        %470 = vmatprep.subr.bf16.mxu0 0
        %471 = vmatpush1.bf16.msra.mxu0 0
        %472 = vmatprep.subr.bf16.mxu0 0
        %473 = vmatpush1.bf16.msra.mxu0 0
        %474 = vmatprep.subr.bf16.mxu0 0
        %475 = vmatpush1.bf16.msra.mxu0 0
        %476 = vmatprep.subr.bf16.mxu0 0
        %477 = vmatpush1.bf16.msra.mxu0 0
        %478 = vmatprep.subr.bf16.mxu0 0
        %479 = vmatpush1.bf16.msra.mxu0 0
        %480 = vmatprep.mubr.bf16.mxu0 0
        %481 = vmatmul.mubr.bf16.gmra.mrb[0].mxu0 %v420
        %v482 = vpop.f32.mrb[0].mxu0
        %v483 = vadd.f32 0.0, %v482
        %v484 = vpop.f32.mrb[0].mxu0
        %v485 = vpop.f32.mrb[0].mxu0
        %v486 = vadd.f32 0.0, %v485
        %v487 = vpop.f32.mrb[0].mxu0
        %488 = vmatprep.mubr.bf16.mxu0 0
        %489 = vmatmul.mubr.bf16.gmra.mrb[0].mxu0 %v421
        %v490 = vpop.f32.mrb[0].mxu0
        %v491 = vadd.f32 0.0, %v490
        %v492 = vpop.f32.mrb[0].mxu0
        %v493 = vpop.f32.mrb[0].mxu0
        %v494 = vadd.f32 0.0, %v493
        %v495 = vpop.f32.mrb[0].mxu0
        %496 = vmatprep.mubr.bf16.mxu0 0
        %497 = vmatmul.mubr.bf16.gmra.mrb[0].mxu0 %v422
        %v498 = vpop.f32.mrb[0].mxu0
        %v499 = vadd.f32 0.0, %v498
        %v500 = vpop.f32.mrb[0].mxu0
        %v501 = vpop.f32.mrb[0].mxu0
        %v502 = vadd.f32 0.0, %v501
        %v503 = vpop.f32.mrb[0].mxu0
        %504 = vmatprep.mubr.bf16.mxu0 0
        %505 = vmatmul.mubr.bf16.gmra.mrb[0].mxu0 %v423
        %v506 = vpop.f32.mrb[0].mxu0
        %v507 = vadd.f32 0.0, %v506
        %v508 = vpop.f32.mrb[0].mxu0
        %v509 = vpop.f32.mrb[0].mxu0
        %v510 = vadd.f32 0.0, %v509
        %v511 = vpop.f32.mrb[0].mxu0
        %512 = vdwg.mxu0
        %v513 = vmax.f32 %v483, 0.0
        %v514 = vmax.f32 %v486, 0.0
        %v515 = vmax.f32 %v491, 0.0
        %v516 = vmax.f32 %v494, 0.0
        %v517 = vmax.f32 %v499, 0.0
        %v518 = vmax.f32 %v502, 0.0
        %v519 = vmax.f32 %v507, 0.0
        %v520 = vmax.f32 %v510, 0.0
        %v521 = vpack.c.bf16 %v514, %v513
        %v522 = vpack.c.bf16 %v516, %v515
        %v523 = vpack.c.bf16 %v518, %v517
        %v524 = vpack.c.bf16 %v520, %v519
        %v525 = vld [vmem:[%s4] sm:$0xff]
        %v526 = vld [vmem:[%s4 + $0x8] sm:$0xff]
        %v527 = vld [vmem:[%s4 + $0x10] sm:$0xff]
        %v528 = vld [vmem:[%s4 + $0x18] sm:$0xff]
        %v529 = vld [vmem:[%s4 + $0x20] sm:$0xff]
        %v530 = vld [vmem:[%s4 + $0x28] sm:$0xff]
        %v531 = vld [vmem:[%s4 + $0x30] sm:$0xff]
        %v532 = vld [vmem:[%s4 + $0x38] sm:$0xff]
        %v533 = vld [vmem:[%s4 + $0x40] sm:$0xff]
        %v534 = vld [vmem:[%s4 + $0x48] sm:$0xff]
        %v535 = vld [vmem:[%s4 + $0x50] sm:$0xff]
        %v536 = vld [vmem:[%s4 + $0x58] sm:$0xff]
        %v537 = vld [vmem:[%s4 + $0x60] sm:$0xff]
        %v538 = vld [vmem:[%s4 + $0x68] sm:$0xff]
        %v539 = vld [vmem:[%s4 + $0x70] sm:$0xff]
        %v540 = vld [vmem:[%s4 + $0x78] sm:$0xff]
        %v541 = vld [vmem:[%s4 + $0x80] sm:$0xff]
        %v542 = vld [vmem:[%s4 + $0x88] sm:$0xff]
        %v543 = vld [vmem:[%s4 + $0x90] sm:$0xff]
        %v544 = vld [vmem:[%s4 + $0x98] sm:$0xff]
        %v545 = vld [vmem:[%s4 + $0xa0] sm:$0xff]
        %v546 = vld [vmem:[%s4 + $0xa8] sm:$0xff]
        %v547 = vld [vmem:[%s4 + $0xb0] sm:$0xff]
        %v548 = vld [vmem:[%s4 + $0xb8] sm:$0xff]
        %v549 = vld [vmem:[%s4 + $0xc0] sm:$0xff]
        %v550 = vld [vmem:[%s4 + $0xc8] sm:$0xff]
        %v551 = vld [vmem:[%s4 + $0xd0] sm:$0xff]
        %v552 = vld [vmem:[%s4 + $0xd8] sm:$0xff]
        %v553 = vld [vmem:[%s4 + $0xe0] sm:$0xff]
        %v554 = vld [vmem:[%s4 + $0xe8] sm:$0xff]
        %v555 = vld [vmem:[%s4 + $0xf0] sm:$0xff]
        %v556 = vld [vmem:[%s4 + $0xf8] sm:$0xff]
        %v557 = vpack.c.bf16 %v527, %v525
        %v558 = vpack.c.bf16 %v528, %v526
        %v559 = vpack.c.bf16 %v531, %v529
        %v560 = vpack.c.bf16 %v532, %v530
        %v561 = vpack.c.bf16 %v535, %v533
        %v562 = vpack.c.bf16 %v536, %v534
        %v563 = vpack.c.bf16 %v539, %v537
        %v564 = vpack.c.bf16 %v540, %v538
        %v565 = vpack.c.bf16 %v543, %v541
        %v566 = vpack.c.bf16 %v544, %v542
        %v567 = vpack.c.bf16 %v547, %v545
        %v568 = vpack.c.bf16 %v548, %v546
        %v569 = vpack.c.bf16 %v551, %v549
        %v570 = vpack.c.bf16 %v552, %v550
        %v571 = vpack.c.bf16 %v555, %v553
        %v572 = vpack.c.bf16 %v556, %v554
        %573 = vmatprep.subr.bf16.mxu0 %v558
        %574 = vmatpush1.bf16.msra.mxu0 %v557
        %575 = vmatprep.subr.bf16.mxu0 %v560
        %576 = vmatpush1.bf16.msra.mxu0 %v559
        %577 = vmatprep.subr.bf16.mxu0 %v562
        %578 = vmatpush1.bf16.msra.mxu0 %v561
        %579 = vmatprep.subr.bf16.mxu0 %v564
        %580 = vmatpush1.bf16.msra.mxu0 %v563
        %581 = vmatprep.subr.bf16.mxu0 %v566
        %582 = vmatpush1.bf16.msra.mxu0 %v565
        %583 = vmatprep.subr.bf16.mxu0 %v568
        %584 = vmatpush1.bf16.msra.mxu0 %v567
        %585 = vmatprep.subr.bf16.mxu0 %v570
        %586 = vmatpush1.bf16.msra.mxu0 %v569
        %587 = vmatprep.subr.bf16.mxu0 %v572
        %588 = vmatpush1.bf16.msra.mxu0 %v571
        %589 = vmatprep.subr.bf16.mxu0 0
        %590 = vmatpush1.bf16.msra.mxu0 0
        %591 = vmatprep.subr.bf16.mxu0 0
        %592 = vmatpush1.bf16.msra.mxu0 0
        %593 = vmatprep.subr.bf16.mxu0 0
        %594 = vmatpush1.bf16.msra.mxu0 0
        %595 = vmatprep.subr.bf16.mxu0 0
        %596 = vmatpush1.bf16.msra.mxu0 0
        %597 = vmatprep.subr.bf16.mxu0 0
        %598 = vmatpush1.bf16.msra.mxu0 0
        %599 = vmatprep.subr.bf16.mxu0 0
        %600 = vmatpush1.bf16.msra.mxu0 0
        %601 = vmatprep.subr.bf16.mxu0 0
        %602 = vmatpush1.bf16.msra.mxu0 0
        %603 = vmatprep.subr.bf16.mxu0 0
        %604 = vmatpush1.bf16.msra.mxu0 0
        %605 = vmatprep.mubr.bf16.mxu0 0
        %606 = vmatmul.mubr.bf16.gmra.mrb[0].mxu0 %v521
        %v607 = vpop.f32.mrb[0].mxu0
        %v608 = vadd.f32 0.0, %v607
        %v609 = vpop.f32.mrb[0].mxu0
        %v610 = vadd.f32 0.0, %v609
        %v611 = vpop.f32.mrb[0].mxu0
        %v612 = vadd.f32 0.0, %v611
        %v613 = vpop.f32.mrb[0].mxu0
        %v614 = vadd.f32 0.0, %v613
        %615 = vmatprep.mubr.bf16.mxu0 0
        %616 = vmatmul.mubr.bf16.gmra.mrb[0].mxu0 %v522
        %v617 = vpop.f32.mrb[0].mxu0
        %v618 = vadd.f32 0.0, %v617
        %v619 = vpop.f32.mrb[0].mxu0
        %v620 = vadd.f32 0.0, %v619
        %v621 = vpop.f32.mrb[0].mxu0
        %v622 = vadd.f32 0.0, %v621
        %v623 = vpop.f32.mrb[0].mxu0
        %v624 = vadd.f32 0.0, %v623
        %625 = vmatprep.mubr.bf16.mxu0 0
        %626 = vmatmul.mubr.bf16.gmra.mrb[0].mxu0 %v523
        %v627 = vpop.f32.mrb[0].mxu0
        %v628 = vadd.f32 0.0, %v627
        %v629 = vpop.f32.mrb[0].mxu0
        %v630 = vadd.f32 0.0, %v629
        %v631 = vpop.f32.mrb[0].mxu0
        %v632 = vadd.f32 0.0, %v631
        %v633 = vpop.f32.mrb[0].mxu0
        %v634 = vadd.f32 0.0, %v633
        %635 = vmatprep.mubr.bf16.mxu0 0
        %636 = vmatmul.mubr.bf16.gmra.mrb[0].mxu0 %v524
        %v637 = vpop.f32.mrb[0].mxu0
        %v638 = vadd.f32 0.0, %v637
        %v639 = vpop.f32.mrb[0].mxu0
        %v640 = vadd.f32 0.0, %v639
        %v641 = vpop.f32.mrb[0].mxu0
        %v642 = vadd.f32 0.0, %v641
        %v643 = vpop.f32.mrb[0].mxu0
        %v644 = vadd.f32 0.0, %v643
        %645 = vdwg.mxu0
        %v646 = vld [vmem:[%s393] sm:$0xff]
        %v647 = vld [vmem:[%s393 + $0x8] sm:$0xff]
        %v648 = vld [vmem:[%s393 + $0x10] sm:$0xff]
        %v649 = vld [vmem:[%s393 + $0x18] sm:$0xff]
        %v650 = vld [vmem:[%s393 + $0x20] sm:$0xff]
        %v651 = vld [vmem:[%s393 + $0x28] sm:$0xff]
        %v652 = vld [vmem:[%s393 + $0x30] sm:$0xff]
        %v653 = vld [vmem:[%s393 + $0x38] sm:$0xff]
        %v654 = vld [vmem:[%s393 + $0x40] sm:$0xff]
        %v655 = vld [vmem:[%s393 + $0x48] sm:$0xff]
        %v656 = vld [vmem:[%s393 + $0x50] sm:$0xff]
        %v657 = vld [vmem:[%s393 + $0x58] sm:$0xff]
        %v658 = vld [vmem:[%s393 + $0x60] sm:$0xff]
        %v659 = vld [vmem:[%s393 + $0x68] sm:$0xff]
        %v660 = vld [vmem:[%s393 + $0x70] sm:$0xff]
        %v661 = vld [vmem:[%s393 + $0x78] sm:$0xff]
        %v662 = vsub.f32 %v608, %v646
        %v663 = vsub.f32 %v610, %v647
        %v664 = vsub.f32 %v612, %v648
        %v665 = vsub.f32 %v614, %v649
        %v666 = vsub.f32 %v618, %v650
        %v667 = vsub.f32 %v620, %v651
        %v668 = vsub.f32 %v622, %v652
        %v669 = vsub.f32 %v624, %v653
        %v670 = vsub.f32 %v628, %v654
        %v671 = vsub.f32 %v630, %v655
        %v672 = vsub.f32 %v632, %v656
        %v673 = vsub.f32 %v634, %v657
        %v674 = vsub.f32 %v638, %v658
        %v675 = vsub.f32 %v640, %v659
        %v676 = vsub.f32 %v642, %v660
        %v677 = vsub.f32 %v644, %v661
        %v678 = vmul.f32 %v662, %v662
        %v679 = vmul.f32 %v663, %v663
        %v680 = vmul.f32 %v664, %v664
        %v681 = vmul.f32 %v665, %v665
        %v682 = vmul.f32 %v666, %v666
        %v683 = vmul.f32 %v667, %v667
        %v684 = vmul.f32 %v668, %v668
        %v685 = vmul.f32 %v669, %v669
        %v686 = vmul.f32 %v670, %v670
        %v687 = vmul.f32 %v671, %v671
        %v688 = vmul.f32 %v672, %v672
        %v689 = vmul.f32 %v673, %v673
        %v690 = vmul.f32 %v674, %v674
        %v691 = vmul.f32 %v675, %v675
        %v692 = vmul.f32 %v676, %v676
        %v693 = vmul.f32 %v677, %v677
        %v694 = vadd.f32 %v678, %v679
        %695 = vadd.xlane.f32.xlu0 %v694
        %v696 = vpop.xlane.xlu0 %695
        %v697 = vadd.f32 %v680, %v681
        %698 = vadd.xlane.f32.xlu0 %v697
        %v699 = vpop.xlane.xlu0 %698
        %v700 = vadd.f32 %v682, %v683
        %701 = vadd.xlane.f32.xlu0 %v700
        %v702 = vpop.xlane.xlu0 %701
        %v703 = vadd.f32 %v684, %v685
        %704 = vadd.xlane.f32.xlu0 %v703
        %v705 = vpop.xlane.xlu0 %704
        %v706 = vadd.f32 %v686, %v687
        %707 = vadd.xlane.f32.xlu0 %v706
        %v708 = vpop.xlane.xlu0 %707
        %v709 = vadd.f32 %v688, %v689
        %710 = vadd.xlane.f32.xlu0 %v709
        %v711 = vpop.xlane.xlu0 %710
        %v712 = vadd.f32 %v690, %v691
        %713 = vadd.xlane.f32.xlu0 %v712
        %v714 = vpop.xlane.xlu0 %713
        %v715 = vadd.f32 %v692, %v693
        %716 = vadd.xlane.f32.xlu0 %v715
        %v717 = vpop.xlane.xlu0 %716
        %v718 = vrcp.pop 256.0
        %v719 = vmul.f32 %v696, %v718
        %v720 = vmul.f32 %v699, %v718
        %v721 = vmul.f32 %v702, %v718
        %v722 = vmul.f32 %v705, %v718
        %v723 = vmul.f32 %v708, %v718
        %v724 = vmul.f32 %v711, %v718
        %v725 = vmul.f32 %v714, %v718
        %v726 = vmul.f32 %v717, %v718
        %v727 = vld [vmem:[%s366] sm:$0x1]
        %vm728 = vcmask 7168
        %v729 = vsel %vm728, %v719, 0.0
        %v730 = vsel %vm728, %v720, 0.0
        %v731 = vadd.f32 %v729, %v730
        %v732 = vsel %vm728, %v721, 0.0
        %v733 = vadd.f32 %v731, %v732
        %v734 = vsel %vm728, %v722, 0.0
        %v735 = vadd.f32 %v733, %v734
        %v736 = vsel %vm728, %v723, 0.0
        %v737 = vadd.f32 %v735, %v736
        %v738 = vsel %vm728, %v724, 0.0
        %v739 = vadd.f32 %v737, %v738
        %v740 = vsel %vm728, %v725, 0.0
        %v741 = vadd.f32 %v739, %v740
        %v742 = vsel %vm728, %v726, 0.0
        %v743 = vadd.f32 %v741, %v742
        %744 = vadd.xlane.f32.xlu0 %v743
        %v745 = vpop.xlane.xlu0 %744
        %v746 = vrot.slane %v745, 4
        %v747 = vadd.f32 %v745, %v746
        %v748 = vrot.slane %v747, 2
        %v749 = vadd.f32 %v747, %v748
        %v750 = vrot.slane %v749, 1
        %v751 = vadd.f32 %v749, %v750
        %s752 = vtos %v751
        %v753 = vstv %s752
        %v754 = vadd.f32 %v727, %v753
        %vm755 = vcmask 0
        %756 = vst.msk [vmem:[%s366] sm:$0x1] %vm755, %v754
        %v757 = vld [vmem:[%s372] sm:$0x1]
        %v758 = vsel %vm728, 1.0, 0.0
        %v759 = vadd.f32 %v758, %v758
        %760 = vadd.xlane.f32.xlu0 %v759
        %v761 = vpop.xlane.xlu0 %760
        %v762 = vrot.slane %v761, 4
        %v763 = vadd.f32 %v761, %v762
        %v764 = vrot.slane %v763, 2
        %v765 = vadd.f32 %v763, %v764
        %v766 = vrot.slane %v765, 1
        %v767 = vadd.f32 %v765, %v766
        %s768 = vtos %v767
        %s769 = smul.f32 %s768, 4.0
        %v770 = vstv %s769
        %v771 = vadd.f32 %v757, %v770
        %772 = vst.msk [vmem:[%s372] sm:$0x1] %vm755, %v771
        %v773 = vadd.f32 %v513, %v514
        %v774 = vrot.slane %v773, 4
        %v775 = vadd.f32 %v773, %v774
        %v776 = vrot.slane %v775, 2
        %v777 = vadd.f32 %v775, %v776
        %v778 = vrot.slane %v777, 1
        %v779 = vadd.f32 %v777, %v778
        %v780 = vadd.f32 %v515, %v516
        %v781 = vrot.slane %v780, 4
        %v782 = vadd.f32 %v780, %v781
        %v783 = vrot.slane %v782, 2
        %v784 = vadd.f32 %v782, %v783
        %v785 = vrot.slane %v784, 1
        %v786 = vadd.f32 %v784, %v785
        %v787 = vadd.f32 %v517, %v518
        %v788 = vrot.slane %v787, 4
        %v789 = vadd.f32 %v787, %v788
        %v790 = vrot.slane %v789, 2
        %v791 = vadd.f32 %v789, %v790
        %v792 = vrot.slane %v791, 1
        %v793 = vadd.f32 %v791, %v792
        %v794 = vadd.f32 %v519, %v520
        %v795 = vrot.slane %v794, 4
        %v796 = vadd.f32 %v794, %v795
        %v797 = vrot.slane %v796, 2
        %v798 = vadd.f32 %v796, %v797
        %v799 = vrot.slane %v798, 1
        %v800 = vadd.f32 %v798, %v799
        %v801 = vrcp.pop 16.0
        %v802 = vmul.f32 %v779, %v801
        %v803 = vmul.f32 %v786, %v801
        %v804 = vmul.f32 %v793, %v801
        %v805 = vmul.f32 %v800, %v801
        %v806 = vpack.c.bf16 %v802, %v802
        %v807 = vpack.c.bf16 %v803, %v803
        %v808 = vpack.c.bf16 %v804, %v804
        %v809 = vpack.c.bf16 %v805, %v805
        %v810 = vld [vmem:[%s5] sm:$0xff]
        %v811 = vld [vmem:[%s5 + $0x8] sm:$0xff]
        %v812 = vld [vmem:[%s5 + $0x10] sm:$0xff]
        %v813 = vld [vmem:[%s5 + $0x18] sm:$0xff]
        %v814 = vld [vmem:[%s5 + $0x20] sm:$0xff]
        %v815 = vld [vmem:[%s5 + $0x28] sm:$0xff]
        %v816 = vld [vmem:[%s5 + $0x30] sm:$0xff]
        %v817 = vld [vmem:[%s5 + $0x38] sm:$0xff]
        %v818 = vld [vmem:[%s5 + $0x40] sm:$0xff]
        %v819 = vld [vmem:[%s5 + $0x48] sm:$0xff]
        %v820 = vld [vmem:[%s5 + $0x50] sm:$0xff]
        %v821 = vld [vmem:[%s5 + $0x58] sm:$0xff]
        %v822 = vld [vmem:[%s5 + $0x60] sm:$0xff]
        %v823 = vld [vmem:[%s5 + $0x68] sm:$0xff]
        %v824 = vld [vmem:[%s5 + $0x70] sm:$0xff]
        %v825 = vld [vmem:[%s5 + $0x78] sm:$0xff]
        %v826 = vpack.c.bf16 %v811, %v810
        %v827 = vpack.c.bf16 %v813, %v812
        %v828 = vpack.c.bf16 %v815, %v814
        %v829 = vpack.c.bf16 %v817, %v816
        %v830 = vpack.c.bf16 %v819, %v818
        %v831 = vpack.c.bf16 %v821, %v820
        %v832 = vpack.c.bf16 %v823, %v822
        %v833 = vpack.c.bf16 %v825, %v824
        %v838 = vunpack.c.l.b16 %v806
        %v839 = vunpack.c.l.b16 %v807
        %v840 = vunpack.c.l.b16 %v808
        %v841 = vunpack.c.l.b16 %v809
        %vm842 = vcmask 1041409
        %v843 = vsel %vm842, %v839, %v838
        %vm844 = vcmask 1042434
        %v845 = vsel %vm844, %v840, %v843
        %vm846 = vcmask 1043459
        %v847 = vsel %vm846, %v841, %v845
        %v848 = vpack.c.b16 %v847, %v847
        %850 = vmatprep.subr.bf16.mxu0 0
        %851 = vmatpush1.bf16.msra.mxu0 %v826
        %852 = vmatprep.subr.bf16.mxu0 0
        %853 = vmatpush1.bf16.msra.mxu0 %v827
        %854 = vmatprep.subr.bf16.mxu0 0
        %855 = vmatpush1.bf16.msra.mxu0 %v828
        %856 = vmatprep.subr.bf16.mxu0 0
        %857 = vmatpush1.bf16.msra.mxu0 %v829
        %858 = vmatprep.subr.bf16.mxu0 0
        %859 = vmatpush1.bf16.msra.mxu0 %v830
        %860 = vmatprep.subr.bf16.mxu0 0
        %861 = vmatpush1.bf16.msra.mxu0 %v831
        %862 = vmatprep.subr.bf16.mxu0 0
        %863 = vmatpush1.bf16.msra.mxu0 %v832
        %864 = vmatprep.subr.bf16.mxu0 0
        %865 = vmatpush1.bf16.msra.mxu0 %v833
        %866 = vmatprep.subr.bf16.mxu0 0
        %867 = vmatpush1.bf16.msra.mxu0 0
        %868 = vmatprep.subr.bf16.mxu0 0
        %869 = vmatpush1.bf16.msra.mxu0 0
        %870 = vmatprep.subr.bf16.mxu0 0
        %871 = vmatpush1.bf16.msra.mxu0 0
        %872 = vmatprep.subr.bf16.mxu0 0
        %873 = vmatpush1.bf16.msra.mxu0 0
        %874 = vmatprep.subr.bf16.mxu0 0
        %875 = vmatpush1.bf16.msra.mxu0 0
        %876 = vmatprep.subr.bf16.mxu0 0
        %877 = vmatpush1.bf16.msra.mxu0 0
        %878 = vmatprep.subr.bf16.mxu0 0
        %879 = vmatpush1.bf16.msra.mxu0 0
        %880 = vmatprep.subr.bf16.mxu0 0
        %881 = vmatpush1.bf16.msra.mxu0 0
        %882 = vmatprep.mubr.bf16.mxu0 0
        %883 = vmatmul.mubr.bf16.gmra.mrb[0].mxu0 %v848
        %v884 = vpop.f32.mrb[0].mxu0
        %v885 = vadd.f32 0.0, %v884
        %v886 = vpop.f32.mrb[0].mxu0
        %v887 = vpop.f32.mrb[0].mxu0
        %v888 = vpop.f32.mrb[0].mxu0
        %889 = vdwg.mxu0
        %v892 = vunpack.c.l.s4 1966171168
        %v893 = vunpack.c.0.s8 %v892
        %v894 = vlaneseq
        %v895 = vshrl.u32 %v894, 7
        %v896 = vsub.s32 %v893, %v895
        %v897 = vrot.slane %v885, %v896
        %v898 = vcombine.high %v897, %v897
        %v900 = vunpack.c.l.s4 1966171168
        %v901 = vunpack.c.0.s8 %v900
        %v902 = vlaneseq
        %v903 = vshrl.u32 %v902, 7
        %v904 = vsub.s32 %v901, %v903
        %v905 = vrot.slane %v897, %v904
        %v907 = vunpack.c.l.s4 1966171168
        %v908 = vunpack.c.0.s8 %v907
        %v909 = vlaneseq
        %v910 = vshrl.u32 %v909, 7
        %v911 = vsub.s32 %v908, %v910
        %v912 = vrot.slane %v898, %v911
        %v913 = vcombine.high %v905, %v905
        %v914 = vcombine.high %v912, %v912
        %919 = vst [vmem:[%s402] sm:$0x1] %v905
        %920 = vst [vmem:[%s402 + $0x1] sm:$0x1] %v912
        %921 = vst [vmem:[%s402 + $0x2] sm:$0x1] %v913
        %922 = vst [vmem:[%s402 + $0x3] sm:$0x1] %v914
        %s923 = smul.u32 4, %s31
        %p924 = scmp.lt.s32.totalorder %s30, 1
        %s925 = scalar_select %p924, %s30, 1
        %p926 = scmp.lt.s32.totalorder %s923, 3
        %s927 = scalar_select %p926, %s923, 3
        %s928 = smul.addr %s925, 4
        %s929 = sadd.s32 %s927, %s928
        %s930 = scalar_lea.vmem %s6, %s929
        %s931 = sand.u32 %s214, 1
        %s932 = scalar_lea.sflag [#allocation3], %s931
        %s933 = sand.u32 %s214, 1
        %s934 = scalar_lea.vmem [#allocation2], %s933
        %s935 = sand.u32 %s240, 1
        %s936 = scalar_lea.sflag [#allocation5], %s935
        %s937 = sand.u32 %s240, 1
        %s938 = scalar_lea.vmem [#allocation4], %s937
        // Predicated region
        $region49: #{moco_forward.12} parent=43 // pred_check
          %p939 = pneg %p198
        $region50: #{moco_forward.12} parent=43 // pred_check_branch
          %941 = sbr.rel (%p939) target = $region52
        $region51: #{moco_forward.12} parent=43 // pred_region
          %s942 = smul.u32 4, %s31
        $region52: #{moco_forward.12} parent=43 // pred_fallthru
          _
        // Predicated region
        $region53: #{moco_forward.12} parent=43 // pred_check
          %p943 = pneg %p224
        $region54: #{moco_forward.12} parent=43 // pred_check_branch
          %945 = sbr.rel (%p943) target = $region56
        $region55: #{moco_forward.12} parent=43 // pred_region
          %s947 = ssub.s32 16, 16
          %948 = vsyncadd %s932, %s947
          %s949 = smul.addr %s30, 16
          %s950 = scalar_lea.hbm %s7, %s949
          %s952 = sshll.u32 %s934, 4
          %s953 = int_to_ptr.vmem [resolvable:$true] %s952
          %955 = dma.vmem_to_hbm [thread:$0]  %s953, 16, %s950, %s932
        $region56: #{moco_forward.12} parent=43 // pred_fallthru
          _
        // Predicated region
        $region57: #{moco_forward.12} parent=43 // pred_check
          %p956 = pneg %p250
        $region58: #{moco_forward.12} parent=43 // pred_check_branch
          %958 = sbr.rel (%p956) target = $region60
        $region59: #{moco_forward.12} parent=43 // pred_region
          %s960 = ssub.s32 16, 16
          %961 = vsyncadd %s936, %s960
          %s962 = smul.addr %s30, 16
          %s963 = scalar_lea.hbm %s8, %s962
          %s965 = sshll.u32 %s938, 4
          %s966 = int_to_ptr.vmem [resolvable:$true] %s965
          %968 = dma.vmem_to_hbm [thread:$0]  %s966, 16, %s963, %s936
        $region60: #{moco_forward.12} parent=43 // pred_fallthru
          _
      $region44: #{moco_forward.12} parent=5 // pred_fallthru
        _
      %p969 = scmp.le.s32.totalorder 2, %s21
      // Predicated region
      $region61: #{moco_forward.12} parent=5 // pred_check
        %p970 = pneg %p969
      $region62: #{moco_forward.12} parent=5 // pred_check_branch
        %972 = sbr.rel (%p970) target = $region64
      $region63: #{moco_forward.12} parent=5 // pred_region
        %s973 = ssub.s32 %s21, 2
        // Predicated region
        $region65: #{moco_forward.12} parent=63 // pred_check
          %p974 = pneg %p204
        $region66: #{moco_forward.12} parent=63 // pred_check_branch
          %976 = sbr.rel (%p974) target = $region68
        $region67: #{moco_forward.12} parent=63 // pred_region
          %s977 = smul.u32 4, %s33
          %p978 = scmp.lt.s32.totalorder %s32, 1
          %s979 = scalar_select %p978, %s32, 1
          %p980 = scmp.lt.s32.totalorder %s977, 3
          %s981 = scalar_select %p980, %s977, 3
          %s982 = smul.addr %s979, 4
          %s983 = sadd.s32 %s981, %s982
          %s984 = scalar_lea.vmem %s6, %s983
        $region68: #{moco_forward.12} parent=63 // pred_fallthru
          _
        // Predicated region
        $region69: #{moco_forward.12} parent=63 // pred_check
          %p985 = pneg %p230
        $region70: #{moco_forward.12} parent=63 // pred_check_branch
          %987 = sbr.rel (%p985) target = $region72
        $region71: #{moco_forward.12} parent=63 // pred_region
          %s988 = sand.u32 %s215, 1
          %s989 = scalar_lea.sflag [#allocation3], %s988
          %s990 = sand.u32 %s215, 1
          %s991 = scalar_lea.vmem [#allocation2], %s990
          %992 = dma.done %s989, 16
        $region72: #{moco_forward.12} parent=63 // pred_fallthru
          _
        // Predicated region
        $region73: #{moco_forward.12} parent=63 // pred_check
          %p993 = pneg %p256
        $region74: #{moco_forward.12} parent=63 // pred_check_branch
          %995 = sbr.rel (%p993) target = $region76
        $region75: #{moco_forward.12} parent=63 // pred_region
          %s996 = sand.u32 %s241, 1
          %s997 = scalar_lea.sflag [#allocation5], %s996
          %s998 = sand.u32 %s241, 1
          %s999 = scalar_lea.vmem [#allocation4], %s998
          %1000 = dma.done %s997, 16
        $region76: #{moco_forward.12} parent=63 // pred_fallthru
          _
      $region64: #{moco_forward.12} parent=5 // pred_fallthru
        _
    $region6: #{moco_forward.12} parent=1 // loop_footer
      %s25 = sadd.s32 1, %s21
    $region7: #{moco_forward.12} parent=1 // loop_footer_branch
      %20 = sbr.rel target = $region3
    $region8: #{moco_forward.12} parent=1 // loop_exit
      _
    %1001 = vsyncpa [#allocation3], 1
    %s1002 = scalar_lea.sflag [#allocation3], 1
    %1003 = vsyncpa %s1002, 1
    %1004 = vsyncpa [#allocation5], 1
    %s1005 = scalar_lea.sflag [#allocation5], 1
    %1006 = vsyncpa %s1005, 1

// kernel: moco_forward.13
$region0: #{moco_forward.13}
  #allocation0 [shape = 'u32[]', space=smem, size = 0x4, offset = 0x4, fixed_abs, tag = 'smem constant byte address 0x4 - core index']
  #allocation1 [shape = 'u32[144,128]{1,0:T(1,128)}', space=vmem, size = 0x12000, scoped, tag = 'internal scratch']
  %s0 = inlined_call_operand.vmem [shape: f32[4,4,128], index: 0, kind: input, shape index: {}]
  %s1 = inlined_call_operand.vmem [shape: f32[4,4,128], index: 1, kind: input, shape index: {}]
  %s2 = inlined_call_operand.vmem [shape: f32[4,1,1], index: 2, kind: output, shape index: {}]
  %s3 = sld [smem:[#allocation0]]
  $region41: #{moco_forward.13} parent=0
    _
  %s5 = ssub.s32 1, %s3
  %s6 = scalar_select 0, %s5, %s3
  loop: start=0, step=1, limit=6
  $region2: #{moco_forward.13} parent=0 // loop_pre_header
    _
  $region3: #{moco_forward.13} parent=0 // loop_header
    %s8 = sphi 0, %s12
    %p9 = scmp.ge.s32.totalorder %s8, 6
    %s18 = sphi 0, %s20
    %s21 = sphi 0, %s18
    %s22 = sphi 0, %s21
    %s38 = sphi 0, %s22
    %s44 = sphi 0, %s46
    %s47 = sphi 0, %s44
    %s48 = sphi 0, %s47
    %s64 = sphi 0, %s48
    %s70 = sphi 0, %s72
    %s73 = sphi 0, %s70
    %s74 = sphi 0, %s73
    %s90 = sphi 0, %s74
  $region4: #{moco_forward.13} parent=0 // loop_header_branch
    %11 = sbr.rel (%p9) target = $region8
  $region5: #{moco_forward.13} parent=0 // loop_body
    %s13 = ssub.s32 %s8, 1
    %s14 = ssub.s32 %s8, 2
    %s15 = sadd.s32 %s8, 1
    %s16 = ssub.s32 %s8, %s15
    %p17 = scmp.eq.s32.totalorder %s16, 0
    %s19 = sadd.s32 %s18, 1
    %s20 = scalar_select %p17, %s18, %s19
    %p23 = pneg %p17
    %p24 = scmp.eq.s32.totalorder %s8, 3
    %p25 = por %p23, %p24
    %p26 = scmp.ne.s32.totalorder %s18, %s21
    %p27 = scmp.eq.s32.totalorder %s8, 0
    %p28 = por %p26, %p27
    %p29 = scmp.ne.s32.totalorder %s18, %s21
    %p30 = scmp.eq.s32.totalorder %s13, 3
    %p31 = por %p29, %p30
    %p32 = scmp.ne.s32.totalorder %s21, %s22
    %p33 = scmp.eq.s32.totalorder %s13, 0
    %p34 = por %p32, %p33
    %p35 = scmp.ne.s32.totalorder %s21, %s22
    %p36 = scmp.eq.s32.totalorder %s14, 3
    %p37 = por %p35, %p36
    %p39 = scmp.ne.s32.totalorder %s22, %s38
    %p40 = scmp.eq.s32.totalorder %s14, 0
    %p41 = por %p39, %p40
    %s42 = ssub.s32 %s8, %s15
    %p43 = scmp.eq.s32.totalorder %s42, 0
    %s45 = sadd.s32 %s44, 1
    %s46 = scalar_select %p43, %s44, %s45
    %p49 = pneg %p43
    %p50 = scmp.eq.s32.totalorder %s8, 3
    %p51 = por %p49, %p50
    %p52 = scmp.ne.s32.totalorder %s44, %s47
    %p53 = scmp.eq.s32.totalorder %s8, 0
    %p54 = por %p52, %p53
    %p55 = scmp.ne.s32.totalorder %s44, %s47
    %p56 = scmp.eq.s32.totalorder %s13, 3
    %p57 = por %p55, %p56
    %p58 = scmp.ne.s32.totalorder %s47, %s48
    %p59 = scmp.eq.s32.totalorder %s13, 0
    %p60 = por %p58, %p59
    %p61 = scmp.ne.s32.totalorder %s47, %s48
    %p62 = scmp.eq.s32.totalorder %s14, 3
    %p63 = por %p61, %p62
    %p65 = scmp.ne.s32.totalorder %s48, %s64
    %p66 = scmp.eq.s32.totalorder %s14, 0
    %p67 = por %p65, %p66
    %s68 = ssub.s32 %s8, %s15
    %p69 = scmp.eq.s32.totalorder %s68, 0
    %s71 = sadd.s32 %s70, 1
    %s72 = scalar_select %p69, %s70, %s71
    %p75 = pneg %p69
    %p76 = scmp.eq.s32.totalorder %s8, 3
    %p77 = por %p75, %p76
    %p78 = scmp.ne.s32.totalorder %s70, %s73
    %p79 = scmp.eq.s32.totalorder %s8, 0
    %p80 = por %p78, %p79
    %p81 = scmp.ne.s32.totalorder %s70, %s73
    %p82 = scmp.eq.s32.totalorder %s13, 3
    %p83 = por %p81, %p82
    %p84 = scmp.ne.s32.totalorder %s73, %s74
    %p85 = scmp.eq.s32.totalorder %s13, 0
    %p86 = por %p84, %p85
    %p87 = scmp.ne.s32.totalorder %s73, %s74
    %p88 = scmp.eq.s32.totalorder %s14, 3
    %p89 = por %p87, %p88
    %p91 = scmp.ne.s32.totalorder %s74, %s90
    %p92 = scmp.eq.s32.totalorder %s14, 0
    %p93 = por %p91, %p92
    %p94 = scmp.le.s32.totalorder 1, %s8
    %p95 = scmp.lt.s32.totalorder %s8, 5
    %p96 = pnand %p94, %p95
    %p97 = pneg %p96
    // Predicated region
    $region9: #{moco_forward.13} parent=5 // pred_check
      _
    $region10: #{moco_forward.13} parent=5 // pred_check_branch
      %99 = sbr.rel (%p96) target = $region12
    $region11: #{moco_forward.13} parent=5 // pred_region
      %s100 = ssub.s32 %s8, 1
    $region12: #{moco_forward.13} parent=5 // pred_fallthru
      _
    %p101 = scmp.lt.s32.totalorder %s8, 4
    // Predicated region
    $region13: #{moco_forward.13} parent=5 // pred_check
      %p102 = pneg %p101
    $region14: #{moco_forward.13} parent=5 // pred_check_branch
      %104 = sbr.rel (%p102) target = $region16
    $region15: #{moco_forward.13} parent=5 // pred_region
      // Predicated region
      $region17: #{moco_forward.13} parent=15 // pred_check
        %p105 = pneg %p28
      $region18: #{moco_forward.13} parent=15 // pred_check_branch
        %107 = sbr.rel (%p105) target = $region20
      $region19: #{moco_forward.13} parent=15 // pred_region
        %p108 = scmp.lt.s32.totalorder %s8, 3
        %s109 = scalar_select %p108, %s8, 3
        %s110 = smul.addr %s109, 4
        %s111 = scalar_lea.vmem %s0, %s110
      $region20: #{moco_forward.13} parent=15 // pred_fallthru
        _
      // Predicated region
      $region21: #{moco_forward.13} parent=15 // pred_check
        %p112 = pneg %p54
      $region22: #{moco_forward.13} parent=15 // pred_check_branch
        %114 = sbr.rel (%p112) target = $region24
      $region23: #{moco_forward.13} parent=15 // pred_region
        %p115 = scmp.lt.s32.totalorder %s8, 3
        %s116 = scalar_select %p115, %s8, 3
        %s117 = smul.addr %s116, 4
        %s118 = scalar_lea.vmem %s1, %s117
      $region24: #{moco_forward.13} parent=15 // pred_fallthru
        _
    $region16: #{moco_forward.13} parent=5 // pred_fallthru
      _
    %p119 = scmp.le.s32.totalorder 1, %s8
    %p120 = scmp.lt.s32.totalorder %s8, 5
    %p121 = pnand %p119, %p120
    %p122 = pneg %p121
    // Predicated region
    $region25: #{moco_forward.13} parent=5 // pred_check
      _
    $region26: #{moco_forward.13} parent=5 // pred_check_branch
      %124 = sbr.rel (%p121) target = $region28
    $region27: #{moco_forward.13} parent=5 // pred_region
      %s125 = ssub.s32 %s8, 1
      %p126 = scmp.lt.s32.totalorder %s13, 3
      %s127 = scalar_select %p126, %s13, 3
      %s128 = smul.addr %s127, 4
      %s129 = scalar_lea.vmem %s0, %s128
      %p130 = pneg %p34
      %p131 = pneg %p31
      %p132 = scmp.lt.s32.totalorder %s13, 3
      %s133 = scalar_select %p132, %s13, 3
      %s134 = smul.addr %s133, 4
      %s135 = scalar_lea.vmem %s1, %s134
      %p136 = pneg %p60
      %p137 = pneg %p57
      %p138 = pneg %p86
      %p139 = pneg %p83
      %p140 = scmp.lt.s32.totalorder %s13, 3
      %s141 = scalar_select %p140, %s13, 3
      %s142 = scalar_lea.vmem %s2, %s141
      %p143 = scmp.lt.s32.totalorder %s13, 3
      %s144 = scalar_select %p143, %s13, 3
      %s145 = smul.addr %s144, 4
      %s146 = scalar_lea.vmem %s0, %s145
      %p147 = scmp.lt.s32.totalorder %s13, 3
      %s148 = scalar_select %p147, %s13, 3
      %s149 = smul.addr %s148, 4
      %s150 = scalar_lea.vmem %s1, %s149
      %p151 = scmp.lt.s32.totalorder %s13, 3
      %s152 = scalar_select %p151, %s13, 3
      %s153 = scalar_lea.vmem %s2, %s152
      %v154 = vld [vmem:[%s146] sm:$0xf]
      %v155 = vld [vmem:[%s150] sm:$0xf]
      %v156 = vmul.f32 %v154, %v154
      %vm157 = vcmask 1043456
      %v158 = vsel %vm157, %v156, 0.0
      %159 = vadd.xlane.f32.xlu0 %v158
      %v160 = vpop.xlane.xlu0 %159
      %v161 = vmax.f32 %v160, 1e-24
      %v162 = vrsqrt.pop %v161
      %v163 = vmul.f32 %v154, %v162
      %v164 = vmul.f32 %v155, %v155
      %v165 = vsel %vm157, %v164, 0.0
      %166 = vadd.xlane.f32.xlu0 %v165
      %v167 = vpop.xlane.xlu0 %166
      %v168 = vmax.f32 %v167, 1e-24
      %v169 = vrsqrt.pop %v168
      %v170 = vmul.f32 %v155, %v169
      %171 = vmatprep.subr.mxu0 0.0
      %172 = vmatpush1.xpose.msra.mxu0 %v170
      %173 = vmatprep.subr.mxu0 0.0
      %174 = vmatpush1.xpose.msra.mxu0 0.0
      %175 = vmatprep.subr.mxu0 0.0
      %176 = vmatpush1.xpose.msra.mxu0 0.0
      %177 = vmatprep.subr.mxu0 0.0
      %178 = vmatpush1.xpose.msra.mxu0 0.0
      %179 = vmatprep.subr.mxu0 0.0
      %180 = vmatpush1.xpose.msra.mxu0 0.0
      %181 = vmatprep.subr.mxu0 0.0
      %182 = vmatpush1.xpose.msra.mxu0 0.0
      %183 = vmatprep.subr.mxu0 0.0
      %184 = vmatpush1.xpose.msra.mxu0 0.0
      %185 = vmatprep.subr.mxu0 0.0
      %186 = vmatpush1.xpose.msra.mxu0 0.0
      %187 = vmatprep.subr.mxu0 0.0
      %188 = vmatpush1.xpose.msra.mxu0 0.0
      %189 = vmatprep.subr.mxu0 0.0
      %190 = vmatpush1.xpose.msra.mxu0 0.0
      %191 = vmatprep.subr.mxu0 0.0
      %192 = vmatpush1.xpose.msra.mxu0 0.0
      %193 = vmatprep.subr.mxu0 0.0
      %194 = vmatpush1.xpose.msra.mxu0 0.0
      %195 = vmatprep.subr.mxu0 0.0
      %196 = vmatpush1.xpose.msra.mxu0 0.0
      %197 = vmatprep.subr.mxu0 0.0
      %198 = vmatpush1.xpose.msra.mxu0 0.0
      %199 = vmatprep.subr.mxu0 0.0
      %200 = vmatpush1.xpose.msra.mxu0 0.0
      %201 = vmatprep.subr.mxu0 0.0
      %202 = vmatpush1.xpose.msra.mxu0 0.0
      %203 = vmatprep.subr.mxu0 0.0
      %204 = vmatpush1.xpose.msra.mxu0 0.0
      %205 = vmatprep.subr.mxu0 0.0
      %206 = vmatpush1.xpose.msra.mxu0 0.0
      %207 = vmatprep.subr.mxu0 0.0
      %208 = vmatpush1.xpose.msra.mxu0 0.0
      %209 = vmatprep.subr.mxu0 0.0
      %210 = vmatpush1.xpose.msra.mxu0 0.0
      %211 = vmatprep.subr.mxu0 0.0
      %212 = vmatpush1.xpose.msra.mxu0 0.0
      %213 = vmatprep.subr.mxu0 0.0
      %214 = vmatpush1.xpose.msra.mxu0 0.0
      %215 = vmatprep.subr.mxu0 0.0
      %216 = vmatpush1.xpose.msra.mxu0 0.0
      %217 = vmatprep.subr.mxu0 0.0
      %218 = vmatpush1.xpose.msra.mxu0 0.0
      %219 = vmatprep.subr.mxu0 0.0
      %220 = vmatpush1.xpose.msra.mxu0 0.0
      %221 = vmatprep.subr.mxu0 0.0
      %222 = vmatpush1.xpose.msra.mxu0 0.0
      %223 = vmatprep.subr.mxu0 0.0
      %224 = vmatpush1.xpose.msra.mxu0 0.0
      %225 = vmatprep.subr.mxu0 0.0
      %226 = vmatpush1.xpose.msra.mxu0 0.0
      %227 = vmatprep.subr.mxu0 0.0
      %228 = vmatpush1.xpose.msra.mxu0 0.0
      %229 = vmatprep.subr.mxu0 0.0
      %230 = vmatpush1.xpose.msra.mxu0 0.0
      %231 = vmatprep.subr.mxu0 0.0
      %232 = vmatpush1.xpose.msra.mxu0 0.0
      %233 = vmatprep.subr.mxu0 0.0
      %234 = vmatpush1.xpose.msra.mxu0 0.0
      %235 = vmatprep.mubr.f32.mxu0 0.0
      %236 = vmatmul.mubr.f32.gmra.mrb[0].mxu0 %v163
      %v237 = vpop.f32.mrb[0].mxu0
      %v238 = vadd.f32 0.0, %v237
      %v239 = vpop.f32.mrb[0].mxu0
      %240 = vdwg.mxu0
      %v241 = vmul.f32 %v163, %v170
      %v242 = vsel %vm157, %v241, 0.0
      %243 = vadd.xlane.f32.xlu0 %v242
      %v244 = vpop.xlane.xlu0 %243
      %vm245 = vcmask 27648
      %v246 = vsel %vm245, %v238, -inf
      %247 = vmax.xlane.f32.xlu0 %v246
      %v248 = vpop.xlane.xlu0 %247
      %v249 = vsub.f32 %v238, %v248
      %v250 = vmul.f32 %v249, 1.442695
      %v251 = vpow.pop %v250
      %v252 = vsel %vm245, %v251, 0.0
      %253 = vadd.xlane.f32.xlu0 %v252
      %v254 = vpop.xlane.xlu0 %253
      %v255 = vlog2.pop %v254
      %v256 = vmul.f32 %v255, 0.6931472
      %v257 = vadd.f32 %v256, %v248
      %v258 = vsub.f32 %v257, %v244
      %v259 = vsel %vm157, %v258, 0.0
      %v260 = vrot.slane %v259, 4
      %v261 = vadd.f32 %v259, %v260
      %v262 = vrot.slane %v261, 2
      %v263 = vadd.f32 %v261, %v262
      %v264 = vrot.slane %v263, 1
      %v265 = vadd.f32 %v263, %v264
      %v266 = vrcp.pop 4.0
      %v267 = vmul.f32 %v265, %v266
      %v268 = vmul.f32 %v267, 2.0
      %vm269 = vcmask 0
      %270 = vst.msk [vmem:[%s153] sm:$0x1] %vm269, %v268
      %p271 = scmp.lt.s32.totalorder %s13, 3
      %s272 = scalar_select %p271, %s13, 3
      %s273 = scalar_lea.vmem %s2, %s272
      // Predicated region
      $region29: #{moco_forward.13} parent=27 // pred_check
        %p274 = pneg %p83
      $region30: #{moco_forward.13} parent=27 // pred_check_branch
        %276 = sbr.rel (%p274) target = $region32
      $region31: #{moco_forward.13} parent=27 // pred_region
        _
      $region32: #{moco_forward.13} parent=27 // pred_fallthru
        _
    $region28: #{moco_forward.13} parent=5 // pred_fallthru
      _
    %p277 = scmp.le.s32.totalorder 2, %s8
    // Predicated region
    $region33: #{moco_forward.13} parent=5 // pred_check
      %p278 = pneg %p277
    $region34: #{moco_forward.13} parent=5 // pred_check_branch
      %280 = sbr.rel (%p278) target = $region36
    $region35: #{moco_forward.13} parent=5 // pred_region
      %s281 = ssub.s32 %s8, 2
      // Predicated region
      $region37: #{moco_forward.13} parent=35 // pred_check
        %p282 = pneg %p89
      $region38: #{moco_forward.13} parent=35 // pred_check_branch
        %284 = sbr.rel (%p282) target = $region40
      $region39: #{moco_forward.13} parent=35 // pred_region
        %p285 = scmp.lt.s32.totalorder %s14, 3
        %s286 = scalar_select %p285, %s14, 3
        %s287 = scalar_lea.vmem %s2, %s286
      $region40: #{moco_forward.13} parent=35 // pred_fallthru
        _
    $region36: #{moco_forward.13} parent=5 // pred_fallthru
      _
  $region6: #{moco_forward.13} parent=0 // loop_footer
    %s12 = sadd.s32 1, %s8
  $region7: #{moco_forward.13} parent=0 // loop_footer_branch
    %7 = sbr.rel target = $region3
  $region8: #{moco_forward.13} parent=0 // loop_exit
    _

</llo_original>
